<compile_context>
chip_gen: v7x
topology: tpu7x:2x2x1
jax: 0.10.0
libtpu: 0.0.40
codegen_flags: <defaults>
</compile_context>

<pallas_src>
import functools

import jax
import jax.numpy as jnp
import numpy as np
from jax.experimental import pallas as pl
from jax.experimental.pallas import tpu as pltpu


# ----------------------------------------------------------------------------
# Host-side constants
# ----------------------------------------------------------------------------

def _make_tap_masks(H, W, bt):
  """(9, bt*H*W) {0,1} float32 edge-validity masks for a zero-padded 3x3 conv."""
  HW = H * W
  h = np.arange(HW) // W
  w = np.arange(HW) % W
  m = np.zeros((9, HW), np.float32)
  for k in range(9):
    dy, dx = k // 3 - 1, k % 3 - 1
    valid = (h + dy >= 0) & (h + dy <= H - 1) & (w + dx >= 0) & (w + dx <= W - 1)
    m[k] = valid.astype(np.float32)
  return jnp.asarray(np.tile(m, (1, bt)))


# ----------------------------------------------------------------------------
# Fused kernel: body(dsc -> ReLU -> dsc) -> CA -> S2FB2(dsc(cat) -> CA_fea + res)
# Activations live as (C, bt*HW): channels on sublanes, folded spatial on lanes.
# ----------------------------------------------------------------------------

def _cab_dsc_kernel(
    x_ref,        # (bt, C, HW)  f32   bt images of this grid step
    masks_ref,    # (9, bt*HW)   f32   3x3 zero-pad edge masks (host-precomputed)
    dw_ref,       # (4C, 9)      f32   depthwise taps: dw1 | dw2 | dws_ca | dws_x
    bias_ref,     # (7C, 1)      f32   db1|pb1|db2|pb2|dbs_ca|dbs_x|pbs
    pw12_ref,     # (2C, C)      bf16  pointwise 1x1 weights: pw1 | pw2
    pws_ref,      # (C, 2C)      bf16  S2FB pointwise over [d_ca ; d_x]
    ca_ref,       # (4C, C/r)    f32   caw1.T | caw2 | cfw1.T | cfw2
    out_ref,      # (bt, C, HW)  f32
    *, C, H, W, bt):
  HW = H * W
  L = bt * HW
  f32, bf16 = jnp.float32, jnp.bfloat16

  # Fold bt images onto the lane axis (128-aligned lane concat -> cheap copies).
  x = x_ref[0] if bt == 1 else jnp.concatenate(
      [x_ref[i] for i in range(bt)], axis=1)                       # (C, L)

  # Static slices of the packed resident weights (all 8/16-row aligned).
  dw1, dw2, dws_ca, dws_x = (dw_ref[i * C:(i + 1) * C] for i in range(4))
  db1, pb1, db2, pb2, dbs_ca, dbs_x, pbs = (
      bias_ref[i * C:(i + 1) * C] for i in range(7))
  pw1, pw2 = pw12_ref[0:C], pw12_ref[C:2 * C]
  caw1T, caw2, cfw1T, cfw2 = (ca_ref[i * C:(i + 1) * C] for i in range(4))

  def tap_planes(v):
    # Masked, shifted input plane for each tap of a zero-padded 3x3 conv.
    # Shifts run on the XLU, mask multiplies on the VPU; roll wrap across
    # image/slab boundaries only touches lanes the mask zeroes out.
    for k in range(9):
      dy, dx = k // 3 - 1, k % 3 - 1
      s = dy * W + dx
      shifted = v if s == 0 else pltpu.roll(v, (-s) % L, axis=1)
      yield k, (shifted if k == 4 else shifted * masks_ref[k:k + 1, :])

  def depthwise(v, dw, db):
    acc = jnp.zeros((C, L), f32)
    for k, plane in tap_planes(v):
      acc = acc + dw[:, k:k + 1] * plane
    return acc + db

  def depthwise_dual(v, dw_a, db_a, dw_b, db_b):
    # Two depthwise convs sharing one set of masked/shifted planes of v.
    acc_a = jnp.zeros((C, L), f32)
    acc_b = jnp.zeros((C, L), f32)
    for k, plane in tap_planes(v):
      acc_a = acc_a + dw_a[:, k:k + 1] * plane
      acc_b = acc_b + dw_b[:, k:k + 1] * plane
    return acc_a + db_a, acc_b + db_b

  def pointwise(d, pw, pb):
    # 1x1 conv on the MXU: bf16 operands (weights pre-cast), f32 accumulation.
    return jnp.dot(pw, d.astype(bf16), preferred_element_type=f32) + pb

  def calayer(v, w1T, w2):
    # Squeeze-excite per image, fully f32 on VPU/XLU: no MXU pass, no bf16.
    # Per-image pooling uses free 128-aligned static lane slices of the slab.
    pieces = []
    for b in range(bt):
      vs = v[:, b * HW:(b + 1) * HW]
      pooled = jnp.sum(vs, axis=1, keepdims=True) * (1.0 / HW)     # (C, 1)
      z = jnp.sum(w1T * pooled, axis=0, keepdims=True)             # (1, C/r)
      z = jnp.maximum(z, 0.0)
      s = jnp.sum(w2 * z, axis=1, keepdims=True)                   # (C, 1)
      pieces.append(vs * jax.nn.sigmoid(s))
    return pieces[0] if bt == 1 else jnp.concatenate(pieces, axis=1)

  # body: dsc1 -> act -> dsc2.  d_x (the S2FB depthwise half acting on x) is
  # accumulated in the same 9-tap pass, reusing x's masked/shifted planes.
  d1, d_x = depthwise_dual(x, dw1, db1, dws_x, dbs_x)
  # TODO(synk): `act` is unspecified at module construction; ReLU assumed.
  r = jnp.maximum(pointwise(d1, pw1, pb1), 0.0)
  r = pointwise(depthwise(r, dw2, db2), pw2, pb2)

  # channel attention on the body output
  ca = calayer(r, caw1T, caw2)

  # S2FB_2(ca, x): dsc over the channel concat; one fused (C,2C)@(2C,L) dot.
  d_ca = depthwise(ca, dws_ca, dbs_ca)
  d_cat = jnp.concatenate([d_ca, d_x], axis=0).astype(bf16)        # (2C, L)
  fea = jnp.dot(pws_ref[...], d_cat, preferred_element_type=f32) + pbs

  res = calayer(fea, cfw1T, cfw2) + ca
  for i in range(bt):
    out_ref[i] = res[:, i * HW:(i + 1) * HW]


# ----------------------------------------------------------------------------
# Wrapper: one pallas_call for the whole module.
# ----------------------------------------------------------------------------

def cab_dsc_forward(x, params, *, images_per_step=None):
  """CAB_dsc forward. x: (B, C, H, W) float32 (PyTorch NCHW layout)."""
  B, C, H, W = x.shape
  HW = H * W
  if images_per_step is None:
    # Fold half the batch per step: amortizes per-step overhead and widens MXU
    # N, while keeping >= 2 grid steps so v7x's two TensorCores both get work.
    images_per_step = B // 2 if (B >= 2 and B % 2 == 0) else 1
  bt = images_per_step
  assert B % bt == 0, "batch must be divisible by images_per_step"
  G = B // bt
  L = bt * HW
  f32, bf16 = jnp.float32, jnp.bfloat16

  p1, p2 = params["dsc1"], params["dsc2"]
  cap, s2 = params["ca"], params["s2fb"]
  sd, sca = s2["dsc"], s2["ca"]

  # Pack the 19 tiny parameter tensors into 5 resident arrays (fewer DMA
  # windows); pre-cast the MXU pointwise weights to bf16 host-side.
  dw_pack = jnp.concatenate([p1["dw"], p2["dw"], sd["dw"][:C], sd["dw"][C:]],
                            axis=0).astype(f32)                        # (4C, 9)
  bias_pack = jnp.concatenate([p1["db"], p1["pb"], p2["db"], p2["pb"],
                               sd["db"][:C], sd["db"][C:], sd["pb"]],
                              axis=0).astype(f32)                      # (7C, 1)
  pw12_pack = jnp.concatenate([p1["pw"], p2["pw"]], axis=0).astype(bf16)  # (2C, C)
  pws_pack = sd["pw"].astype(bf16)                                     # (C, 2C)
  ca_pack = jnp.concatenate([cap["w1"].T, cap["w2"], sca["w1"].T, sca["w2"]],
                            axis=0).astype(f32)                        # (4C, C/r)
  masks = _make_tap_masks(H, W, bt)                                    # (9, L)

  weights = (masks, dw_pack, bias_pack, pw12_pack, pws_pack, ca_pack)

  def full_spec(arr):
    nd = arr.ndim
    return pl.BlockSpec(arr.shape, lambda g, nd=nd: (0,) * nd)

  # Advisory cost estimate so XLA overlaps this small call with its neighbours.
  flops = int(B * C * HW * (4 * 9 * 2 + 3 * 9 + 8) + B * 2 * HW * 4 * C * C)
  w_bytes = sum(int(a.size) * a.dtype.itemsize for a in weights)
  cost = pl.CostEstimate(flops=flops, transcendentals=int(2 * C * B),
                         bytes_accessed=int(2 * B * C * HW * 4 + G * w_bytes))

  out = pl.pallas_call(
      functools.partial(_cab_dsc_kernel, C=C, H=H, W=W, bt=bt),
      out_shape=jax.ShapeDtypeStruct((B, C, HW), f32),
      grid=(G,),
      in_specs=[pl.BlockSpec((bt, C, HW), lambda g: (g, 0, 0))]
               + [full_spec(w) for w in weights],
      out_specs=pl.BlockSpec((bt, C, HW), lambda g: (g, 0, 0)),
      compiler_params=pltpu.CompilerParams(
          dimension_semantics=("parallel",)),
      cost_estimate=cost,
  )(x.reshape(B, C, HW), *weights)
  return out.reshape(B, C, H, W)


# ----------------------------------------------------------------------------
# Pure-JAX NCHW reference (mirrors the PyTorch module) for validation.
# ----------------------------------------------------------------------------

def _ref_dsc(x, p):
  B, C, H, W = x.shape
  xp = jnp.pad(x, ((0, 0), (0, 0), (1, 1), (1, 1)))
  d = jnp.zeros_like(x)
  for ky in range(3):
    for kx in range(3):
      tap = p["dw"][:, ky * 3 + kx].reshape(1, C, 1, 1)
      d = d + tap * xp[:, :, ky:ky + H, kx:kx + W]
  d = d + p["db"].reshape(1, C, 1, 1)
  y = jnp.einsum("oc,bchw->bohw", p["pw"].astype(jnp.bfloat16),
                 d.astype(jnp.bfloat16), preferred_element_type=jnp.float32)
  return y + p["pb"].reshape(1, -1, 1, 1)


def _ref_ca(x, p):
  pooled = jnp.mean(x, axis=(2, 3))                                   # (B, C)
  z = jnp.einsum("rc,bc->br", p["w1"], pooled,
                 precision=jax.lax.Precision.HIGHEST)
  z = jnp.maximum(z, 0.0)
  z = jnp.einsum("cr,br->bc", p["w2"], z,
                 precision=jax.lax.Precision.HIGHEST)
  return x * jax.nn.sigmoid(z)[:, :, None, None]


def cab_dsc_reference(x, params):
  r = _ref_dsc(x, params["dsc1"])
  r = jnp.maximum(r, 0.0)                          # act == ReLU (assumption)
  r = _ref_dsc(r, params["dsc2"])
  ca = _ref_ca(r, params["ca"])
  fea = _ref_dsc(jnp.concatenate([ca, x], axis=1), params["s2fb"]["dsc"])
  return _ref_ca(fea, params["s2fb"]["ca"]) + ca


# ----------------------------------------------------------------------------
# Deterministic parameter init (shapes follow the PyTorch module __init__).
# ----------------------------------------------------------------------------

def _normal(key, shape, std=0.1):
  return (std * jax.random.normal(key, shape)).astype(jnp.float32)


def init_dsc(key, cin, cout):
  k1, k2, k3, k4 = jax.random.split(key, 4)
  return dict(dw=_normal(k1, (cin, 9)),      # depthwise 3x3 taps (groups=cin)
              db=_normal(k2, (cin, 1)),      # depthwise bias
              pw=_normal(k3, (cout, cin)),   # pointwise 1x1
              pb=_normal(k4, (cout, 1)))     # pointwise bias


def init_ca(key, c, r):
  k1, k2 = jax.random.split(key)
  return dict(w1=_normal(k1, (c // r, c)),   # 1x1 C -> C/r, bias=False
              w2=_normal(k2, (c, c // r)))   # 1x1 C/r -> C, bias=False


def init_params(key, c, r):
  ks = jax.random.split(key, 5)
  return dict(
      dsc1=init_dsc(ks[0], c, c),
      dsc2=init_dsc(ks[1], c, c),
      ca=init_ca(ks[2], c, r),
      s2fb=dict(dsc=init_dsc(ks[3], 2 * c, c),
                ca=init_ca(ks[4], c, r)),
  )


# ----------------------------------------------------------------------------

if __name__ == "__main__":
  B, H, W = 4, 16, 16
  n_feat, reduction = 16, 4   # CAB_dsc(n_feat, kernel_size=3, reduction, bias=False, act=ReLU)

  key = jax.random.PRNGKey(0)
  kx, kp = jax.random.split(key)
  x = jax.random.normal(kx, (B, n_feat, H, W), jnp.float32)   # NCHW, as in PyTorch
  params = init_params(kp, n_feat, reduction)

  out = jax.jit(cab_dsc_forward)(x, params)
  jax.block_until_ready(out)
  assert out.shape == (B, n_feat, H, W) and out.dtype == jnp.float32

  ref = cab_dsc_reference(x, params)
  np.testing.assert_allclose(np.asarray(out), np.asarray(ref), rtol=5e-3, atol=5e-3)

  print("KERNEL_OK")
</pallas_src>

<mosaic_0001>
module attributes {stable_mosaic.version = 11 : i64} {
  func.func @_cab_dsc_kernel(%arg0: i32, %arg1: memref<2x16x256xf32, #tpu.memory_space<vmem>>, %arg2: memref<9x512xf32, #tpu.memory_space<vmem>>, %arg3: memref<64x9xf32, #tpu.memory_space<vmem>>, %arg4: memref<112x1xf32, #tpu.memory_space<vmem>>, %arg5: memref<32x16xbf16, #tpu.memory_space<vmem>>, %arg6: memref<16x32xbf16, #tpu.memory_space<vmem>>, %arg7: memref<64x4xf32, #tpu.memory_space<vmem>>, %arg8: memref<2x16x256xf32, #tpu.memory_space<vmem>>) attributes {dimension_semantics = [#tpu.dimension_semantics<parallel>], iteration_bounds = array<i64: 2>, scalar_prefetch = 0 : i64, scratch_operands = 0 : i64, tpu.core_type = #tpu.core_type<tc>, window_params = [{transform_indices = @transform_0, window_bounds = array<i64: 2, 16, 256>}, {pipeline_mode = #tpu.pipeline_mode<synchronous>, transform_indices = @transform_1, window_bounds = array<i64: 9, 512>}, {pipeline_mode = #tpu.pipeline_mode<synchronous>, transform_indices = @transform_2, window_bounds = array<i64: 64, 9>}, {pipeline_mode = #tpu.pipeline_mode<synchronous>, transform_indices = @transform_3, window_bounds = array<i64: 112, 1>}, {pipeline_mode = #tpu.pipeline_mode<synchronous>, transform_indices = @transform_4, window_bounds = array<i64: 32, 16>}, {pipeline_mode = #tpu.pipeline_mode<synchronous>, transform_indices = @transform_5, window_bounds = array<i64: 16, 32>}, {pipeline_mode = #tpu.pipeline_mode<synchronous>, transform_indices = @transform_6, window_bounds = array<i64: 64, 4>}, {transform_indices = @transform_7, window_bounds = array<i64: 2, 16, 256>}]} {
    %c0 = arith.constant 0 : index
    %c0_0 = arith.constant 0 : index
    %c0_1 = arith.constant 0 : index
    %0 = vector.load %arg1[%c0, %c0_0, %c0_1] : memref<2x16x256xf32, #tpu.memory_space<vmem>>, vector<1x16x256xf32>
    %1 = vector.shape_cast %0 : vector<1x16x256xf32> to vector<16x256xf32>
    %c1 = arith.constant 1 : index
    %c0_2 = arith.constant 0 : index
    %c0_3 = arith.constant 0 : index
    %2 = vector.load %arg1[%c1, %c0_2, %c0_3] : memref<2x16x256xf32, #tpu.memory_space<vmem>>, vector<1x16x256xf32>
    %3 = vector.shape_cast %2 : vector<1x16x256xf32> to vector<16x256xf32>
    %4 = tpu.concatenate %1, %3 in 1 : vector<16x256xf32>, vector<16x256xf32> -> vector<16x512xf32>
    %c0_4 = arith.constant 0 : index
    %c0_5 = arith.constant 0 : index
    %5 = vector.load %arg3[%c0_4, %c0_5] : memref<64x9xf32, #tpu.memory_space<vmem>>, vector<16x9xf32>
    %c16 = arith.constant 16 : index
    %c0_6 = arith.constant 0 : index
    %6 = vector.load %arg3[%c16, %c0_6] : memref<64x9xf32, #tpu.memory_space<vmem>>, vector<16x9xf32>
    %c32 = arith.constant 32 : index
    %c0_7 = arith.constant 0 : index
    %7 = vector.load %arg3[%c32, %c0_7] : memref<64x9xf32, #tpu.memory_space<vmem>>, vector<16x9xf32>
    %c48 = arith.constant 48 : index
    %c0_8 = arith.constant 0 : index
    %8 = vector.load %arg3[%c48, %c0_8] : memref<64x9xf32, #tpu.memory_space<vmem>>, vector<16x9xf32>
    %c0_9 = arith.constant 0 : index
    %c0_10 = arith.constant 0 : index
    %9 = vector.load %arg4[%c0_9, %c0_10] : memref<112x1xf32, #tpu.memory_space<vmem>>, vector<16x1xf32>
    %c16_11 = arith.constant 16 : index
    %c0_12 = arith.constant 0 : index
    %10 = vector.load %arg4[%c16_11, %c0_12] : memref<112x1xf32, #tpu.memory_space<vmem>>, vector<16x1xf32>
    %c32_13 = arith.constant 32 : index
    %c0_14 = arith.constant 0 : index
    %11 = vector.load %arg4[%c32_13, %c0_14] : memref<112x1xf32, #tpu.memory_space<vmem>>, vector<16x1xf32>
    %c48_15 = arith.constant 48 : index
    %c0_16 = arith.constant 0 : index
    %12 = vector.load %arg4[%c48_15, %c0_16] : memref<112x1xf32, #tpu.memory_space<vmem>>, vector<16x1xf32>
    %c64 = arith.constant 64 : index
    %c0_17 = arith.constant 0 : index
    %13 = vector.load %arg4[%c64, %c0_17] : memref<112x1xf32, #tpu.memory_space<vmem>>, vector<16x1xf32>
    %c80 = arith.constant 80 : index
    %c0_18 = arith.constant 0 : index
    %14 = vector.load %arg4[%c80, %c0_18] : memref<112x1xf32, #tpu.memory_space<vmem>>, vector<16x1xf32>
    %c96 = arith.constant 96 : index
    %c0_19 = arith.constant 0 : index
    %15 = vector.load %arg4[%c96, %c0_19] : memref<112x1xf32, #tpu.memory_space<vmem>>, vector<16x1xf32>
    %c0_20 = arith.constant 0 : index
    %c0_21 = arith.constant 0 : index
    %16 = vector.load %arg5[%c0_20, %c0_21] : memref<32x16xbf16, #tpu.memory_space<vmem>>, vector<16x16xbf16>
    %c16_22 = arith.constant 16 : index
    %c0_23 = arith.constant 0 : index
    %17 = vector.load %arg5[%c16_22, %c0_23] : memref<32x16xbf16, #tpu.memory_space<vmem>>, vector<16x16xbf16>
    %c0_24 = arith.constant 0 : index
    %c0_25 = arith.constant 0 : index
    %18 = vector.load %arg7[%c0_24, %c0_25] : memref<64x4xf32, #tpu.memory_space<vmem>>, vector<16x4xf32>
    %c16_26 = arith.constant 16 : index
    %c0_27 = arith.constant 0 : index
    %19 = vector.load %arg7[%c16_26, %c0_27] : memref<64x4xf32, #tpu.memory_space<vmem>>, vector<16x4xf32>
    %c32_28 = arith.constant 32 : index
    %c0_29 = arith.constant 0 : index
    %20 = vector.load %arg7[%c32_28, %c0_29] : memref<64x4xf32, #tpu.memory_space<vmem>>, vector<16x4xf32>
    %c48_30 = arith.constant 48 : index
    %c0_31 = arith.constant 0 : index
    %21 = vector.load %arg7[%c48_30, %c0_31] : memref<64x4xf32, #tpu.memory_space<vmem>>, vector<16x4xf32>
    %cst = arith.constant 0.000000e+00 : f32
    %22 = vector.broadcast %cst : f32 to vector<16x512xf32>
    %cst_32 = arith.constant 0.000000e+00 : f32
    %23 = vector.broadcast %cst_32 : f32 to vector<16x512xf32>
    %c17_i32 = arith.constant 17 : i32
    %24 = tpu.dynamic_rotate %4 by %c17_i32 dim 1 : vector<16x512xf32>, i32 -> vector<16x512xf32>
    %c0_33 = arith.constant 0 : index
    %c0_34 = arith.constant 0 : index
    %25 = vector.load %arg2[%c0_33, %c0_34] : memref<9x512xf32, #tpu.memory_space<vmem>>, vector<1x512xf32>
    %26 = vector.broadcast %25 : vector<1x512xf32> to vector<16x512xf32>
    %27 = arith.mulf %24, %26 : vector<16x512xf32>
    %28 = vector.extract_strided_slice %5 {offsets = [0, 0], sizes = [16, 1], strides = [1, 1]} : vector<16x9xf32> to vector<16x1xf32>
    %29 = vector.broadcast %28 : vector<16x1xf32> to vector<16x512xf32>
    %30 = arith.mulf %29, %27 : vector<16x512xf32>
    %31 = arith.addf %22, %30 : vector<16x512xf32>
    %32 = vector.extract_strided_slice %8 {offsets = [0, 0], sizes = [16, 1], strides = [1, 1]} : vector<16x9xf32> to vector<16x1xf32>
    %33 = vector.broadcast %32 : vector<16x1xf32> to vector<16x512xf32>
    %34 = arith.mulf %33, %27 : vector<16x512xf32>
    %35 = arith.addf %23, %34 : vector<16x512xf32>
    %c16_i32 = arith.constant 16 : i32
    %36 = tpu.dynamic_rotate %4 by %c16_i32 dim 1 : vector<16x512xf32>, i32 -> vector<16x512xf32>
    %c1_35 = arith.constant 1 : index
    %c0_36 = arith.constant 0 : index
    %37 = vector.load %arg2[%c1_35, %c0_36] : memref<9x512xf32, #tpu.memory_space<vmem>>, vector<1x512xf32>
    %38 = vector.broadcast %37 : vector<1x512xf32> to vector<16x512xf32>
    %39 = arith.mulf %36, %38 : vector<16x512xf32>
    %40 = vector.extract_strided_slice %5 {offsets = [0, 1], sizes = [16, 1], strides = [1, 1]} : vector<16x9xf32> to vector<16x1xf32>
    %41 = vector.broadcast %40 : vector<16x1xf32> to vector<16x512xf32>
    %42 = arith.mulf %41, %39 : vector<16x512xf32>
    %43 = arith.addf %31, %42 : vector<16x512xf32>
    %44 = vector.extract_strided_slice %8 {offsets = [0, 1], sizes = [16, 1], strides = [1, 1]} : vector<16x9xf32> to vector<16x1xf32>
    %45 = vector.broadcast %44 : vector<16x1xf32> to vector<16x512xf32>
    %46 = arith.mulf %45, %39 : vector<16x512xf32>
    %47 = arith.addf %35, %46 : vector<16x512xf32>
    %c15_i32 = arith.constant 15 : i32
    %48 = tpu.dynamic_rotate %4 by %c15_i32 dim 1 : vector<16x512xf32>, i32 -> vector<16x512xf32>
    %c2 = arith.constant 2 : index
    %c0_37 = arith.constant 0 : index
    %49 = vector.load %arg2[%c2, %c0_37] : memref<9x512xf32, #tpu.memory_space<vmem>>, vector<1x512xf32>
    %50 = vector.broadcast %49 : vector<1x512xf32> to vector<16x512xf32>
    %51 = arith.mulf %48, %50 : vector<16x512xf32>
    %52 = vector.extract_strided_slice %5 {offsets = [0, 2], sizes = [16, 1], strides = [1, 1]} : vector<16x9xf32> to vector<16x1xf32>
    %53 = vector.broadcast %52 : vector<16x1xf32> to vector<16x512xf32>
    %54 = arith.mulf %53, %51 : vector<16x512xf32>
    %55 = arith.addf %43, %54 : vector<16x512xf32>
    %56 = vector.extract_strided_slice %8 {offsets = [0, 2], sizes = [16, 1], strides = [1, 1]} : vector<16x9xf32> to vector<16x1xf32>
    %57 = vector.broadcast %56 : vector<16x1xf32> to vector<16x512xf32>
    %58 = arith.mulf %57, %51 : vector<16x512xf32>
    %59 = arith.addf %47, %58 : vector<16x512xf32>
    %c1_i32 = arith.constant 1 : i32
    %60 = tpu.dynamic_rotate %4 by %c1_i32 dim 1 : vector<16x512xf32>, i32 -> vector<16x512xf32>
    %c3 = arith.constant 3 : index
    %c0_38 = arith.constant 0 : index
    %61 = vector.load %arg2[%c3, %c0_38] : memref<9x512xf32, #tpu.memory_space<vmem>>, vector<1x512xf32>
    %62 = vector.broadcast %61 : vector<1x512xf32> to vector<16x512xf32>
    %63 = arith.mulf %60, %62 : vector<16x512xf32>
    %64 = vector.extract_strided_slice %5 {offsets = [0, 3], sizes = [16, 1], strides = [1, 1]} : vector<16x9xf32> to vector<16x1xf32>
    %65 = vector.broadcast %64 : vector<16x1xf32> to vector<16x512xf32>
    %66 = arith.mulf %65, %63 : vector<16x512xf32>
    %67 = arith.addf %55, %66 : vector<16x512xf32>
    %68 = vector.extract_strided_slice %8 {offsets = [0, 3], sizes = [16, 1], strides = [1, 1]} : vector<16x9xf32> to vector<16x1xf32>
    %69 = vector.broadcast %68 : vector<16x1xf32> to vector<16x512xf32>
    %70 = arith.mulf %69, %63 : vector<16x512xf32>
    %71 = arith.addf %59, %70 : vector<16x512xf32>
    %72 = vector.extract_strided_slice %5 {offsets = [0, 4], sizes = [16, 1], strides = [1, 1]} : vector<16x9xf32> to vector<16x1xf32>
    %73 = vector.broadcast %72 : vector<16x1xf32> to vector<16x512xf32>
    %74 = arith.mulf %73, %4 : vector<16x512xf32>
    %75 = arith.addf %67, %74 : vector<16x512xf32>
    %76 = vector.extract_strided_slice %8 {offsets = [0, 4], sizes = [16, 1], strides = [1, 1]} : vector<16x9xf32> to vector<16x1xf32>
    %77 = vector.broadcast %76 : vector<16x1xf32> to vector<16x512xf32>
    %78 = arith.mulf %77, %4 : vector<16x512xf32>
    %79 = arith.addf %71, %78 : vector<16x512xf32>
    %c511_i32 = arith.constant 511 : i32
    %80 = tpu.dynamic_rotate %4 by %c511_i32 dim 1 : vector<16x512xf32>, i32 -> vector<16x512xf32>
    %c5 = arith.constant 5 : index
    %c0_39 = arith.constant 0 : index
    %81 = vector.load %arg2[%c5, %c0_39] : memref<9x512xf32, #tpu.memory_space<vmem>>, vector<1x512xf32>
    %82 = vector.broadcast %81 : vector<1x512xf32> to vector<16x512xf32>
    %83 = arith.mulf %80, %82 : vector<16x512xf32>
    %84 = vector.extract_strided_slice %5 {offsets = [0, 5], sizes = [16, 1], strides = [1, 1]} : vector<16x9xf32> to vector<16x1xf32>
    %85 = vector.broadcast %84 : vector<16x1xf32> to vector<16x512xf32>
    %86 = arith.mulf %85, %83 : vector<16x512xf32>
    %87 = arith.addf %75, %86 : vector<16x512xf32>
    %88 = vector.extract_strided_slice %8 {offsets = [0, 5], sizes = [16, 1], strides = [1, 1]} : vector<16x9xf32> to vector<16x1xf32>
    %89 = vector.broadcast %88 : vector<16x1xf32> to vector<16x512xf32>
    %90 = arith.mulf %89, %83 : vector<16x512xf32>
    %91 = arith.addf %79, %90 : vector<16x512xf32>
    %c497_i32 = arith.constant 497 : i32
    %92 = tpu.dynamic_rotate %4 by %c497_i32 dim 1 : vector<16x512xf32>, i32 -> vector<16x512xf32>
    %c6 = arith.constant 6 : index
    %c0_40 = arith.constant 0 : index
    %93 = vector.load %arg2[%c6, %c0_40] : memref<9x512xf32, #tpu.memory_space<vmem>>, vector<1x512xf32>
    %94 = vector.broadcast %93 : vector<1x512xf32> to vector<16x512xf32>
    %95 = arith.mulf %92, %94 : vector<16x512xf32>
    %96 = vector.extract_strided_slice %5 {offsets = [0, 6], sizes = [16, 1], strides = [1, 1]} : vector<16x9xf32> to vector<16x1xf32>
    %97 = vector.broadcast %96 : vector<16x1xf32> to vector<16x512xf32>
    %98 = arith.mulf %97, %95 : vector<16x512xf32>
    %99 = arith.addf %87, %98 : vector<16x512xf32>
    %100 = vector.extract_strided_slice %8 {offsets = [0, 6], sizes = [16, 1], strides = [1, 1]} : vector<16x9xf32> to vector<16x1xf32>
    %101 = vector.broadcast %100 : vector<16x1xf32> to vector<16x512xf32>
    %102 = arith.mulf %101, %95 : vector<16x512xf32>
    %103 = arith.addf %91, %102 : vector<16x512xf32>
    %c496_i32 = arith.constant 496 : i32
    %104 = tpu.dynamic_rotate %4 by %c496_i32 dim 1 : vector<16x512xf32>, i32 -> vector<16x512xf32>
    %c7 = arith.constant 7 : index
    %c0_41 = arith.constant 0 : index
    %105 = vector.load %arg2[%c7, %c0_41] : memref<9x512xf32, #tpu.memory_space<vmem>>, vector<1x512xf32>
    %106 = vector.broadcast %105 : vector<1x512xf32> to vector<16x512xf32>
    %107 = arith.mulf %104, %106 : vector<16x512xf32>
    %108 = vector.extract_strided_slice %5 {offsets = [0, 7], sizes = [16, 1], strides = [1, 1]} : vector<16x9xf32> to vector<16x1xf32>
    %109 = vector.broadcast %108 : vector<16x1xf32> to vector<16x512xf32>
    %110 = arith.mulf %109, %107 : vector<16x512xf32>
    %111 = arith.addf %99, %110 : vector<16x512xf32>
    %112 = vector.extract_strided_slice %8 {offsets = [0, 7], sizes = [16, 1], strides = [1, 1]} : vector<16x9xf32> to vector<16x1xf32>
    %113 = vector.broadcast %112 : vector<16x1xf32> to vector<16x512xf32>
    %114 = arith.mulf %113, %107 : vector<16x512xf32>
    %115 = arith.addf %103, %114 : vector<16x512xf32>
    %c495_i32 = arith.constant 495 : i32
    %116 = tpu.dynamic_rotate %4 by %c495_i32 dim 1 : vector<16x512xf32>, i32 -> vector<16x512xf32>
    %c8 = arith.constant 8 : index
    %c0_42 = arith.constant 0 : index
    %117 = vector.load %arg2[%c8, %c0_42] : memref<9x512xf32, #tpu.memory_space<vmem>>, vector<1x512xf32>
    %118 = vector.broadcast %117 : vector<1x512xf32> to vector<16x512xf32>
    %119 = arith.mulf %116, %118 : vector<16x512xf32>
    %120 = vector.extract_strided_slice %5 {offsets = [0, 8], sizes = [16, 1], strides = [1, 1]} : vector<16x9xf32> to vector<16x1xf32>
    %121 = vector.broadcast %120 : vector<16x1xf32> to vector<16x512xf32>
    %122 = arith.mulf %121, %119 : vector<16x512xf32>
    %123 = arith.addf %111, %122 : vector<16x512xf32>
    %124 = vector.extract_strided_slice %8 {offsets = [0, 8], sizes = [16, 1], strides = [1, 1]} : vector<16x9xf32> to vector<16x1xf32>
    %125 = vector.broadcast %124 : vector<16x1xf32> to vector<16x512xf32>
    %126 = arith.mulf %125, %119 : vector<16x512xf32>
    %127 = arith.addf %115, %126 : vector<16x512xf32>
    %128 = vector.broadcast %9 : vector<16x1xf32> to vector<16x512xf32>
    %129 = arith.addf %123, %128 : vector<16x512xf32>
    %130 = vector.broadcast %14 : vector<16x1xf32> to vector<16x512xf32>
    %131 = arith.addf %127, %130 : vector<16x512xf32>
    %132 = arith.truncf %129 : vector<16x512xf32> to vector<16x512xbf16>
    %cst_43 = arith.constant dense<0.000000e+00> : vector<16x512xf32>
    %133 = tpu.matmul %16, %132, %cst_43 {dimension_numbers = #tpu.dot_dimension_numbers<[1], [0], [0], [1], [0, 0, 1, 1], [], []>} : vector<16x16xbf16>, vector<16x512xbf16>, vector<16x512xf32> -> vector<16x512xf32>
    %134 = vector.broadcast %10 : vector<16x1xf32> to vector<16x512xf32>
    %135 = arith.addf %133, %134 : vector<16x512xf32>
    %cst_44 = arith.constant 0.000000e+00 : f32
    %136 = vector.broadcast %cst_44 : f32 to vector<16x512xf32>
    %137 = arith.maximumf %135, %136 : vector<16x512xf32>
    %cst_45 = arith.constant 0.000000e+00 : f32
    %138 = vector.broadcast %cst_45 : f32 to vector<16x512xf32>
    %c17_i32_46 = arith.constant 17 : i32
    %139 = tpu.dynamic_rotate %137 by %c17_i32_46 dim 1 : vector<16x512xf32>, i32 -> vector<16x512xf32>
    %c0_47 = arith.constant 0 : index
    %c0_48 = arith.constant 0 : index
    %140 = vector.load %arg2[%c0_47, %c0_48] : memref<9x512xf32, #tpu.memory_space<vmem>>, vector<1x512xf32>
    %141 = vector.broadcast %140 : vector<1x512xf32> to vector<16x512xf32>
    %142 = arith.mulf %139, %141 : vector<16x512xf32>
    %143 = vector.extract_strided_slice %6 {offsets = [0, 0], sizes = [16, 1], strides = [1, 1]} : vector<16x9xf32> to vector<16x1xf32>
    %144 = vector.broadcast %143 : vector<16x1xf32> to vector<16x512xf32>
    %145 = arith.mulf %144, %142 : vector<16x512xf32>
    %146 = arith.addf %138, %145 : vector<16x512xf32>
    %c16_i32_49 = arith.constant 16 : i32
    %147 = tpu.dynamic_rotate %137 by %c16_i32_49 dim 1 : vector<16x512xf32>, i32 -> vector<16x512xf32>
    %c1_50 = arith.constant 1 : index
    %c0_51 = arith.constant 0 : index
    %148 = vector.load %arg2[%c1_50, %c0_51] : memref<9x512xf32, #tpu.memory_space<vmem>>, vector<1x512xf32>
    %149 = vector.broadcast %148 : vector<1x512xf32> to vector<16x512xf32>
    %150 = arith.mulf %147, %149 : vector<16x512xf32>
    %151 = vector.extract_strided_slice %6 {offsets = [0, 1], sizes = [16, 1], strides = [1, 1]} : vector<16x9xf32> to vector<16x1xf32>
    %152 = vector.broadcast %151 : vector<16x1xf32> to vector<16x512xf32>
    %153 = arith.mulf %152, %150 : vector<16x512xf32>
    %154 = arith.addf %146, %153 : vector<16x512xf32>
    %c15_i32_52 = arith.constant 15 : i32
    %155 = tpu.dynamic_rotate %137 by %c15_i32_52 dim 1 : vector<16x512xf32>, i32 -> vector<16x512xf32>
    %c2_53 = arith.constant 2 : index
    %c0_54 = arith.constant 0 : index
    %156 = vector.load %arg2[%c2_53, %c0_54] : memref<9x512xf32, #tpu.memory_space<vmem>>, vector<1x512xf32>
    %157 = vector.broadcast %156 : vector<1x512xf32> to vector<16x512xf32>
    %158 = arith.mulf %155, %157 : vector<16x512xf32>
    %159 = vector.extract_strided_slice %6 {offsets = [0, 2], sizes = [16, 1], strides = [1, 1]} : vector<16x9xf32> to vector<16x1xf32>
    %160 = vector.broadcast %159 : vector<16x1xf32> to vector<16x512xf32>
    %161 = arith.mulf %160, %158 : vector<16x512xf32>
    %162 = arith.addf %154, %161 : vector<16x512xf32>
    %c1_i32_55 = arith.constant 1 : i32
    %163 = tpu.dynamic_rotate %137 by %c1_i32_55 dim 1 : vector<16x512xf32>, i32 -> vector<16x512xf32>
    %c3_56 = arith.constant 3 : index
    %c0_57 = arith.constant 0 : index
    %164 = vector.load %arg2[%c3_56, %c0_57] : memref<9x512xf32, #tpu.memory_space<vmem>>, vector<1x512xf32>
    %165 = vector.broadcast %164 : vector<1x512xf32> to vector<16x512xf32>
    %166 = arith.mulf %163, %165 : vector<16x512xf32>
    %167 = vector.extract_strided_slice %6 {offsets = [0, 3], sizes = [16, 1], strides = [1, 1]} : vector<16x9xf32> to vector<16x1xf32>
    %168 = vector.broadcast %167 : vector<16x1xf32> to vector<16x512xf32>
    %169 = arith.mulf %168, %166 : vector<16x512xf32>
    %170 = arith.addf %162, %169 : vector<16x512xf32>
    %171 = vector.extract_strided_slice %6 {offsets = [0, 4], sizes = [16, 1], strides = [1, 1]} : vector<16x9xf32> to vector<16x1xf32>
    %172 = vector.broadcast %171 : vector<16x1xf32> to vector<16x512xf32>
    %173 = arith.mulf %172, %137 : vector<16x512xf32>
    %174 = arith.addf %170, %173 : vector<16x512xf32>
    %c511_i32_58 = arith.constant 511 : i32
    %175 = tpu.dynamic_rotate %137 by %c511_i32_58 dim 1 : vector<16x512xf32>, i32 -> vector<16x512xf32>
    %c5_59 = arith.constant 5 : index
    %c0_60 = arith.constant 0 : index
    %176 = vector.load %arg2[%c5_59, %c0_60] : memref<9x512xf32, #tpu.memory_space<vmem>>, vector<1x512xf32>
    %177 = vector.broadcast %176 : vector<1x512xf32> to vector<16x512xf32>
    %178 = arith.mulf %175, %177 : vector<16x512xf32>
    %179 = vector.extract_strided_slice %6 {offsets = [0, 5], sizes = [16, 1], strides = [1, 1]} : vector<16x9xf32> to vector<16x1xf32>
    %180 = vector.broadcast %179 : vector<16x1xf32> to vector<16x512xf32>
    %181 = arith.mulf %180, %178 : vector<16x512xf32>
    %182 = arith.addf %174, %181 : vector<16x512xf32>
    %c497_i32_61 = arith.constant 497 : i32
    %183 = tpu.dynamic_rotate %137 by %c497_i32_61 dim 1 : vector<16x512xf32>, i32 -> vector<16x512xf32>
    %c6_62 = arith.constant 6 : index
    %c0_63 = arith.constant 0 : index
    %184 = vector.load %arg2[%c6_62, %c0_63] : memref<9x512xf32, #tpu.memory_space<vmem>>, vector<1x512xf32>
    %185 = vector.broadcast %184 : vector<1x512xf32> to vector<16x512xf32>
    %186 = arith.mulf %183, %185 : vector<16x512xf32>
    %187 = vector.extract_strided_slice %6 {offsets = [0, 6], sizes = [16, 1], strides = [1, 1]} : vector<16x9xf32> to vector<16x1xf32>
    %188 = vector.broadcast %187 : vector<16x1xf32> to vector<16x512xf32>
    %189 = arith.mulf %188, %186 : vector<16x512xf32>
    %190 = arith.addf %182, %189 : vector<16x512xf32>
    %c496_i32_64 = arith.constant 496 : i32
    %191 = tpu.dynamic_rotate %137 by %c496_i32_64 dim 1 : vector<16x512xf32>, i32 -> vector<16x512xf32>
    %c7_65 = arith.constant 7 : index
    %c0_66 = arith.constant 0 : index
    %192 = vector.load %arg2[%c7_65, %c0_66] : memref<9x512xf32, #tpu.memory_space<vmem>>, vector<1x512xf32>
    %193 = vector.broadcast %192 : vector<1x512xf32> to vector<16x512xf32>
    %194 = arith.mulf %191, %193 : vector<16x512xf32>
    %195 = vector.extract_strided_slice %6 {offsets = [0, 7], sizes = [16, 1], strides = [1, 1]} : vector<16x9xf32> to vector<16x1xf32>
    %196 = vector.broadcast %195 : vector<16x1xf32> to vector<16x512xf32>
    %197 = arith.mulf %196, %194 : vector<16x512xf32>
    %198 = arith.addf %190, %197 : vector<16x512xf32>
    %c495_i32_67 = arith.constant 495 : i32
    %199 = tpu.dynamic_rotate %137 by %c495_i32_67 dim 1 : vector<16x512xf32>, i32 -> vector<16x512xf32>
    %c8_68 = arith.constant 8 : index
    %c0_69 = arith.constant 0 : index
    %200 = vector.load %arg2[%c8_68, %c0_69] : memref<9x512xf32, #tpu.memory_space<vmem>>, vector<1x512xf32>
    %201 = vector.broadcast %200 : vector<1x512xf32> to vector<16x512xf32>
    %202 = arith.mulf %199, %201 : vector<16x512xf32>
    %203 = vector.extract_strided_slice %6 {offsets = [0, 8], sizes = [16, 1], strides = [1, 1]} : vector<16x9xf32> to vector<16x1xf32>
    %204 = vector.broadcast %203 : vector<16x1xf32> to vector<16x512xf32>
    %205 = arith.mulf %204, %202 : vector<16x512xf32>
    %206 = arith.addf %198, %205 : vector<16x512xf32>
    %207 = vector.broadcast %11 : vector<16x1xf32> to vector<16x512xf32>
    %208 = arith.addf %206, %207 : vector<16x512xf32>
    %209 = arith.truncf %208 : vector<16x512xf32> to vector<16x512xbf16>
    %cst_70 = arith.constant dense<0.000000e+00> : vector<16x512xf32>
    %210 = tpu.matmul %17, %209, %cst_70 {dimension_numbers = #tpu.dot_dimension_numbers<[1], [0], [0], [1], [0, 0, 1, 1], [], []>} : vector<16x16xbf16>, vector<16x512xbf16>, vector<16x512xf32> -> vector<16x512xf32>
    %211 = vector.broadcast %12 : vector<16x1xf32> to vector<16x512xf32>
    %212 = arith.addf %210, %211 : vector<16x512xf32>
    %213 = vector.extract_strided_slice %212 {offsets = [0, 0], sizes = [16, 256], strides = [1, 1]} : vector<16x512xf32> to vector<16x256xf32>
    %cst_71 = arith.constant dense<0.000000e+00> : vector<16xf32>
    %214 = vector.multi_reduction <add>, %213, %cst_71 [1] : vector<16x256xf32> to vector<16xf32>
    %215 = vector.shape_cast %214 : vector<16xf32> to vector<16x1xf32>
    %cst_72 = arith.constant 3.906250e-03 : f32
    %216 = vector.broadcast %cst_72 : f32 to vector<16x1xf32>
    %217 = arith.mulf %215, %216 : vector<16x1xf32>
    %218 = vector.broadcast %217 : vector<16x1xf32> to vector<16x4xf32>
    %219 = arith.mulf %18, %218 : vector<16x4xf32>
    %cst_73 = arith.constant dense<0.000000e+00> : vector<4xf32>
    %220 = vector.multi_reduction <add>, %219, %cst_73 [0] : vector<16x4xf32> to vector<4xf32>
    %221 = vector.shape_cast %220 : vector<4xf32> to vector<1x4xf32>
    %cst_74 = arith.constant 0.000000e+00 : f32
    %222 = vector.broadcast %cst_74 : f32 to vector<1x4xf32>
    %223 = arith.maximumf %221, %222 : vector<1x4xf32>
    %224 = vector.broadcast %223 : vector<1x4xf32> to vector<16x4xf32>
    %225 = arith.mulf %19, %224 : vector<16x4xf32>
    %cst_75 = arith.constant dense<0.000000e+00> : vector<16xf32>
    %226 = vector.multi_reduction <add>, %225, %cst_75 [1] : vector<16x4xf32> to vector<16xf32>
    %227 = vector.shape_cast %226 : vector<16xf32> to vector<16x1xf32>
    %228 = arith.negf %227 : vector<16x1xf32>
    %229 = math.exp %228 : vector<16x1xf32>
    %cst_76 = arith.constant 1.000000e+00 : f32
    %230 = vector.broadcast %cst_76 : f32 to vector<16x1xf32>
    %231 = arith.addf %230, %229 : vector<16x1xf32>
    %232 = arith.divf %230, %231 : vector<16x1xf32>
    %233 = vector.broadcast %232 : vector<16x1xf32> to vector<16x256xf32>
    %234 = arith.mulf %213, %233 : vector<16x256xf32>
    %235 = vector.extract_strided_slice %212 {offsets = [0, 256], sizes = [16, 256], strides = [1, 1]} : vector<16x512xf32> to vector<16x256xf32>
    %cst_77 = arith.constant dense<0.000000e+00> : vector<16xf32>
    %236 = vector.multi_reduction <add>, %235, %cst_77 [1] : vector<16x256xf32> to vector<16xf32>
    %237 = vector.shape_cast %236 : vector<16xf32> to vector<16x1xf32>
    %cst_78 = arith.constant 3.906250e-03 : f32
    %238 = vector.broadcast %cst_78 : f32 to vector<16x1xf32>
    %239 = arith.mulf %237, %238 : vector<16x1xf32>
    %240 = vector.broadcast %239 : vector<16x1xf32> to vector<16x4xf32>
    %241 = arith.mulf %18, %240 : vector<16x4xf32>
    %cst_79 = arith.constant dense<0.000000e+00> : vector<4xf32>
    %242 = vector.multi_reduction <add>, %241, %cst_79 [0] : vector<16x4xf32> to vector<4xf32>
    %243 = vector.shape_cast %242 : vector<4xf32> to vector<1x4xf32>
    %cst_80 = arith.constant 0.000000e+00 : f32
    %244 = vector.broadcast %cst_80 : f32 to vector<1x4xf32>
    %245 = arith.maximumf %243, %244 : vector<1x4xf32>
    %246 = vector.broadcast %245 : vector<1x4xf32> to vector<16x4xf32>
    %247 = arith.mulf %19, %246 : vector<16x4xf32>
    %cst_81 = arith.constant dense<0.000000e+00> : vector<16xf32>
    %248 = vector.multi_reduction <add>, %247, %cst_81 [1] : vector<16x4xf32> to vector<16xf32>
    %249 = vector.shape_cast %248 : vector<16xf32> to vector<16x1xf32>
    %250 = arith.negf %249 : vector<16x1xf32>
    %251 = math.exp %250 : vector<16x1xf32>
    %cst_82 = arith.constant 1.000000e+00 : f32
    %252 = vector.broadcast %cst_82 : f32 to vector<16x1xf32>
    %253 = arith.addf %252, %251 : vector<16x1xf32>
    %254 = arith.divf %252, %253 : vector<16x1xf32>
    %255 = vector.broadcast %254 : vector<16x1xf32> to vector<16x256xf32>
    %256 = arith.mulf %235, %255 : vector<16x256xf32>
    %257 = tpu.concatenate %234, %256 in 1 : vector<16x256xf32>, vector<16x256xf32> -> vector<16x512xf32>
    %cst_83 = arith.constant 0.000000e+00 : f32
    %258 = vector.broadcast %cst_83 : f32 to vector<16x512xf32>
    %c17_i32_84 = arith.constant 17 : i32
    %259 = tpu.dynamic_rotate %257 by %c17_i32_84 dim 1 : vector<16x512xf32>, i32 -> vector<16x512xf32>
    %c0_85 = arith.constant 0 : index
    %c0_86 = arith.constant 0 : index
    %260 = vector.load %arg2[%c0_85, %c0_86] : memref<9x512xf32, #tpu.memory_space<vmem>>, vector<1x512xf32>
    %261 = vector.broadcast %260 : vector<1x512xf32> to vector<16x512xf32>
    %262 = arith.mulf %259, %261 : vector<16x512xf32>
    %263 = vector.extract_strided_slice %7 {offsets = [0, 0], sizes = [16, 1], strides = [1, 1]} : vector<16x9xf32> to vector<16x1xf32>
    %264 = vector.broadcast %263 : vector<16x1xf32> to vector<16x512xf32>
    %265 = arith.mulf %264, %262 : vector<16x512xf32>
    %266 = arith.addf %258, %265 : vector<16x512xf32>
    %c16_i32_87 = arith.constant 16 : i32
    %267 = tpu.dynamic_rotate %257 by %c16_i32_87 dim 1 : vector<16x512xf32>, i32 -> vector<16x512xf32>
    %c1_88 = arith.constant 1 : index
    %c0_89 = arith.constant 0 : index
    %268 = vector.load %arg2[%c1_88, %c0_89] : memref<9x512xf32, #tpu.memory_space<vmem>>, vector<1x512xf32>
    %269 = vector.broadcast %268 : vector<1x512xf32> to vector<16x512xf32>
    %270 = arith.mulf %267, %269 : vector<16x512xf32>
    %271 = vector.extract_strided_slice %7 {offsets = [0, 1], sizes = [16, 1], strides = [1, 1]} : vector<16x9xf32> to vector<16x1xf32>
    %272 = vector.broadcast %271 : vector<16x1xf32> to vector<16x512xf32>
    %273 = arith.mulf %272, %270 : vector<16x512xf32>
    %274 = arith.addf %266, %273 : vector<16x512xf32>
    %c15_i32_90 = arith.constant 15 : i32
    %275 = tpu.dynamic_rotate %257 by %c15_i32_90 dim 1 : vector<16x512xf32>, i32 -> vector<16x512xf32>
    %c2_91 = arith.constant 2 : index
    %c0_92 = arith.constant 0 : index
    %276 = vector.load %arg2[%c2_91, %c0_92] : memref<9x512xf32, #tpu.memory_space<vmem>>, vector<1x512xf32>
    %277 = vector.broadcast %276 : vector<1x512xf32> to vector<16x512xf32>
    %278 = arith.mulf %275, %277 : vector<16x512xf32>
    %279 = vector.extract_strided_slice %7 {offsets = [0, 2], sizes = [16, 1], strides = [1, 1]} : vector<16x9xf32> to vector<16x1xf32>
    %280 = vector.broadcast %279 : vector<16x1xf32> to vector<16x512xf32>
    %281 = arith.mulf %280, %278 : vector<16x512xf32>
    %282 = arith.addf %274, %281 : vector<16x512xf32>
    %c1_i32_93 = arith.constant 1 : i32
    %283 = tpu.dynamic_rotate %257 by %c1_i32_93 dim 1 : vector<16x512xf32>, i32 -> vector<16x512xf32>
    %c3_94 = arith.constant 3 : index
    %c0_95 = arith.constant 0 : index
    %284 = vector.load %arg2[%c3_94, %c0_95] : memref<9x512xf32, #tpu.memory_space<vmem>>, vector<1x512xf32>
    %285 = vector.broadcast %284 : vector<1x512xf32> to vector<16x512xf32>
    %286 = arith.mulf %283, %285 : vector<16x512xf32>
    %287 = vector.extract_strided_slice %7 {offsets = [0, 3], sizes = [16, 1], strides = [1, 1]} : vector<16x9xf32> to vector<16x1xf32>
    %288 = vector.broadcast %287 : vector<16x1xf32> to vector<16x512xf32>
    %289 = arith.mulf %288, %286 : vector<16x512xf32>
    %290 = arith.addf %282, %289 : vector<16x512xf32>
    %291 = vector.extract_strided_slice %7 {offsets = [0, 4], sizes = [16, 1], strides = [1, 1]} : vector<16x9xf32> to vector<16x1xf32>
    %292 = vector.broadcast %291 : vector<16x1xf32> to vector<16x512xf32>
    %293 = arith.mulf %292, %257 : vector<16x512xf32>
    %294 = arith.addf %290, %293 : vector<16x512xf32>
    %c511_i32_96 = arith.constant 511 : i32
    %295 = tpu.dynamic_rotate %257 by %c511_i32_96 dim 1 : vector<16x512xf32>, i32 -> vector<16x512xf32>
    %c5_97 = arith.constant 5 : index
    %c0_98 = arith.constant 0 : index
    %296 = vector.load %arg2[%c5_97, %c0_98] : memref<9x512xf32, #tpu.memory_space<vmem>>, vector<1x512xf32>
    %297 = vector.broadcast %296 : vector<1x512xf32> to vector<16x512xf32>
    %298 = arith.mulf %295, %297 : vector<16x512xf32>
    %299 = vector.extract_strided_slice %7 {offsets = [0, 5], sizes = [16, 1], strides = [1, 1]} : vector<16x9xf32> to vector<16x1xf32>
    %300 = vector.broadcast %299 : vector<16x1xf32> to vector<16x512xf32>
    %301 = arith.mulf %300, %298 : vector<16x512xf32>
    %302 = arith.addf %294, %301 : vector<16x512xf32>
    %c497_i32_99 = arith.constant 497 : i32
    %303 = tpu.dynamic_rotate %257 by %c497_i32_99 dim 1 : vector<16x512xf32>, i32 -> vector<16x512xf32>
    %c6_100 = arith.constant 6 : index
    %c0_101 = arith.constant 0 : index
    %304 = vector.load %arg2[%c6_100, %c0_101] : memref<9x512xf32, #tpu.memory_space<vmem>>, vector<1x512xf32>
    %305 = vector.broadcast %304 : vector<1x512xf32> to vector<16x512xf32>
    %306 = arith.mulf %303, %305 : vector<16x512xf32>
    %307 = vector.extract_strided_slice %7 {offsets = [0, 6], sizes = [16, 1], strides = [1, 1]} : vector<16x9xf32> to vector<16x1xf32>
    %308 = vector.broadcast %307 : vector<16x1xf32> to vector<16x512xf32>
    %309 = arith.mulf %308, %306 : vector<16x512xf32>
    %310 = arith.addf %302, %309 : vector<16x512xf32>
    %c496_i32_102 = arith.constant 496 : i32
    %311 = tpu.dynamic_rotate %257 by %c496_i32_102 dim 1 : vector<16x512xf32>, i32 -> vector<16x512xf32>
    %c7_103 = arith.constant 7 : index
    %c0_104 = arith.constant 0 : index
    %312 = vector.load %arg2[%c7_103, %c0_104] : memref<9x512xf32, #tpu.memory_space<vmem>>, vector<1x512xf32>
    %313 = vector.broadcast %312 : vector<1x512xf32> to vector<16x512xf32>
    %314 = arith.mulf %311, %313 : vector<16x512xf32>
    %315 = vector.extract_strided_slice %7 {offsets = [0, 7], sizes = [16, 1], strides = [1, 1]} : vector<16x9xf32> to vector<16x1xf32>
    %316 = vector.broadcast %315 : vector<16x1xf32> to vector<16x512xf32>
    %317 = arith.mulf %316, %314 : vector<16x512xf32>
    %318 = arith.addf %310, %317 : vector<16x512xf32>
    %c495_i32_105 = arith.constant 495 : i32
    %319 = tpu.dynamic_rotate %257 by %c495_i32_105 dim 1 : vector<16x512xf32>, i32 -> vector<16x512xf32>
    %c8_106 = arith.constant 8 : index
    %c0_107 = arith.constant 0 : index
    %320 = vector.load %arg2[%c8_106, %c0_107] : memref<9x512xf32, #tpu.memory_space<vmem>>, vector<1x512xf32>
    %321 = vector.broadcast %320 : vector<1x512xf32> to vector<16x512xf32>
    %322 = arith.mulf %319, %321 : vector<16x512xf32>
    %323 = vector.extract_strided_slice %7 {offsets = [0, 8], sizes = [16, 1], strides = [1, 1]} : vector<16x9xf32> to vector<16x1xf32>
    %324 = vector.broadcast %323 : vector<16x1xf32> to vector<16x512xf32>
    %325 = arith.mulf %324, %322 : vector<16x512xf32>
    %326 = arith.addf %318, %325 : vector<16x512xf32>
    %327 = vector.broadcast %13 : vector<16x1xf32> to vector<16x512xf32>
    %328 = arith.addf %326, %327 : vector<16x512xf32>
    %329 = tpu.concatenate %328, %131 in 0 : vector<16x512xf32>, vector<16x512xf32> -> vector<32x512xf32>
    %330 = arith.truncf %329 : vector<32x512xf32> to vector<32x512xbf16>
    %c0_108 = arith.constant 0 : index
    %c0_109 = arith.constant 0 : index
    %331 = vector.load %arg6[%c0_108, %c0_109] : memref<16x32xbf16, #tpu.memory_space<vmem>>, vector<16x32xbf16>
    %cst_110 = arith.constant dense<0.000000e+00> : vector<16x512xf32>
    %332 = tpu.matmul %331, %330, %cst_110 {dimension_numbers = #tpu.dot_dimension_numbers<[1], [0], [0], [1], [0, 0, 1, 1], [], []>} : vector<16x32xbf16>, vector<32x512xbf16>, vector<16x512xf32> -> vector<16x512xf32>
    %333 = vector.broadcast %15 : vector<16x1xf32> to vector<16x512xf32>
    %334 = arith.addf %332, %333 : vector<16x512xf32>
    %335 = vector.extract_strided_slice %334 {offsets = [0, 0], sizes = [16, 256], strides = [1, 1]} : vector<16x512xf32> to vector<16x256xf32>
    %cst_111 = arith.constant dense<0.000000e+00> : vector<16xf32>
    %336 = vector.multi_reduction <add>, %335, %cst_111 [1] : vector<16x256xf32> to vector<16xf32>
    %337 = vector.shape_cast %336 : vector<16xf32> to vector<16x1xf32>
    %cst_112 = arith.constant 3.906250e-03 : f32
    %338 = vector.broadcast %cst_112 : f32 to vector<16x1xf32>
    %339 = arith.mulf %337, %338 : vector<16x1xf32>
    %340 = vector.broadcast %339 : vector<16x1xf32> to vector<16x4xf32>
    %341 = arith.mulf %20, %340 : vector<16x4xf32>
    %cst_113 = arith.constant dense<0.000000e+00> : vector<4xf32>
    %342 = vector.multi_reduction <add>, %341, %cst_113 [0] : vector<16x4xf32> to vector<4xf32>
    %343 = vector.shape_cast %342 : vector<4xf32> to vector<1x4xf32>
    %cst_114 = arith.constant 0.000000e+00 : f32
    %344 = vector.broadcast %cst_114 : f32 to vector<1x4xf32>
    %345 = arith.maximumf %343, %344 : vector<1x4xf32>
    %346 = vector.broadcast %345 : vector<1x4xf32> to vector<16x4xf32>
    %347 = arith.mulf %21, %346 : vector<16x4xf32>
    %cst_115 = arith.constant dense<0.000000e+00> : vector<16xf32>
    %348 = vector.multi_reduction <add>, %347, %cst_115 [1] : vector<16x4xf32> to vector<16xf32>
    %349 = vector.shape_cast %348 : vector<16xf32> to vector<16x1xf32>
    %350 = arith.negf %349 : vector<16x1xf32>
    %351 = math.exp %350 : vector<16x1xf32>
    %cst_116 = arith.constant 1.000000e+00 : f32
    %352 = vector.broadcast %cst_116 : f32 to vector<16x1xf32>
    %353 = arith.addf %352, %351 : vector<16x1xf32>
    %354 = arith.divf %352, %353 : vector<16x1xf32>
    %355 = vector.broadcast %354 : vector<16x1xf32> to vector<16x256xf32>
    %356 = arith.mulf %335, %355 : vector<16x256xf32>
    %357 = vector.extract_strided_slice %334 {offsets = [0, 256], sizes = [16, 256], strides = [1, 1]} : vector<16x512xf32> to vector<16x256xf32>
    %cst_117 = arith.constant dense<0.000000e+00> : vector<16xf32>
    %358 = vector.multi_reduction <add>, %357, %cst_117 [1] : vector<16x256xf32> to vector<16xf32>
    %359 = vector.shape_cast %358 : vector<16xf32> to vector<16x1xf32>
    %cst_118 = arith.constant 3.906250e-03 : f32
    %360 = vector.broadcast %cst_118 : f32 to vector<16x1xf32>
    %361 = arith.mulf %359, %360 : vector<16x1xf32>
    %362 = vector.broadcast %361 : vector<16x1xf32> to vector<16x4xf32>
    %363 = arith.mulf %20, %362 : vector<16x4xf32>
    %cst_119 = arith.constant dense<0.000000e+00> : vector<4xf32>
    %364 = vector.multi_reduction <add>, %363, %cst_119 [0] : vector<16x4xf32> to vector<4xf32>
    %365 = vector.shape_cast %364 : vector<4xf32> to vector<1x4xf32>
    %cst_120 = arith.constant 0.000000e+00 : f32
    %366 = vector.broadcast %cst_120 : f32 to vector<1x4xf32>
    %367 = arith.maximumf %365, %366 : vector<1x4xf32>
    %368 = vector.broadcast %367 : vector<1x4xf32> to vector<16x4xf32>
    %369 = arith.mulf %21, %368 : vector<16x4xf32>
    %cst_121 = arith.constant dense<0.000000e+00> : vector<16xf32>
    %370 = vector.multi_reduction <add>, %369, %cst_121 [1] : vector<16x4xf32> to vector<16xf32>
    %371 = vector.shape_cast %370 : vector<16xf32> to vector<16x1xf32>
    %372 = arith.negf %371 : vector<16x1xf32>
    %373 = math.exp %372 : vector<16x1xf32>
    %cst_122 = arith.constant 1.000000e+00 : f32
    %374 = vector.broadcast %cst_122 : f32 to vector<16x1xf32>
    %375 = arith.addf %374, %373 : vector<16x1xf32>
    %376 = arith.divf %374, %375 : vector<16x1xf32>
    %377 = vector.broadcast %376 : vector<16x1xf32> to vector<16x256xf32>
    %378 = arith.mulf %357, %377 : vector<16x256xf32>
    %379 = tpu.concatenate %356, %378 in 1 : vector<16x256xf32>, vector<16x256xf32> -> vector<16x512xf32>
    %380 = arith.addf %379, %257 : vector<16x512xf32>
    %381 = vector.extract_strided_slice %380 {offsets = [0, 0], sizes = [16, 256], strides = [1, 1]} : vector<16x512xf32> to vector<16x256xf32>
    %c0_123 = arith.constant 0 : index
    %c0_124 = arith.constant 0 : index
    %c0_125 = arith.constant 0 : index
    %382 = vector.load %arg8[%c0_123, %c0_124, %c0_125] : memref<2x16x256xf32, #tpu.memory_space<vmem>>, vector<1x16x256xf32>
    %383 = vector.shape_cast %382 : vector<1x16x256xf32> to vector<16x256xf32>
    %384 = vector.shape_cast %381 : vector<16x256xf32> to vector<1x16x256xf32>
    tpu.vector_store %arg8[%c0_123, %c0_124, %c0_125], %384 {strides = array<i32>} : memref<2x16x256xf32, #tpu.memory_space<vmem>>, vector<1x16x256xf32>,
    %385 = vector.extract_strided_slice %380 {offsets = [0, 256], sizes = [16, 256], strides = [1, 1]} : vector<16x512xf32> to vector<16x256xf32>
    %c1_126 = arith.constant 1 : index
    %c0_127 = arith.constant 0 : index
    %c0_128 = arith.constant 0 : index
    %386 = vector.load %arg8[%c1_126, %c0_127, %c0_128] : memref<2x16x256xf32, #tpu.memory_space<vmem>>, vector<1x16x256xf32>
    %387 = vector.shape_cast %386 : vector<1x16x256xf32> to vector<16x256xf32>
    %388 = vector.shape_cast %385 : vector<16x256xf32> to vector<1x16x256xf32>
    tpu.vector_store %arg8[%c1_126, %c0_127, %c0_128], %388 {strides = array<i32>} : memref<2x16x256xf32, #tpu.memory_space<vmem>>, vector<1x16x256xf32>,
    return
  }
  func.func @transform_0(%arg0: i32) -> (i32, i32, i32) {
    %c0_i32 = arith.constant 0 : i32
    %c0_i32_0 = arith.constant 0 : i32
    %c0_i32_1 = arith.constant 0 : i32
    return %arg0, %c0_i32, %c0_i32_0 : i32, i32, i32
  }
  func.func @transform_1(%arg0: i32) -> (i32, i32) {
    %c0_i32 = arith.constant 0 : i32
    %c0_i32_0 = arith.constant 0 : i32
    %c0_i32_1 = arith.constant 0 : i32
    return %c0_i32, %c0_i32_0 : i32, i32
  }
  func.func @transform_2(%arg0: i32) -> (i32, i32) {
    %c0_i32 = arith.constant 0 : i32
    %c0_i32_0 = arith.constant 0 : i32
    %c0_i32_1 = arith.constant 0 : i32
    return %c0_i32, %c0_i32_0 : i32, i32
  }
  func.func @transform_3(%arg0: i32) -> (i32, i32) {
    %c0_i32 = arith.constant 0 : i32
    %c0_i32_0 = arith.constant 0 : i32
    %c0_i32_1 = arith.constant 0 : i32
    return %c0_i32, %c0_i32_0 : i32, i32
  }
  func.func @transform_4(%arg0: i32) -> (i32, i32) {
    %c0_i32 = arith.constant 0 : i32
    %c0_i32_0 = arith.constant 0 : i32
    %c0_i32_1 = arith.constant 0 : i32
    return %c0_i32, %c0_i32_0 : i32, i32
  }
  func.func @transform_5(%arg0: i32) -> (i32, i32) {
    %c0_i32 = arith.constant 0 : i32
    %c0_i32_0 = arith.constant 0 : i32
    %c0_i32_1 = arith.constant 0 : i32
    return %c0_i32, %c0_i32_0 : i32, i32
  }
  func.func @transform_6(%arg0: i32) -> (i32, i32) {
    %c0_i32 = arith.constant 0 : i32
    %c0_i32_0 = arith.constant 0 : i32
    %c0_i32_1 = arith.constant 0 : i32
    return %c0_i32, %c0_i32_0 : i32, i32
  }
  func.func @transform_7(%arg0: i32) -> (i32, i32, i32) {
    %c0_i32 = arith.constant 0 : i32
    %c0_i32_0 = arith.constant 0 : i32
    %c0_i32_1 = arith.constant 0 : i32
    return %arg0, %c0_i32, %c0_i32_0 : i32, i32, i32
  }
}

</mosaic_0001>

<llo_original>
// kernel: cab_dsc_forward.1
$region0: #{cab_dsc_forward.1}
  #allocation0 [shape = 'u32[]', space=smem, size = 0x4, offset = 0x4, fixed_abs, tag = 'smem constant byte address 0x4 - core index']
  #allocation1 [shape = 'u32[144,128]{1,0:T(1,128)}', space=vmem, size = 0x12000, scoped, tag = 'internal scratch']
  %s0 = inlined_call_operand.vmem [shape: f32[4,16,256], index: 0, kind: input, shape index: {}]
  %s1 = inlined_call_operand.vmem [shape: f32[9,512], index: 1, kind: input, shape index: {}]
  %s2 = inlined_call_operand.vmem [shape: f32[64,9], index: 2, kind: input, shape index: {}]
  %s3 = inlined_call_operand.vmem [shape: f32[112,1], index: 3, kind: input, shape index: {}]
  %s4 = inlined_call_operand.vmem [shape: bf16[32,16], index: 4, kind: input, shape index: {}]
  %s5 = inlined_call_operand.vmem [shape: bf16[16,32], index: 5, kind: input, shape index: {}]
  %s6 = inlined_call_operand.vmem [shape: f32[64,4], index: 6, kind: input, shape index: {}]
  %s7 = inlined_call_operand.vmem [shape: f32[4,16,256], index: 7, kind: output, shape index: {}]
  %s8 = sld [smem:[#allocation0]]
  $region61: #{cab_dsc_forward.1} parent=0
    _
  %s10 = ssub.s32 1, %s8
  %s11 = scalar_select 0, %s10, %s8
  loop: start=0, step=1, limit=4
  $region2: #{cab_dsc_forward.1} parent=0 // loop_pre_header
    _
  $region3: #{cab_dsc_forward.1} parent=0 // loop_header
    %s13 = sphi 0, %s17
    %p14 = scmp.ge.s32.totalorder %s13, 4
    %s23 = sphi 0, %s25
    %s26 = sphi 0, %s23
    %s27 = sphi 0, %s26
    %s43 = sphi 0, %s27
    %s47 = sphi 0, %s47
    %s49 = sphi 0, %s47
    %s50 = sphi 0, %s49
    %s64 = sphi 0, %s50
    %s68 = sphi 0, %s68
    %s70 = sphi 0, %s68
    %s71 = sphi 0, %s70
    %s85 = sphi 0, %s71
    %s89 = sphi 0, %s89
    %s91 = sphi 0, %s89
    %s92 = sphi 0, %s91
    %s106 = sphi 0, %s92
    %s110 = sphi 0, %s110
    %s112 = sphi 0, %s110
    %s113 = sphi 0, %s112
    %s127 = sphi 0, %s113
    %s131 = sphi 0, %s131
    %s133 = sphi 0, %s131
    %s134 = sphi 0, %s133
    %s148 = sphi 0, %s134
    %s152 = sphi 0, %s152
    %s154 = sphi 0, %s152
    %s155 = sphi 0, %s154
    %s169 = sphi 0, %s155
    %s175 = sphi 0, %s177
    %s178 = sphi 0, %s175
    %s179 = sphi 0, %s178
    %s195 = sphi 0, %s179
  $region4: #{cab_dsc_forward.1} parent=0 // loop_header_branch
    %16 = sbr.rel (%p14) target = $region8
  $region5: #{cab_dsc_forward.1} parent=0 // loop_body
    %s18 = ssub.s32 %s13, 1
    %s19 = ssub.s32 %s13, 2
    %s20 = sadd.s32 %s13, 1
    %s21 = ssub.s32 %s13, %s20
    %p22 = scmp.eq.s32.totalorder %s21, 0
    %s24 = sadd.s32 %s23, 1
    %s25 = scalar_select %p22, %s23, %s24
    %p28 = pneg %p22
    %p29 = scmp.eq.s32.totalorder %s13, 1
    %p30 = por %p28, %p29
    %p31 = scmp.ne.s32.totalorder %s23, %s26
    %p32 = scmp.eq.s32.totalorder %s13, 0
    %p33 = por %p31, %p32
    %p34 = scmp.ne.s32.totalorder %s23, %s26
    %p35 = scmp.eq.s32.totalorder %s18, 1
    %p36 = por %p34, %p35
    %p37 = scmp.ne.s32.totalorder %s26, %s27
    %p38 = scmp.eq.s32.totalorder %s18, 0
    %p39 = por %p37, %p38
    %p40 = scmp.ne.s32.totalorder %s26, %s27
    %p41 = scmp.eq.s32.totalorder %s19, 1
    %p42 = por %p40, %p41
    %p44 = scmp.ne.s32.totalorder %s27, %s43
    %p45 = scmp.eq.s32.totalorder %s19, 0
    %p46 = por %p44, %p45
    %s48 = sadd.s32 %s47, 1
    %p51 = scmp.eq.s32.totalorder %s13, 1
    %p52 = scmp.ne.s32.totalorder %s47, %s49
    %p53 = scmp.eq.s32.totalorder %s13, 0
    %p54 = por %p52, %p53
    %p55 = scmp.ne.s32.totalorder %s47, %s49
    %p56 = scmp.eq.s32.totalorder %s18, 1
    %p57 = por %p55, %p56
    %p58 = scmp.ne.s32.totalorder %s49, %s50
    %p59 = scmp.eq.s32.totalorder %s18, 0
    %p60 = por %p58, %p59
    %p61 = scmp.ne.s32.totalorder %s49, %s50
    %p62 = scmp.eq.s32.totalorder %s19, 1
    %p63 = por %p61, %p62
    %p65 = scmp.ne.s32.totalorder %s50, %s64
    %p66 = scmp.eq.s32.totalorder %s19, 0
    %p67 = por %p65, %p66
    %s69 = sadd.s32 %s68, 1
    %p72 = scmp.eq.s32.totalorder %s13, 1
    %p73 = scmp.ne.s32.totalorder %s68, %s70
    %p74 = scmp.eq.s32.totalorder %s13, 0
    %p75 = por %p73, %p74
    %p76 = scmp.ne.s32.totalorder %s68, %s70
    %p77 = scmp.eq.s32.totalorder %s18, 1
    %p78 = por %p76, %p77
    %p79 = scmp.ne.s32.totalorder %s70, %s71
    %p80 = scmp.eq.s32.totalorder %s18, 0
    %p81 = por %p79, %p80
    %p82 = scmp.ne.s32.totalorder %s70, %s71
    %p83 = scmp.eq.s32.totalorder %s19, 1
    %p84 = por %p82, %p83
    %p86 = scmp.ne.s32.totalorder %s71, %s85
    %p87 = scmp.eq.s32.totalorder %s19, 0
    %p88 = por %p86, %p87
    %s90 = sadd.s32 %s89, 1
    %p93 = scmp.eq.s32.totalorder %s13, 1
    %p94 = scmp.ne.s32.totalorder %s89, %s91
    %p95 = scmp.eq.s32.totalorder %s13, 0
    %p96 = por %p94, %p95
    %p97 = scmp.ne.s32.totalorder %s89, %s91
    %p98 = scmp.eq.s32.totalorder %s18, 1
    %p99 = por %p97, %p98
    %p100 = scmp.ne.s32.totalorder %s91, %s92
    %p101 = scmp.eq.s32.totalorder %s18, 0
    %p102 = por %p100, %p101
    %p103 = scmp.ne.s32.totalorder %s91, %s92
    %p104 = scmp.eq.s32.totalorder %s19, 1
    %p105 = por %p103, %p104
    %p107 = scmp.ne.s32.totalorder %s92, %s106
    %p108 = scmp.eq.s32.totalorder %s19, 0
    %p109 = por %p107, %p108
    %s111 = sadd.s32 %s110, 1
    %p114 = scmp.eq.s32.totalorder %s13, 1
    %p115 = scmp.ne.s32.totalorder %s110, %s112
    %p116 = scmp.eq.s32.totalorder %s13, 0
    %p117 = por %p115, %p116
    %p118 = scmp.ne.s32.totalorder %s110, %s112
    %p119 = scmp.eq.s32.totalorder %s18, 1
    %p120 = por %p118, %p119
    %p121 = scmp.ne.s32.totalorder %s112, %s113
    %p122 = scmp.eq.s32.totalorder %s18, 0
    %p123 = por %p121, %p122
    %p124 = scmp.ne.s32.totalorder %s112, %s113
    %p125 = scmp.eq.s32.totalorder %s19, 1
    %p126 = por %p124, %p125
    %p128 = scmp.ne.s32.totalorder %s113, %s127
    %p129 = scmp.eq.s32.totalorder %s19, 0
    %p130 = por %p128, %p129
    %s132 = sadd.s32 %s131, 1
    %p135 = scmp.eq.s32.totalorder %s13, 1
    %p136 = scmp.ne.s32.totalorder %s131, %s133
    %p137 = scmp.eq.s32.totalorder %s13, 0
    %p138 = por %p136, %p137
    %p139 = scmp.ne.s32.totalorder %s131, %s133
    %p140 = scmp.eq.s32.totalorder %s18, 1
    %p141 = por %p139, %p140
    %p142 = scmp.ne.s32.totalorder %s133, %s134
    %p143 = scmp.eq.s32.totalorder %s18, 0
    %p144 = por %p142, %p143
    %p145 = scmp.ne.s32.totalorder %s133, %s134
    %p146 = scmp.eq.s32.totalorder %s19, 1
    %p147 = por %p145, %p146
    %p149 = scmp.ne.s32.totalorder %s134, %s148
    %p150 = scmp.eq.s32.totalorder %s19, 0
    %p151 = por %p149, %p150
    %s153 = sadd.s32 %s152, 1
    %p156 = scmp.eq.s32.totalorder %s13, 1
    %p157 = scmp.ne.s32.totalorder %s152, %s154
    %p158 = scmp.eq.s32.totalorder %s13, 0
    %p159 = por %p157, %p158
    %p160 = scmp.ne.s32.totalorder %s152, %s154
    %p161 = scmp.eq.s32.totalorder %s18, 1
    %p162 = por %p160, %p161
    %p163 = scmp.ne.s32.totalorder %s154, %s155
    %p164 = scmp.eq.s32.totalorder %s18, 0
    %p165 = por %p163, %p164
    %p166 = scmp.ne.s32.totalorder %s154, %s155
    %p167 = scmp.eq.s32.totalorder %s19, 1
    %p168 = por %p166, %p167
    %p170 = scmp.ne.s32.totalorder %s155, %s169
    %p171 = scmp.eq.s32.totalorder %s19, 0
    %p172 = por %p170, %p171
    %s173 = ssub.s32 %s13, %s20
    %p174 = scmp.eq.s32.totalorder %s173, 0
    %s176 = sadd.s32 %s175, 1
    %s177 = scalar_select %p174, %s175, %s176
    %p180 = pneg %p174
    %p181 = scmp.eq.s32.totalorder %s13, 1
    %p182 = por %p180, %p181
    %p183 = scmp.ne.s32.totalorder %s175, %s178
    %p184 = scmp.eq.s32.totalorder %s13, 0
    %p185 = por %p183, %p184
    %p186 = scmp.ne.s32.totalorder %s175, %s178
    %p187 = scmp.eq.s32.totalorder %s18, 1
    %p188 = por %p186, %p187
    %p189 = scmp.ne.s32.totalorder %s178, %s179
    %p190 = scmp.eq.s32.totalorder %s18, 0
    %p191 = por %p189, %p190
    %p192 = scmp.ne.s32.totalorder %s178, %s179
    %p193 = scmp.eq.s32.totalorder %s19, 1
    %p194 = por %p192, %p193
    %p196 = scmp.ne.s32.totalorder %s179, %s195
    %p197 = scmp.eq.s32.totalorder %s19, 0
    %p198 = por %p196, %p197
    %p199 = scmp.le.s32.totalorder 1, %s13
    %p200 = scmp.lt.s32.totalorder %s13, 3
    %p201 = pnand %p199, %p200
    %p202 = pneg %p201
    // Predicated region
    $region9: #{cab_dsc_forward.1} parent=5 // pred_check
      _
    $region10: #{cab_dsc_forward.1} parent=5 // pred_check_branch
      %204 = sbr.rel (%p201) target = $region12
    $region11: #{cab_dsc_forward.1} parent=5 // pred_region
      %s205 = ssub.s32 %s13, 1
      // Predicated region
      $region13: #{cab_dsc_forward.1} parent=11 // pred_check
        %p206 = pneg %p60
      $region14: #{cab_dsc_forward.1} parent=11 // pred_check_branch
        %208 = sbr.rel (%p206) target = $region16
      $region15: #{cab_dsc_forward.1} parent=11 // pred_region
        _
      $region16: #{cab_dsc_forward.1} parent=11 // pred_fallthru
        _
      // Predicated region
      $region17: #{cab_dsc_forward.1} parent=11 // pred_check
        %p209 = pneg %p81
      $region18: #{cab_dsc_forward.1} parent=11 // pred_check_branch
        %211 = sbr.rel (%p209) target = $region20
      $region19: #{cab_dsc_forward.1} parent=11 // pred_region
        _
      $region20: #{cab_dsc_forward.1} parent=11 // pred_fallthru
        _
      // Predicated region
      $region21: #{cab_dsc_forward.1} parent=11 // pred_check
        %p212 = pneg %p102
      $region22: #{cab_dsc_forward.1} parent=11 // pred_check_branch
        %214 = sbr.rel (%p212) target = $region24
      $region23: #{cab_dsc_forward.1} parent=11 // pred_region
        _
      $region24: #{cab_dsc_forward.1} parent=11 // pred_fallthru
        _
      // Predicated region
      $region25: #{cab_dsc_forward.1} parent=11 // pred_check
        %p215 = pneg %p123
      $region26: #{cab_dsc_forward.1} parent=11 // pred_check_branch
        %217 = sbr.rel (%p215) target = $region28
      $region27: #{cab_dsc_forward.1} parent=11 // pred_region
        _
      $region28: #{cab_dsc_forward.1} parent=11 // pred_fallthru
        _
      // Predicated region
      $region29: #{cab_dsc_forward.1} parent=11 // pred_check
        %p218 = pneg %p144
      $region30: #{cab_dsc_forward.1} parent=11 // pred_check_branch
        %220 = sbr.rel (%p218) target = $region32
      $region31: #{cab_dsc_forward.1} parent=11 // pred_region
        _
      $region32: #{cab_dsc_forward.1} parent=11 // pred_fallthru
        _
      // Predicated region
      $region33: #{cab_dsc_forward.1} parent=11 // pred_check
        %p221 = pneg %p165
      $region34: #{cab_dsc_forward.1} parent=11 // pred_check_branch
        %223 = sbr.rel (%p221) target = $region36
      $region35: #{cab_dsc_forward.1} parent=11 // pred_region
        _
      $region36: #{cab_dsc_forward.1} parent=11 // pred_fallthru
        _
    $region12: #{cab_dsc_forward.1} parent=5 // pred_fallthru
      _
    %p224 = scmp.lt.s32.totalorder %s13, 2
    // Predicated region
    $region37: #{cab_dsc_forward.1} parent=5 // pred_check
      %p225 = pneg %p224
    $region38: #{cab_dsc_forward.1} parent=5 // pred_check_branch
      %227 = sbr.rel (%p225) target = $region40
    $region39: #{cab_dsc_forward.1} parent=5 // pred_region
      // Predicated region
      $region41: #{cab_dsc_forward.1} parent=39 // pred_check
        %p228 = pneg %p33
      $region42: #{cab_dsc_forward.1} parent=39 // pred_check_branch
        %230 = sbr.rel (%p228) target = $region44
      $region43: #{cab_dsc_forward.1} parent=39 // pred_region
        %s231 = smul.u32 2, %s13
        %p232 = scmp.lt.s32.totalorder %s231, 3
        %s233 = scalar_select %p232, %s231, 3
        %s234 = smul.addr %s233, 4
        %s235 = smul.addr %s234, 8
        %s236 = scalar_lea.vmem %s0, %s235
        %s237 = smul.u32 2, %s13
      $region44: #{cab_dsc_forward.1} parent=39 // pred_fallthru
        _
    $region40: #{cab_dsc_forward.1} parent=5 // pred_fallthru
      _
    %p238 = scmp.le.s32.totalorder 1, %s13
    %p239 = scmp.lt.s32.totalorder %s13, 3
    %p240 = pnand %p238, %p239
    %p241 = pneg %p240
    // Predicated region
    $region45: #{cab_dsc_forward.1} parent=5 // pred_check
      _
    $region46: #{cab_dsc_forward.1} parent=5 // pred_check_branch
      %243 = sbr.rel (%p240) target = $region48
    $region47: #{cab_dsc_forward.1} parent=5 // pred_region
      %s244 = ssub.s32 %s13, 1
      %s245 = smul.u32 2, %s18
      %p246 = scmp.lt.s32.totalorder %s245, 3
      %s247 = scalar_select %p246, %s245, 3
      %s248 = smul.addr %s247, 4
      %s249 = smul.addr %s248, 8
      %s250 = scalar_lea.vmem %s0, %s249
      %p251 = pneg %p39
      %p252 = pneg %p36
      %p253 = pneg %p60
      %p254 = pneg %p57
      %p255 = pneg %p81
      %p256 = pneg %p78
      %p257 = pneg %p102
      %p258 = pneg %p99
      %p259 = pneg %p123
      %p260 = pneg %p120
      %p261 = pneg %p144
      %p262 = pneg %p141
      %p263 = pneg %p165
      %p264 = pneg %p162
      %p265 = pneg %p191
      %p266 = pneg %p188
      %s267 = smul.u32 2, %s18
      %p268 = scmp.lt.s32.totalorder %s267, 3
      %s269 = scalar_select %p268, %s267, 3
      %s270 = smul.addr %s269, 4
      %s271 = smul.addr %s270, 8
      %s272 = scalar_lea.vmem %s7, %s271
      %s273 = smul.u32 2, %s18
      %p274 = scmp.lt.s32.totalorder %s273, 3
      %s275 = scalar_select %p274, %s273, 3
      %s276 = smul.addr %s275, 4
      %s277 = smul.addr %s276, 8
      %s278 = scalar_lea.vmem %s0, %s277
      %s279 = smul.u32 2, %s18
      %s280 = smul.u32 2, %s18
      %p281 = scmp.lt.s32.totalorder %s280, 3
      %s282 = scalar_select %p281, %s280, 3
      %s283 = smul.addr %s282, 4
      %s284 = smul.addr %s283, 8
      %s285 = scalar_lea.vmem %s7, %s284
      %s286 = smul.u32 2, %s18
      %v288 = vld [vmem:[%s278] sm:$0xff]
      %v289 = vld [vmem:[%s278 + $0x8] sm:$0xff]
      %v290 = vld [vmem:[%s278 + $0x10] sm:$0xff]
      %v291 = vld [vmem:[%s278 + $0x18] sm:$0xff]
      %s292 = scalar_lea.vmem %s278, 32
      %v293 = vld [vmem:[%s292] sm:$0xff]
      %v294 = vld [vmem:[%s292 + $0x8] sm:$0xff]
      %v295 = vld [vmem:[%s292 + $0x10] sm:$0xff]
      %v296 = vld [vmem:[%s292 + $0x18] sm:$0xff]
      %v297 = vld [vmem:[%s2] sm:$0xff]
      %v298 = vld [vmem:[%s2 + $0x8] sm:$0xff]
      %v299 = vld [vmem:[%s2 + $0x10] sm:$0xff]
      %v300 = vld [vmem:[%s2 + $0x18] sm:$0xff]
      %v301 = vld [vmem:[%s2 + $0x20] sm:$0xff]
      %v302 = vld [vmem:[%s2 + $0x28] sm:$0xff]
      %v303 = vld [vmem:[%s2 + $0x30] sm:$0xff]
      %v304 = vld [vmem:[%s2 + $0x38] sm:$0xff]
      %v305 = vld [vmem:[%s3] sm:$0xff]
      %v306 = vld [vmem:[%s3 + $0x8] sm:$0xff]
      %v307 = vld [vmem:[%s3 + $0x10] sm:$0xff]
      %v308 = vld [vmem:[%s3 + $0x18] sm:$0xff]
      %v309 = vld [vmem:[%s3 + $0x20] sm:$0xff]
      %v310 = vld [vmem:[%s3 + $0x28] sm:$0xff]
      %v311 = vld [vmem:[%s3 + $0x30] sm:$0xff]
      %v312 = vld [vmem:[%s3 + $0x38] sm:$0xff]
      %v313 = vld [vmem:[%s3 + $0x40] sm:$0xff]
      %v314 = vld [vmem:[%s3 + $0x48] sm:$0xff]
      %v315 = vld [vmem:[%s3 + $0x50] sm:$0xff]
      %v316 = vld [vmem:[%s3 + $0x58] sm:$0xff]
      %v317 = vld [vmem:[%s3 + $0x60] sm:$0xff]
      %v318 = vld [vmem:[%s3 + $0x68] sm:$0xff]
      %v319 = vld [vmem:[%s4] sm:$0xf]
      %v320 = vld [vmem:[%s4 + $0x4] sm:$0xf]
      %v321 = vld [vmem:[%s4 + $0x8] sm:$0xf]
      %v322 = vld [vmem:[%s4 + $0xc] sm:$0xf]
      %v323 = vld [vmem:[%s6] sm:$0xff]
      %v324 = vld [vmem:[%s6 + $0x8] sm:$0xff]
      %v325 = vld [vmem:[%s6 + $0x10] sm:$0xff]
      %v326 = vld [vmem:[%s6 + $0x18] sm:$0xff]
      %v327 = vld [vmem:[%s6 + $0x20] sm:$0xff]
      %v328 = vld [vmem:[%s6 + $0x28] sm:$0xff]
      %v329 = vld [vmem:[%s6 + $0x30] sm:$0xff]
      %v330 = vld [vmem:[%s6 + $0x38] sm:$0xff]
      %331 = vrot.lane.b32.xlu0 %v288, 17
      %v332 = vpop.permute.xlu0 %331
      %333 = vrot.lane.b32.xlu0 %v290, 17
      %v334 = vpop.permute.xlu0 %333
      %335 = vrot.lane.b32.xlu0 %v289, 17
      %v336 = vpop.permute.xlu0 %335
      %337 = vrot.lane.b32.xlu0 %v291, 17
      %v338 = vpop.permute.xlu0 %337
      %339 = vrot.lane.b32.xlu0 %v293, 17
      %v340 = vpop.permute.xlu0 %339
      %341 = vrot.lane.b32.xlu0 %v295, 17
      %v342 = vpop.permute.xlu0 %341
      %343 = vrot.lane.b32.xlu0 %v294, 17
      %v344 = vpop.permute.xlu0 %343
      %345 = vrot.lane.b32.xlu0 %v296, 17
      %v346 = vpop.permute.xlu0 %345
      %v347 = vlaneseq
      %v348 = vand.u32 %v347, 127
      %vm349 = vcmp.lt.s32.totalorder %v348, 17
      %v350 = vsel %vm349, %v340, %v344
      %v351 = vsel %vm349, %v342, %v346
      %v352 = vsel %vm349, %v336, %v340
      %v353 = vsel %vm349, %v338, %v342
      %v354 = vsel %vm349, %v332, %v336
      %v355 = vsel %vm349, %v334, %v338
      %v356 = vsel %vm349, %v344, %v332
      %v357 = vsel %vm349, %v346, %v334
      %v358 = vld [vmem:[%s1] ss:$8 sm:$0xf]
      %v360 = vlaneseq
      %v361 = vshrl.u32 %v360, 7
      %v362 = vsub.s32 0, %v361
      %v363 = vrot.slane %v358, %v362
      %v364 = vlaneseq
      %v365 = vshrl.u32 %v364, 7
      %v366 = vsub.s32 1, %v365
      %v367 = vrot.slane %v358, %v366
      %v368 = vlaneseq
      %v369 = vshrl.u32 %v368, 7
      %v370 = vsub.s32 2, %v369
      %v371 = vrot.slane %v358, %v370
      %v372 = vlaneseq
      %v373 = vshrl.u32 %v372, 7
      %v374 = vsub.s32 3, %v373
      %v375 = vrot.slane %v358, %v374
      %v380 = vmul.f32 %v356, %v363
      %v381 = vmul.f32 %v354, %v367
      %v382 = vmul.f32 %v352, %v371
      %v383 = vmul.f32 %v350, %v375
      %v384 = vmul.f32 %v357, %v363
      %v385 = vmul.f32 %v355, %v367
      %v386 = vmul.f32 %v353, %v371
      %v387 = vmul.f32 %v351, %v375
      %389 = vset.pattern.permute.xlu0 0
      %390 = vperm.xlu0 %389, %v297
      %v391 = vpop.permute.xlu0 %390
      %394 = vset.pattern.permute.xlu0 0
      %395 = vperm.xlu0 %394, %v298
      %v396 = vpop.permute.xlu0 %395
      %v398 = vmul.f32 %v391, %v380
      %v399 = vmul.f32 %v391, %v381
      %v400 = vmul.f32 %v391, %v382
      %v401 = vmul.f32 %v391, %v383
      %v402 = vmul.f32 %v396, %v384
      %v403 = vmul.f32 %v396, %v385
      %v404 = vmul.f32 %v396, %v386
      %v405 = vmul.f32 %v396, %v387
      %v406 = vadd.f32 %v398, 0.0
      %v407 = vadd.f32 %v399, 0.0
      %v408 = vadd.f32 %v400, 0.0
      %v409 = vadd.f32 %v401, 0.0
      %v410 = vadd.f32 %v402, 0.0
      %v411 = vadd.f32 %v403, 0.0
      %v412 = vadd.f32 %v404, 0.0
      %v413 = vadd.f32 %v405, 0.0
      %415 = vset.pattern.permute.xlu0 0
      %416 = vperm.xlu0 %415, %v303
      %v417 = vpop.permute.xlu0 %416
      %420 = vset.pattern.permute.xlu0 0
      %421 = vperm.xlu0 %420, %v304
      %v422 = vpop.permute.xlu0 %421
      %v424 = vmul.f32 %v417, %v380
      %v425 = vmul.f32 %v417, %v381
      %v426 = vmul.f32 %v417, %v382
      %v427 = vmul.f32 %v417, %v383
      %v428 = vmul.f32 %v422, %v384
      %v429 = vmul.f32 %v422, %v385
      %v430 = vmul.f32 %v422, %v386
      %v431 = vmul.f32 %v422, %v387
      %v432 = vadd.f32 %v424, 0.0
      %v433 = vadd.f32 %v425, 0.0
      %v434 = vadd.f32 %v426, 0.0
      %v435 = vadd.f32 %v427, 0.0
      %v436 = vadd.f32 %v428, 0.0
      %v437 = vadd.f32 %v429, 0.0
      %v438 = vadd.f32 %v430, 0.0
      %v439 = vadd.f32 %v431, 0.0
      %440 = vrot.lane.b32.xlu0 %v288, 16
      %v441 = vpop.permute.xlu0 %440
      %442 = vrot.lane.b32.xlu0 %v290, 16
      %v443 = vpop.permute.xlu0 %442
      %444 = vrot.lane.b32.xlu0 %v289, 16
      %v445 = vpop.permute.xlu0 %444
      %446 = vrot.lane.b32.xlu0 %v291, 16
      %v447 = vpop.permute.xlu0 %446
      %448 = vrot.lane.b32.xlu0 %v293, 16
      %v449 = vpop.permute.xlu0 %448
      %450 = vrot.lane.b32.xlu0 %v295, 16
      %v451 = vpop.permute.xlu0 %450
      %452 = vrot.lane.b32.xlu0 %v294, 16
      %v453 = vpop.permute.xlu0 %452
      %454 = vrot.lane.b32.xlu0 %v296, 16
      %v455 = vpop.permute.xlu0 %454
      %vm456 = vcmp.lt.s32.totalorder %v348, 16
      %v457 = vsel %vm456, %v449, %v453
      %v458 = vsel %vm456, %v451, %v455
      %v459 = vsel %vm456, %v445, %v449
      %v460 = vsel %vm456, %v447, %v451
      %v461 = vsel %vm456, %v441, %v445
      %v462 = vsel %vm456, %v443, %v447
      %v463 = vsel %vm456, %v453, %v441
      %v464 = vsel %vm456, %v455, %v443
      %s465 = scalar_lea.vmem %s1, 1
      %v466 = vld [vmem:[%s465] ss:$8 sm:$0xf]
      %v468 = vlaneseq
      %v469 = vshrl.u32 %v468, 7
      %v470 = vsub.s32 0, %v469
      %v471 = vrot.slane %v466, %v470
      %v472 = vlaneseq
      %v473 = vshrl.u32 %v472, 7
      %v474 = vsub.s32 1, %v473
      %v475 = vrot.slane %v466, %v474
      %v476 = vlaneseq
      %v477 = vshrl.u32 %v476, 7
      %v478 = vsub.s32 2, %v477
      %v479 = vrot.slane %v466, %v478
      %v480 = vlaneseq
      %v481 = vshrl.u32 %v480, 7
      %v482 = vsub.s32 3, %v481
      %v483 = vrot.slane %v466, %v482
      %v488 = vmul.f32 %v463, %v471
      %v489 = vmul.f32 %v461, %v475
      %v490 = vmul.f32 %v459, %v479
      %v491 = vmul.f32 %v457, %v483
      %v492 = vmul.f32 %v464, %v471
      %v493 = vmul.f32 %v462, %v475
      %v494 = vmul.f32 %v460, %v479
      %v495 = vmul.f32 %v458, %v483
      %496 = vset.pattern.permute.xlu0 1
      %497 = vperm.xlu0 %496, %v297
      %v498 = vpop.permute.xlu0 %497
      %500 = vset.pattern.permute.xlu0 1
      %501 = vperm.xlu0 %500, %v298
      %v502 = vpop.permute.xlu0 %501
      %v504 = vmul.f32 %v498, %v488
      %v505 = vmul.f32 %v498, %v489
      %v506 = vmul.f32 %v498, %v490
      %v507 = vmul.f32 %v498, %v491
      %v508 = vmul.f32 %v502, %v492
      %v509 = vmul.f32 %v502, %v493
      %v510 = vmul.f32 %v502, %v494
      %v511 = vmul.f32 %v502, %v495
      %v512 = vadd.f32 %v406, %v504
      %v513 = vadd.f32 %v407, %v505
      %v514 = vadd.f32 %v408, %v506
      %v515 = vadd.f32 %v409, %v507
      %v516 = vadd.f32 %v410, %v508
      %v517 = vadd.f32 %v411, %v509
      %v518 = vadd.f32 %v412, %v510
      %v519 = vadd.f32 %v413, %v511
      %520 = vset.pattern.permute.xlu0 1
      %521 = vperm.xlu0 %520, %v303
      %v522 = vpop.permute.xlu0 %521
      %524 = vset.pattern.permute.xlu0 1
      %525 = vperm.xlu0 %524, %v304
      %v526 = vpop.permute.xlu0 %525
      %v528 = vmul.f32 %v522, %v488
      %v529 = vmul.f32 %v522, %v489
      %v530 = vmul.f32 %v522, %v490
      %v531 = vmul.f32 %v522, %v491
      %v532 = vmul.f32 %v526, %v492
      %v533 = vmul.f32 %v526, %v493
      %v534 = vmul.f32 %v526, %v494
      %v535 = vmul.f32 %v526, %v495
      %v536 = vadd.f32 %v432, %v528
      %v537 = vadd.f32 %v433, %v529
      %v538 = vadd.f32 %v434, %v530
      %v539 = vadd.f32 %v435, %v531
      %v540 = vadd.f32 %v436, %v532
      %v541 = vadd.f32 %v437, %v533
      %v542 = vadd.f32 %v438, %v534
      %v543 = vadd.f32 %v439, %v535
      %544 = vrot.lane.b32.xlu0 %v288, 15
      %v545 = vpop.permute.xlu0 %544
      %546 = vrot.lane.b32.xlu0 %v290, 15
      %v547 = vpop.permute.xlu0 %546
      %548 = vrot.lane.b32.xlu0 %v289, 15
      %v549 = vpop.permute.xlu0 %548
      %550 = vrot.lane.b32.xlu0 %v291, 15
      %v551 = vpop.permute.xlu0 %550
      %552 = vrot.lane.b32.xlu0 %v293, 15
      %v553 = vpop.permute.xlu0 %552
      %554 = vrot.lane.b32.xlu0 %v295, 15
      %v555 = vpop.permute.xlu0 %554
      %556 = vrot.lane.b32.xlu0 %v294, 15
      %v557 = vpop.permute.xlu0 %556
      %558 = vrot.lane.b32.xlu0 %v296, 15
      %v559 = vpop.permute.xlu0 %558
      %vm560 = vcmp.lt.s32.totalorder %v348, 15
      %v561 = vsel %vm560, %v553, %v557
      %v562 = vsel %vm560, %v555, %v559
      %v563 = vsel %vm560, %v549, %v553
      %v564 = vsel %vm560, %v551, %v555
      %v565 = vsel %vm560, %v545, %v549
      %v566 = vsel %vm560, %v547, %v551
      %v567 = vsel %vm560, %v557, %v545
      %v568 = vsel %vm560, %v559, %v547
      %s569 = scalar_lea.vmem %s1, 2
      %v570 = vld [vmem:[%s569] ss:$8 sm:$0xf]
      %v572 = vlaneseq
      %v573 = vshrl.u32 %v572, 7
      %v574 = vsub.s32 0, %v573
      %v575 = vrot.slane %v570, %v574
      %v576 = vlaneseq
      %v577 = vshrl.u32 %v576, 7
      %v578 = vsub.s32 1, %v577
      %v579 = vrot.slane %v570, %v578
      %v580 = vlaneseq
      %v581 = vshrl.u32 %v580, 7
      %v582 = vsub.s32 2, %v581
      %v583 = vrot.slane %v570, %v582
      %v584 = vlaneseq
      %v585 = vshrl.u32 %v584, 7
      %v586 = vsub.s32 3, %v585
      %v587 = vrot.slane %v570, %v586
      %v592 = vmul.f32 %v567, %v575
      %v593 = vmul.f32 %v565, %v579
      %v594 = vmul.f32 %v563, %v583
      %v595 = vmul.f32 %v561, %v587
      %v596 = vmul.f32 %v568, %v575
      %v597 = vmul.f32 %v566, %v579
      %v598 = vmul.f32 %v564, %v583
      %v599 = vmul.f32 %v562, %v587
      %600 = vset.pattern.permute.xlu0 2
      %601 = vperm.xlu0 %600, %v297
      %v602 = vpop.permute.xlu0 %601
      %604 = vset.pattern.permute.xlu0 2
      %605 = vperm.xlu0 %604, %v298
      %v606 = vpop.permute.xlu0 %605
      %v608 = vmul.f32 %v602, %v592
      %v609 = vmul.f32 %v602, %v593
      %v610 = vmul.f32 %v602, %v594
      %v611 = vmul.f32 %v602, %v595
      %v612 = vmul.f32 %v606, %v596
      %v613 = vmul.f32 %v606, %v597
      %v614 = vmul.f32 %v606, %v598
      %v615 = vmul.f32 %v606, %v599
      %v616 = vadd.f32 %v512, %v608
      %v617 = vadd.f32 %v513, %v609
      %v618 = vadd.f32 %v514, %v610
      %v619 = vadd.f32 %v515, %v611
      %v620 = vadd.f32 %v516, %v612
      %v621 = vadd.f32 %v517, %v613
      %v622 = vadd.f32 %v518, %v614
      %v623 = vadd.f32 %v519, %v615
      %624 = vset.pattern.permute.xlu0 2
      %625 = vperm.xlu0 %624, %v303
      %v626 = vpop.permute.xlu0 %625
      %628 = vset.pattern.permute.xlu0 2
      %629 = vperm.xlu0 %628, %v304
      %v630 = vpop.permute.xlu0 %629
      %v632 = vmul.f32 %v626, %v592
      %v633 = vmul.f32 %v626, %v593
      %v634 = vmul.f32 %v626, %v594
      %v635 = vmul.f32 %v626, %v595
      %v636 = vmul.f32 %v630, %v596
      %v637 = vmul.f32 %v630, %v597
      %v638 = vmul.f32 %v630, %v598
      %v639 = vmul.f32 %v630, %v599
      %v640 = vadd.f32 %v536, %v632
      %v641 = vadd.f32 %v537, %v633
      %v642 = vadd.f32 %v538, %v634
      %v643 = vadd.f32 %v539, %v635
      %v644 = vadd.f32 %v540, %v636
      %v645 = vadd.f32 %v541, %v637
      %v646 = vadd.f32 %v542, %v638
      %v647 = vadd.f32 %v543, %v639
      %648 = vrot.lane.b32.xlu0 %v288, 1
      %v649 = vpop.permute.xlu0 %648
      %650 = vrot.lane.b32.xlu0 %v290, 1
      %v651 = vpop.permute.xlu0 %650
      %652 = vrot.lane.b32.xlu0 %v289, 1
      %v653 = vpop.permute.xlu0 %652
      %654 = vrot.lane.b32.xlu0 %v291, 1
      %v655 = vpop.permute.xlu0 %654
      %656 = vrot.lane.b32.xlu0 %v293, 1
      %v657 = vpop.permute.xlu0 %656
      %658 = vrot.lane.b32.xlu0 %v295, 1
      %v659 = vpop.permute.xlu0 %658
      %660 = vrot.lane.b32.xlu0 %v294, 1
      %v661 = vpop.permute.xlu0 %660
      %662 = vrot.lane.b32.xlu0 %v296, 1
      %v663 = vpop.permute.xlu0 %662
      %vm664 = vcmp.lt.s32.totalorder %v348, 1
      %v665 = vsel %vm664, %v657, %v661
      %v666 = vsel %vm664, %v659, %v663
      %v667 = vsel %vm664, %v653, %v657
      %v668 = vsel %vm664, %v655, %v659
      %v669 = vsel %vm664, %v649, %v653
      %v670 = vsel %vm664, %v651, %v655
      %v671 = vsel %vm664, %v661, %v649
      %v672 = vsel %vm664, %v663, %v651
      %s673 = scalar_lea.vmem %s1, 3
      %v674 = vld [vmem:[%s673] ss:$8 sm:$0xf]
      %v676 = vlaneseq
      %v677 = vshrl.u32 %v676, 7
      %v678 = vsub.s32 0, %v677
      %v679 = vrot.slane %v674, %v678
      %v680 = vlaneseq
      %v681 = vshrl.u32 %v680, 7
      %v682 = vsub.s32 1, %v681
      %v683 = vrot.slane %v674, %v682
      %v684 = vlaneseq
      %v685 = vshrl.u32 %v684, 7
      %v686 = vsub.s32 2, %v685
      %v687 = vrot.slane %v674, %v686
      %v688 = vlaneseq
      %v689 = vshrl.u32 %v688, 7
      %v690 = vsub.s32 3, %v689
      %v691 = vrot.slane %v674, %v690
      %v696 = vmul.f32 %v671, %v679
      %v697 = vmul.f32 %v669, %v683
      %v698 = vmul.f32 %v667, %v687
      %v699 = vmul.f32 %v665, %v691
      %v700 = vmul.f32 %v672, %v679
      %v701 = vmul.f32 %v670, %v683
      %v702 = vmul.f32 %v668, %v687
      %v703 = vmul.f32 %v666, %v691
      %704 = vset.pattern.permute.xlu0 3
      %705 = vperm.xlu0 %704, %v297
      %v706 = vpop.permute.xlu0 %705
      %708 = vset.pattern.permute.xlu0 3
      %709 = vperm.xlu0 %708, %v298
      %v710 = vpop.permute.xlu0 %709
      %v712 = vmul.f32 %v706, %v696
      %v713 = vmul.f32 %v706, %v697
      %v714 = vmul.f32 %v706, %v698
      %v715 = vmul.f32 %v706, %v699
      %v716 = vmul.f32 %v710, %v700
      %v717 = vmul.f32 %v710, %v701
      %v718 = vmul.f32 %v710, %v702
      %v719 = vmul.f32 %v710, %v703
      %v720 = vadd.f32 %v616, %v712
      %v721 = vadd.f32 %v617, %v713
      %v722 = vadd.f32 %v618, %v714
      %v723 = vadd.f32 %v619, %v715
      %v724 = vadd.f32 %v620, %v716
      %v725 = vadd.f32 %v621, %v717
      %v726 = vadd.f32 %v622, %v718
      %v727 = vadd.f32 %v623, %v719
      %728 = vset.pattern.permute.xlu0 3
      %729 = vperm.xlu0 %728, %v303
      %v730 = vpop.permute.xlu0 %729
      %732 = vset.pattern.permute.xlu0 3
      %733 = vperm.xlu0 %732, %v304
      %v734 = vpop.permute.xlu0 %733
      %v736 = vmul.f32 %v730, %v696
      %v737 = vmul.f32 %v730, %v697
      %v738 = vmul.f32 %v730, %v698
      %v739 = vmul.f32 %v730, %v699
      %v740 = vmul.f32 %v734, %v700
      %v741 = vmul.f32 %v734, %v701
      %v742 = vmul.f32 %v734, %v702
      %v743 = vmul.f32 %v734, %v703
      %v744 = vadd.f32 %v640, %v736
      %v745 = vadd.f32 %v641, %v737
      %v746 = vadd.f32 %v642, %v738
      %v747 = vadd.f32 %v643, %v739
      %v748 = vadd.f32 %v644, %v740
      %v749 = vadd.f32 %v645, %v741
      %v750 = vadd.f32 %v646, %v742
      %v751 = vadd.f32 %v647, %v743
      %752 = vset.pattern.permute.xlu0 4
      %753 = vperm.xlu0 %752, %v297
      %v754 = vpop.permute.xlu0 %753
      %756 = vset.pattern.permute.xlu0 4
      %757 = vperm.xlu0 %756, %v298
      %v758 = vpop.permute.xlu0 %757
      %v760 = vmul.f32 %v754, %v288
      %v761 = vmul.f32 %v754, %v289
      %v762 = vmul.f32 %v754, %v293
      %v763 = vmul.f32 %v754, %v294
      %v764 = vmul.f32 %v758, %v290
      %v765 = vmul.f32 %v758, %v291
      %v766 = vmul.f32 %v758, %v295
      %v767 = vmul.f32 %v758, %v296
      %v768 = vadd.f32 %v720, %v760
      %v769 = vadd.f32 %v721, %v761
      %v770 = vadd.f32 %v722, %v762
      %v771 = vadd.f32 %v723, %v763
      %v772 = vadd.f32 %v724, %v764
      %v773 = vadd.f32 %v725, %v765
      %v774 = vadd.f32 %v726, %v766
      %v775 = vadd.f32 %v727, %v767
      %776 = vset.pattern.permute.xlu0 4
      %777 = vperm.xlu0 %776, %v303
      %v778 = vpop.permute.xlu0 %777
      %780 = vset.pattern.permute.xlu0 4
      %781 = vperm.xlu0 %780, %v304
      %v782 = vpop.permute.xlu0 %781
      %v784 = vmul.f32 %v778, %v288
      %v785 = vmul.f32 %v778, %v289
      %v786 = vmul.f32 %v778, %v293
      %v787 = vmul.f32 %v778, %v294
      %v788 = vmul.f32 %v782, %v290
      %v789 = vmul.f32 %v782, %v291
      %v790 = vmul.f32 %v782, %v295
      %v791 = vmul.f32 %v782, %v296
      %v792 = vadd.f32 %v744, %v784
      %v793 = vadd.f32 %v745, %v785
      %v794 = vadd.f32 %v746, %v786
      %v795 = vadd.f32 %v747, %v787
      %v796 = vadd.f32 %v748, %v788
      %v797 = vadd.f32 %v749, %v789
      %v798 = vadd.f32 %v750, %v790
      %v799 = vadd.f32 %v751, %v791
      %800 = vrot.lane.b32.xlu0 %v288, 127
      %v801 = vpop.permute.xlu0 %800
      %802 = vrot.lane.b32.xlu0 %v290, 127
      %v803 = vpop.permute.xlu0 %802
      %804 = vrot.lane.b32.xlu0 %v289, 127
      %v805 = vpop.permute.xlu0 %804
      %806 = vrot.lane.b32.xlu0 %v291, 127
      %v807 = vpop.permute.xlu0 %806
      %808 = vrot.lane.b32.xlu0 %v293, 127
      %v809 = vpop.permute.xlu0 %808
      %810 = vrot.lane.b32.xlu0 %v295, 127
      %v811 = vpop.permute.xlu0 %810
      %812 = vrot.lane.b32.xlu0 %v294, 127
      %v813 = vpop.permute.xlu0 %812
      %814 = vrot.lane.b32.xlu0 %v296, 127
      %v815 = vpop.permute.xlu0 %814
      %vm816 = vcmp.lt.s32.totalorder %v348, 127
      %v817 = vsel %vm816, %v809, %v813
      %v818 = vsel %vm816, %v811, %v815
      %v819 = vsel %vm816, %v805, %v809
      %v820 = vsel %vm816, %v807, %v811
      %v821 = vsel %vm816, %v801, %v805
      %v822 = vsel %vm816, %v803, %v807
      %v823 = vsel %vm816, %v813, %v801
      %v824 = vsel %vm816, %v815, %v803
      %s825 = scalar_lea.vmem %s1, 5
      %v826 = vld [vmem:[%s825] ss:$8 sm:$0xf]
      %v828 = vlaneseq
      %v829 = vshrl.u32 %v828, 7
      %v830 = vsub.s32 0, %v829
      %v831 = vrot.slane %v826, %v830
      %v832 = vlaneseq
      %v833 = vshrl.u32 %v832, 7
      %v834 = vsub.s32 1, %v833
      %v835 = vrot.slane %v826, %v834
      %v836 = vlaneseq
      %v837 = vshrl.u32 %v836, 7
      %v838 = vsub.s32 2, %v837
      %v839 = vrot.slane %v826, %v838
      %v840 = vlaneseq
      %v841 = vshrl.u32 %v840, 7
      %v842 = vsub.s32 3, %v841
      %v843 = vrot.slane %v826, %v842
      %v848 = vmul.f32 %v821, %v831
      %v849 = vmul.f32 %v819, %v835
      %v850 = vmul.f32 %v817, %v839
      %v851 = vmul.f32 %v823, %v843
      %v852 = vmul.f32 %v822, %v831
      %v853 = vmul.f32 %v820, %v835
      %v854 = vmul.f32 %v818, %v839
      %v855 = vmul.f32 %v824, %v843
      %856 = vset.pattern.permute.xlu0 5
      %857 = vperm.xlu0 %856, %v297
      %v858 = vpop.permute.xlu0 %857
      %860 = vset.pattern.permute.xlu0 5
      %861 = vperm.xlu0 %860, %v298
      %v862 = vpop.permute.xlu0 %861
      %v864 = vmul.f32 %v858, %v848
      %v865 = vmul.f32 %v858, %v849
      %v866 = vmul.f32 %v858, %v850
      %v867 = vmul.f32 %v858, %v851
      %v868 = vmul.f32 %v862, %v852
      %v869 = vmul.f32 %v862, %v853
      %v870 = vmul.f32 %v862, %v854
      %v871 = vmul.f32 %v862, %v855
      %v872 = vadd.f32 %v768, %v864
      %v873 = vadd.f32 %v769, %v865
      %v874 = vadd.f32 %v770, %v866
      %v875 = vadd.f32 %v771, %v867
      %v876 = vadd.f32 %v772, %v868
      %v877 = vadd.f32 %v773, %v869
      %v878 = vadd.f32 %v774, %v870
      %v879 = vadd.f32 %v775, %v871
      %880 = vset.pattern.permute.xlu0 5
      %881 = vperm.xlu0 %880, %v303
      %v882 = vpop.permute.xlu0 %881
      %884 = vset.pattern.permute.xlu0 5
      %885 = vperm.xlu0 %884, %v304
      %v886 = vpop.permute.xlu0 %885
      %v888 = vmul.f32 %v882, %v848
      %v889 = vmul.f32 %v882, %v849
      %v890 = vmul.f32 %v882, %v850
      %v891 = vmul.f32 %v882, %v851
      %v892 = vmul.f32 %v886, %v852
      %v893 = vmul.f32 %v886, %v853
      %v894 = vmul.f32 %v886, %v854
      %v895 = vmul.f32 %v886, %v855
      %v896 = vadd.f32 %v792, %v888
      %v897 = vadd.f32 %v793, %v889
      %v898 = vadd.f32 %v794, %v890
      %v899 = vadd.f32 %v795, %v891
      %v900 = vadd.f32 %v796, %v892
      %v901 = vadd.f32 %v797, %v893
      %v902 = vadd.f32 %v798, %v894
      %v903 = vadd.f32 %v799, %v895
      %904 = vrot.lane.b32.xlu0 %v288, 113
      %v905 = vpop.permute.xlu0 %904
      %906 = vrot.lane.b32.xlu0 %v290, 113
      %v907 = vpop.permute.xlu0 %906
      %908 = vrot.lane.b32.xlu0 %v289, 113
      %v909 = vpop.permute.xlu0 %908
      %910 = vrot.lane.b32.xlu0 %v291, 113
      %v911 = vpop.permute.xlu0 %910
      %912 = vrot.lane.b32.xlu0 %v293, 113
      %v913 = vpop.permute.xlu0 %912
      %914 = vrot.lane.b32.xlu0 %v295, 113
      %v915 = vpop.permute.xlu0 %914
      %916 = vrot.lane.b32.xlu0 %v294, 113
      %v917 = vpop.permute.xlu0 %916
      %918 = vrot.lane.b32.xlu0 %v296, 113
      %v919 = vpop.permute.xlu0 %918
      %vm920 = vcmp.lt.s32.totalorder %v348, 113
      %v921 = vsel %vm920, %v913, %v917
      %v922 = vsel %vm920, %v915, %v919
      %v923 = vsel %vm920, %v909, %v913
      %v924 = vsel %vm920, %v911, %v915
      %v925 = vsel %vm920, %v905, %v909
      %v926 = vsel %vm920, %v907, %v911
      %v927 = vsel %vm920, %v917, %v905
      %v928 = vsel %vm920, %v919, %v907
      %s929 = scalar_lea.vmem %s1, 6
      %v930 = vld [vmem:[%s929] ss:$8 sm:$0xf]
      %v932 = vlaneseq
      %v933 = vshrl.u32 %v932, 7
      %v934 = vsub.s32 0, %v933
      %v935 = vrot.slane %v930, %v934
      %v936 = vlaneseq
      %v937 = vshrl.u32 %v936, 7
      %v938 = vsub.s32 1, %v937
      %v939 = vrot.slane %v930, %v938
      %v940 = vlaneseq
      %v941 = vshrl.u32 %v940, 7
      %v942 = vsub.s32 2, %v941
      %v943 = vrot.slane %v930, %v942
      %v944 = vlaneseq
      %v945 = vshrl.u32 %v944, 7
      %v946 = vsub.s32 3, %v945
      %v947 = vrot.slane %v930, %v946
      %v952 = vmul.f32 %v925, %v935
      %v953 = vmul.f32 %v923, %v939
      %v954 = vmul.f32 %v921, %v943
      %v955 = vmul.f32 %v927, %v947
      %v956 = vmul.f32 %v926, %v935
      %v957 = vmul.f32 %v924, %v939
      %v958 = vmul.f32 %v922, %v943
      %v959 = vmul.f32 %v928, %v947
      %960 = vset.pattern.permute.xlu0 6
      %961 = vperm.xlu0 %960, %v297
      %v962 = vpop.permute.xlu0 %961
      %964 = vset.pattern.permute.xlu0 6
      %965 = vperm.xlu0 %964, %v298
      %v966 = vpop.permute.xlu0 %965
      %v968 = vmul.f32 %v962, %v952
      %v969 = vmul.f32 %v962, %v953
      %v970 = vmul.f32 %v962, %v954
      %v971 = vmul.f32 %v962, %v955
      %v972 = vmul.f32 %v966, %v956
      %v973 = vmul.f32 %v966, %v957
      %v974 = vmul.f32 %v966, %v958
      %v975 = vmul.f32 %v966, %v959
      %v976 = vadd.f32 %v872, %v968
      %v977 = vadd.f32 %v873, %v969
      %v978 = vadd.f32 %v874, %v970
      %v979 = vadd.f32 %v875, %v971
      %v980 = vadd.f32 %v876, %v972
      %v981 = vadd.f32 %v877, %v973
      %v982 = vadd.f32 %v878, %v974
      %v983 = vadd.f32 %v879, %v975
      %984 = vset.pattern.permute.xlu0 6
      %985 = vperm.xlu0 %984, %v303
      %v986 = vpop.permute.xlu0 %985
      %988 = vset.pattern.permute.xlu0 6
      %989 = vperm.xlu0 %988, %v304
      %v990 = vpop.permute.xlu0 %989
      %v992 = vmul.f32 %v986, %v952
      %v993 = vmul.f32 %v986, %v953
      %v994 = vmul.f32 %v986, %v954
      %v995 = vmul.f32 %v986, %v955
      %v996 = vmul.f32 %v990, %v956
      %v997 = vmul.f32 %v990, %v957
      %v998 = vmul.f32 %v990, %v958
      %v999 = vmul.f32 %v990, %v959
      %v1000 = vadd.f32 %v896, %v992
      %v1001 = vadd.f32 %v897, %v993
      %v1002 = vadd.f32 %v898, %v994
      %v1003 = vadd.f32 %v899, %v995
      %v1004 = vadd.f32 %v900, %v996
      %v1005 = vadd.f32 %v901, %v997
      %v1006 = vadd.f32 %v902, %v998
      %v1007 = vadd.f32 %v903, %v999
      %1008 = vrot.lane.b32.xlu0 %v288, 112
      %v1009 = vpop.permute.xlu0 %1008
      %1010 = vrot.lane.b32.xlu0 %v290, 112
      %v1011 = vpop.permute.xlu0 %1010
      %1012 = vrot.lane.b32.xlu0 %v289, 112
      %v1013 = vpop.permute.xlu0 %1012
      %1014 = vrot.lane.b32.xlu0 %v291, 112
      %v1015 = vpop.permute.xlu0 %1014
      %1016 = vrot.lane.b32.xlu0 %v293, 112
      %v1017 = vpop.permute.xlu0 %1016
      %1018 = vrot.lane.b32.xlu0 %v295, 112
      %v1019 = vpop.permute.xlu0 %1018
      %1020 = vrot.lane.b32.xlu0 %v294, 112
      %v1021 = vpop.permute.xlu0 %1020
      %1022 = vrot.lane.b32.xlu0 %v296, 112
      %v1023 = vpop.permute.xlu0 %1022
      %vm1024 = vcmp.lt.s32.totalorder %v348, 112
      %v1025 = vsel %vm1024, %v1017, %v1021
      %v1026 = vsel %vm1024, %v1019, %v1023
      %v1027 = vsel %vm1024, %v1013, %v1017
      %v1028 = vsel %vm1024, %v1015, %v1019
      %v1029 = vsel %vm1024, %v1009, %v1013
      %v1030 = vsel %vm1024, %v1011, %v1015
      %v1031 = vsel %vm1024, %v1021, %v1009
      %v1032 = vsel %vm1024, %v1023, %v1011
      %s1033 = scalar_lea.vmem %s1, 7
      %v1034 = vld [vmem:[%s1033] ss:$8 sm:$0xf]
      %v1036 = vlaneseq
      %v1037 = vshrl.u32 %v1036, 7
      %v1038 = vsub.s32 0, %v1037
      %v1039 = vrot.slane %v1034, %v1038
      %v1040 = vlaneseq
      %v1041 = vshrl.u32 %v1040, 7
      %v1042 = vsub.s32 1, %v1041
      %v1043 = vrot.slane %v1034, %v1042
      %v1044 = vlaneseq
      %v1045 = vshrl.u32 %v1044, 7
      %v1046 = vsub.s32 2, %v1045
      %v1047 = vrot.slane %v1034, %v1046
      %v1048 = vlaneseq
      %v1049 = vshrl.u32 %v1048, 7
      %v1050 = vsub.s32 3, %v1049
      %v1051 = vrot.slane %v1034, %v1050
      %v1056 = vmul.f32 %v1029, %v1039
      %v1057 = vmul.f32 %v1027, %v1043
      %v1058 = vmul.f32 %v1025, %v1047
      %v1059 = vmul.f32 %v1031, %v1051
      %v1060 = vmul.f32 %v1030, %v1039
      %v1061 = vmul.f32 %v1028, %v1043
      %v1062 = vmul.f32 %v1026, %v1047
      %v1063 = vmul.f32 %v1032, %v1051
      %1064 = vset.pattern.permute.xlu0 7
      %1065 = vperm.xlu0 %1064, %v297
      %v1066 = vpop.permute.xlu0 %1065
      %1068 = vset.pattern.permute.xlu0 7
      %1069 = vperm.xlu0 %1068, %v298
      %v1070 = vpop.permute.xlu0 %1069
      %v1072 = vmul.f32 %v1066, %v1056
      %v1073 = vmul.f32 %v1066, %v1057
      %v1074 = vmul.f32 %v1066, %v1058
      %v1075 = vmul.f32 %v1066, %v1059
      %v1076 = vmul.f32 %v1070, %v1060
      %v1077 = vmul.f32 %v1070, %v1061
      %v1078 = vmul.f32 %v1070, %v1062
      %v1079 = vmul.f32 %v1070, %v1063
      %v1080 = vadd.f32 %v976, %v1072
      %v1081 = vadd.f32 %v977, %v1073
      %v1082 = vadd.f32 %v978, %v1074
      %v1083 = vadd.f32 %v979, %v1075
      %v1084 = vadd.f32 %v980, %v1076
      %v1085 = vadd.f32 %v981, %v1077
      %v1086 = vadd.f32 %v982, %v1078
      %v1087 = vadd.f32 %v983, %v1079
      %1088 = vset.pattern.permute.xlu0 7
      %1089 = vperm.xlu0 %1088, %v303
      %v1090 = vpop.permute.xlu0 %1089
      %1092 = vset.pattern.permute.xlu0 7
      %1093 = vperm.xlu0 %1092, %v304
      %v1094 = vpop.permute.xlu0 %1093
      %v1096 = vmul.f32 %v1090, %v1056
      %v1097 = vmul.f32 %v1090, %v1057
      %v1098 = vmul.f32 %v1090, %v1058
      %v1099 = vmul.f32 %v1090, %v1059
      %v1100 = vmul.f32 %v1094, %v1060
      %v1101 = vmul.f32 %v1094, %v1061
      %v1102 = vmul.f32 %v1094, %v1062
      %v1103 = vmul.f32 %v1094, %v1063
      %v1104 = vadd.f32 %v1000, %v1096
      %v1105 = vadd.f32 %v1001, %v1097
      %v1106 = vadd.f32 %v1002, %v1098
      %v1107 = vadd.f32 %v1003, %v1099
      %v1108 = vadd.f32 %v1004, %v1100
      %v1109 = vadd.f32 %v1005, %v1101
      %v1110 = vadd.f32 %v1006, %v1102
      %v1111 = vadd.f32 %v1007, %v1103
      %1112 = vrot.lane.b32.xlu0 %v288, 111
      %v1113 = vpop.permute.xlu0 %1112
      %1114 = vrot.lane.b32.xlu0 %v290, 111
      %v1115 = vpop.permute.xlu0 %1114
      %1116 = vrot.lane.b32.xlu0 %v289, 111
      %v1117 = vpop.permute.xlu0 %1116
      %1118 = vrot.lane.b32.xlu0 %v291, 111
      %v1119 = vpop.permute.xlu0 %1118
      %1120 = vrot.lane.b32.xlu0 %v293, 111
      %v1121 = vpop.permute.xlu0 %1120
      %1122 = vrot.lane.b32.xlu0 %v295, 111
      %v1123 = vpop.permute.xlu0 %1122
      %1124 = vrot.lane.b32.xlu0 %v294, 111
      %v1125 = vpop.permute.xlu0 %1124
      %1126 = vrot.lane.b32.xlu0 %v296, 111
      %v1127 = vpop.permute.xlu0 %1126
      %vm1128 = vcmp.lt.s32.totalorder %v348, 111
      %v1129 = vsel %vm1128, %v1121, %v1125
      %v1130 = vsel %vm1128, %v1123, %v1127
      %v1131 = vsel %vm1128, %v1117, %v1121
      %v1132 = vsel %vm1128, %v1119, %v1123
      %v1133 = vsel %vm1128, %v1113, %v1117
      %v1134 = vsel %vm1128, %v1115, %v1119
      %v1135 = vsel %vm1128, %v1125, %v1113
      %v1136 = vsel %vm1128, %v1127, %v1115
      %s1137 = scalar_lea.vmem %s1, 32
      %v1138 = vld [vmem:[%s1137] ss:$8 sm:$0xf]
      %v1140 = vlaneseq
      %v1141 = vshrl.u32 %v1140, 7
      %v1142 = vsub.s32 0, %v1141
      %v1143 = vrot.slane %v1138, %v1142
      %v1144 = vlaneseq
      %v1145 = vshrl.u32 %v1144, 7
      %v1146 = vsub.s32 1, %v1145
      %v1147 = vrot.slane %v1138, %v1146
      %v1148 = vlaneseq
      %v1149 = vshrl.u32 %v1148, 7
      %v1150 = vsub.s32 2, %v1149
      %v1151 = vrot.slane %v1138, %v1150
      %v1152 = vlaneseq
      %v1153 = vshrl.u32 %v1152, 7
      %v1154 = vsub.s32 3, %v1153
      %v1155 = vrot.slane %v1138, %v1154
      %v1160 = vmul.f32 %v1133, %v1143
      %v1161 = vmul.f32 %v1131, %v1147
      %v1162 = vmul.f32 %v1129, %v1151
      %v1163 = vmul.f32 %v1135, %v1155
      %v1164 = vmul.f32 %v1134, %v1143
      %v1165 = vmul.f32 %v1132, %v1147
      %v1166 = vmul.f32 %v1130, %v1151
      %v1167 = vmul.f32 %v1136, %v1155
      %1168 = vset.pattern.permute.xlu0 8
      %1169 = vperm.xlu0 %1168, %v297
      %v1170 = vpop.permute.xlu0 %1169
      %1172 = vset.pattern.permute.xlu0 8
      %1173 = vperm.xlu0 %1172, %v298
      %v1174 = vpop.permute.xlu0 %1173
      %v1176 = vmul.f32 %v1170, %v1160
      %v1177 = vmul.f32 %v1170, %v1161
      %v1178 = vmul.f32 %v1170, %v1162
      %v1179 = vmul.f32 %v1170, %v1163
      %v1180 = vmul.f32 %v1174, %v1164
      %v1181 = vmul.f32 %v1174, %v1165
      %v1182 = vmul.f32 %v1174, %v1166
      %v1183 = vmul.f32 %v1174, %v1167
      %v1184 = vadd.f32 %v1080, %v1176
      %v1185 = vadd.f32 %v1081, %v1177
      %v1186 = vadd.f32 %v1082, %v1178
      %v1187 = vadd.f32 %v1083, %v1179
      %v1188 = vadd.f32 %v1084, %v1180
      %v1189 = vadd.f32 %v1085, %v1181
      %v1190 = vadd.f32 %v1086, %v1182
      %v1191 = vadd.f32 %v1087, %v1183
      %1192 = vset.pattern.permute.xlu0 8
      %1193 = vperm.xlu0 %1192, %v303
      %v1194 = vpop.permute.xlu0 %1193
      %1196 = vset.pattern.permute.xlu0 8
      %1197 = vperm.xlu0 %1196, %v304
      %v1198 = vpop.permute.xlu0 %1197
      %v1200 = vmul.f32 %v1194, %v1160
      %v1201 = vmul.f32 %v1194, %v1161
      %v1202 = vmul.f32 %v1194, %v1162
      %v1203 = vmul.f32 %v1194, %v1163
      %v1204 = vmul.f32 %v1198, %v1164
      %v1205 = vmul.f32 %v1198, %v1165
      %v1206 = vmul.f32 %v1198, %v1166
      %v1207 = vmul.f32 %v1198, %v1167
      %v1208 = vadd.f32 %v1104, %v1200
      %v1209 = vadd.f32 %v1105, %v1201
      %v1210 = vadd.f32 %v1106, %v1202
      %v1211 = vadd.f32 %v1107, %v1203
      %v1212 = vadd.f32 %v1108, %v1204
      %v1213 = vadd.f32 %v1109, %v1205
      %v1214 = vadd.f32 %v1110, %v1206
      %v1215 = vadd.f32 %v1111, %v1207
      %1217 = vset.pattern.permute.xlu0 0
      %1218 = vperm.xlu0 %1217, %v305
      %v1219 = vpop.permute.xlu0 %1218
      %1222 = vset.pattern.permute.xlu0 0
      %1223 = vperm.xlu0 %1222, %v306
      %v1224 = vpop.permute.xlu0 %1223
      %v1226 = vadd.f32 %v1184, %v1219
      %v1227 = vadd.f32 %v1185, %v1219
      %v1228 = vadd.f32 %v1186, %v1219
      %v1229 = vadd.f32 %v1187, %v1219
      %v1230 = vadd.f32 %v1188, %v1224
      %v1231 = vadd.f32 %v1189, %v1224
      %v1232 = vadd.f32 %v1190, %v1224
      %v1233 = vadd.f32 %v1191, %v1224
      %1235 = vset.pattern.permute.xlu0 0
      %1236 = vperm.xlu0 %1235, %v315
      %v1237 = vpop.permute.xlu0 %1236
      %1240 = vset.pattern.permute.xlu0 0
      %1241 = vperm.xlu0 %1240, %v316
      %v1242 = vpop.permute.xlu0 %1241
      %v1244 = vadd.f32 %v1208, %v1237
      %v1245 = vadd.f32 %v1209, %v1237
      %v1246 = vadd.f32 %v1210, %v1237
      %v1247 = vadd.f32 %v1211, %v1237
      %v1248 = vadd.f32 %v1212, %v1242
      %v1249 = vadd.f32 %v1213, %v1242
      %v1250 = vadd.f32 %v1214, %v1242
      %v1251 = vadd.f32 %v1215, %v1242
      %v1252 = vpack.c.bf16 %v1230, %v1226
      %v1253 = vpack.c.bf16 %v1231, %v1227
      %v1254 = vpack.c.bf16 %v1232, %v1228
      %v1255 = vpack.c.bf16 %v1233, %v1229
      %1257 = vset.pattern.permute.xlu0 0
      %1258 = vperm.xlu0 %1257, %v307
      %v1259 = vpop.permute.xlu0 %1258
      %1262 = vset.pattern.permute.xlu0 0
      %1263 = vperm.xlu0 %1262, %v308
      %v1264 = vpop.permute.xlu0 %1263
      %v1268 = vunpack.c.l.b16 %v319
      %v1269 = vunpack.c.l.b16 %v320
      %v1270 = vpack.c.b16 %v1269, %v1268
      %vm1271 = vcmask 130048
      %v1273 = vsel %vm1271, %v1270, 0
      %1275 = vmatprep.subr.bf16.mxu0 %v1253
      %1276 = vmatpush1.bf16.msra.mxu0 %v1252
      %1277 = vmatprep.subr.bf16.mxu0 0
      %1278 = vmatpush1.bf16.msra.mxu0 0
      %1279 = vmatprep.subr.bf16.mxu0 0
      %1280 = vmatpush1.bf16.msra.mxu0 0
      %1281 = vmatprep.subr.bf16.mxu0 0
      %1282 = vmatpush1.bf16.msra.mxu0 0
      %1283 = vmatprep.subr.bf16.mxu0 0
      %1284 = vmatpush1.bf16.msra.mxu0 0
      %1285 = vmatprep.subr.bf16.mxu0 0
      %1286 = vmatpush1.bf16.msra.mxu0 0
      %1287 = vmatprep.subr.bf16.mxu0 0
      %1288 = vmatpush1.bf16.msra.mxu0 0
      %1289 = vmatprep.subr.bf16.mxu0 0
      %1290 = vmatpush1.bf16.msra.mxu0 0
      %1291 = vmatprep.subr.bf16.mxu0 0
      %1292 = vmatpush1.bf16.msra.mxu0 0
      %1293 = vmatprep.subr.bf16.mxu0 0
      %1294 = vmatpush1.bf16.msra.mxu0 0
      %1295 = vmatprep.subr.bf16.mxu0 0
      %1296 = vmatpush1.bf16.msra.mxu0 0
      %1297 = vmatprep.subr.bf16.mxu0 0
      %1298 = vmatpush1.bf16.msra.mxu0 0
      %1299 = vmatprep.subr.bf16.mxu0 0
      %1300 = vmatpush1.bf16.msra.mxu0 0
      %1301 = vmatprep.subr.bf16.mxu0 0
      %1302 = vmatpush1.bf16.msra.mxu0 0
      %1303 = vmatprep.subr.bf16.mxu0 0
      %1304 = vmatpush1.bf16.msra.mxu0 0
      %1305 = vmatprep.subr.bf16.mxu0 0
      %1306 = vmatpush1.bf16.msra.mxu0 0
      %1307 = vmatprep.mubr.bf16.mxu0 0
      %1308 = vmatmul.mubr.bf16.gmra.mrb[0].mxu0 %v1273
      %v1309 = vpop.f32.mrb[0].mxu0
      %v1310 = vadd.f32 %v1259, %v1309
      %v1311 = vpop.f32.mrb[0].mxu0
      %v1312 = vadd.f32 %v1259, %v1311
      %v1313 = vpop.f32.mrb[0].mxu0
      %v1314 = vadd.f32 %v1264, %v1313
      %v1315 = vpop.f32.mrb[0].mxu0
      %v1316 = vadd.f32 %v1264, %v1315
      %1317 = vdwg.mxu0
      %1318 = vmatprep.subr.bf16.mxu0 %v1255
      %1319 = vmatpush1.bf16.msra.mxu0 %v1254
      %1320 = vmatprep.subr.bf16.mxu0 0
      %1321 = vmatpush1.bf16.msra.mxu0 0
      %1322 = vmatprep.subr.bf16.mxu0 0
      %1323 = vmatpush1.bf16.msra.mxu0 0
      %1324 = vmatprep.subr.bf16.mxu0 0
      %1325 = vmatpush1.bf16.msra.mxu0 0
      %1326 = vmatprep.subr.bf16.mxu0 0
      %1327 = vmatpush1.bf16.msra.mxu0 0
      %1328 = vmatprep.subr.bf16.mxu0 0
      %1329 = vmatpush1.bf16.msra.mxu0 0
      %1330 = vmatprep.subr.bf16.mxu0 0
      %1331 = vmatpush1.bf16.msra.mxu0 0
      %1332 = vmatprep.subr.bf16.mxu0 0
      %1333 = vmatpush1.bf16.msra.mxu0 0
      %1334 = vmatprep.subr.bf16.mxu0 0
      %1335 = vmatpush1.bf16.msra.mxu0 0
      %1336 = vmatprep.subr.bf16.mxu0 0
      %1337 = vmatpush1.bf16.msra.mxu0 0
      %1338 = vmatprep.subr.bf16.mxu0 0
      %1339 = vmatpush1.bf16.msra.mxu0 0
      %1340 = vmatprep.subr.bf16.mxu0 0
      %1341 = vmatpush1.bf16.msra.mxu0 0
      %1342 = vmatprep.subr.bf16.mxu0 0
      %1343 = vmatpush1.bf16.msra.mxu0 0
      %1344 = vmatprep.subr.bf16.mxu0 0
      %1345 = vmatpush1.bf16.msra.mxu0 0
      %1346 = vmatprep.subr.bf16.mxu0 0
      %1347 = vmatpush1.bf16.msra.mxu0 0
      %1348 = vmatprep.subr.bf16.mxu0 0
      %1349 = vmatpush1.bf16.msra.mxu0 0
      %1350 = vmatprep.mubr.bf16.mxu0 0
      %1351 = vmatmul.mubr.bf16.gmra.mrb[0].mxu0 %v1273
      %v1352 = vpop.f32.mrb[0].mxu0
      %v1353 = vadd.f32 %v1259, %v1352
      %v1354 = vpop.f32.mrb[0].mxu0
      %v1355 = vadd.f32 %v1259, %v1354
      %v1356 = vpop.f32.mrb[0].mxu0
      %v1357 = vadd.f32 %v1264, %v1356
      %v1358 = vpop.f32.mrb[0].mxu0
      %v1359 = vadd.f32 %v1264, %v1358
      %1360 = vdwg.mxu0
      %v1361 = vmax.f32 %v1310, 0.0
      %v1362 = vmax.f32 %v1312, 0.0
      %v1363 = vmax.f32 %v1353, 0.0
      %v1364 = vmax.f32 %v1355, 0.0
      %v1365 = vmax.f32 %v1314, 0.0
      %v1366 = vmax.f32 %v1316, 0.0
      %v1367 = vmax.f32 %v1357, 0.0
      %v1368 = vmax.f32 %v1359, 0.0
      %1369 = vrot.lane.b32.xlu0 %v1361, 17
      %v1370 = vpop.permute.xlu0 %1369
      %1371 = vrot.lane.b32.xlu0 %v1365, 17
      %v1372 = vpop.permute.xlu0 %1371
      %1373 = vrot.lane.b32.xlu0 %v1362, 17
      %v1374 = vpop.permute.xlu0 %1373
      %1375 = vrot.lane.b32.xlu0 %v1366, 17
      %v1376 = vpop.permute.xlu0 %1375
      %1377 = vrot.lane.b32.xlu0 %v1363, 17
      %v1378 = vpop.permute.xlu0 %1377
      %1379 = vrot.lane.b32.xlu0 %v1367, 17
      %v1380 = vpop.permute.xlu0 %1379
      %1381 = vrot.lane.b32.xlu0 %v1364, 17
      %v1382 = vpop.permute.xlu0 %1381
      %1383 = vrot.lane.b32.xlu0 %v1368, 17
      %v1384 = vpop.permute.xlu0 %1383
      %v1385 = vsel %vm349, %v1378, %v1382
      %v1386 = vsel %vm349, %v1380, %v1384
      %v1387 = vsel %vm349, %v1374, %v1378
      %v1388 = vsel %vm349, %v1376, %v1380
      %v1389 = vsel %vm349, %v1370, %v1374
      %v1390 = vsel %vm349, %v1372, %v1376
      %v1391 = vsel %vm349, %v1382, %v1370
      %v1392 = vsel %vm349, %v1384, %v1372
      %v1393 = vmul.f32 %v1391, %v363
      %v1394 = vmul.f32 %v1389, %v367
      %v1395 = vmul.f32 %v1387, %v371
      %v1396 = vmul.f32 %v1385, %v375
      %v1397 = vmul.f32 %v1392, %v363
      %v1398 = vmul.f32 %v1390, %v367
      %v1399 = vmul.f32 %v1388, %v371
      %v1400 = vmul.f32 %v1386, %v375
      %1402 = vset.pattern.permute.xlu0 0
      %1403 = vperm.xlu0 %1402, %v299
      %v1404 = vpop.permute.xlu0 %1403
      %1407 = vset.pattern.permute.xlu0 0
      %1408 = vperm.xlu0 %1407, %v300
      %v1409 = vpop.permute.xlu0 %1408
      %v1411 = vmul.f32 %v1404, %v1393
      %v1412 = vmul.f32 %v1404, %v1394
      %v1413 = vmul.f32 %v1404, %v1395
      %v1414 = vmul.f32 %v1404, %v1396
      %v1415 = vmul.f32 %v1409, %v1397
      %v1416 = vmul.f32 %v1409, %v1398
      %v1417 = vmul.f32 %v1409, %v1399
      %v1418 = vmul.f32 %v1409, %v1400
      %v1419 = vadd.f32 %v1411, 0.0
      %v1420 = vadd.f32 %v1412, 0.0
      %v1421 = vadd.f32 %v1413, 0.0
      %v1422 = vadd.f32 %v1414, 0.0
      %v1423 = vadd.f32 %v1415, 0.0
      %v1424 = vadd.f32 %v1416, 0.0
      %v1425 = vadd.f32 %v1417, 0.0
      %v1426 = vadd.f32 %v1418, 0.0
      %1427 = vrot.lane.b32.xlu0 %v1361, 16
      %v1428 = vpop.permute.xlu0 %1427
      %1429 = vrot.lane.b32.xlu0 %v1365, 16
      %v1430 = vpop.permute.xlu0 %1429
      %1431 = vrot.lane.b32.xlu0 %v1362, 16
      %v1432 = vpop.permute.xlu0 %1431
      %1433 = vrot.lane.b32.xlu0 %v1366, 16
      %v1434 = vpop.permute.xlu0 %1433
      %1435 = vrot.lane.b32.xlu0 %v1363, 16
      %v1436 = vpop.permute.xlu0 %1435
      %1437 = vrot.lane.b32.xlu0 %v1367, 16
      %v1438 = vpop.permute.xlu0 %1437
      %1439 = vrot.lane.b32.xlu0 %v1364, 16
      %v1440 = vpop.permute.xlu0 %1439
      %1441 = vrot.lane.b32.xlu0 %v1368, 16
      %v1442 = vpop.permute.xlu0 %1441
      %v1443 = vsel %vm456, %v1436, %v1440
      %v1444 = vsel %vm456, %v1438, %v1442
      %v1445 = vsel %vm456, %v1432, %v1436
      %v1446 = vsel %vm456, %v1434, %v1438
      %v1447 = vsel %vm456, %v1428, %v1432
      %v1448 = vsel %vm456, %v1430, %v1434
      %v1449 = vsel %vm456, %v1440, %v1428
      %v1450 = vsel %vm456, %v1442, %v1430
      %v1451 = vmul.f32 %v1449, %v471
      %v1452 = vmul.f32 %v1447, %v475
      %v1453 = vmul.f32 %v1445, %v479
      %v1454 = vmul.f32 %v1443, %v483
      %v1455 = vmul.f32 %v1450, %v471
      %v1456 = vmul.f32 %v1448, %v475
      %v1457 = vmul.f32 %v1446, %v479
      %v1458 = vmul.f32 %v1444, %v483
      %1459 = vset.pattern.permute.xlu0 1
      %1460 = vperm.xlu0 %1459, %v299
      %v1461 = vpop.permute.xlu0 %1460
      %1463 = vset.pattern.permute.xlu0 1
      %1464 = vperm.xlu0 %1463, %v300
      %v1465 = vpop.permute.xlu0 %1464
      %v1467 = vmul.f32 %v1461, %v1451
      %v1468 = vmul.f32 %v1461, %v1452
      %v1469 = vmul.f32 %v1461, %v1453
      %v1470 = vmul.f32 %v1461, %v1454
      %v1471 = vmul.f32 %v1465, %v1455
      %v1472 = vmul.f32 %v1465, %v1456
      %v1473 = vmul.f32 %v1465, %v1457
      %v1474 = vmul.f32 %v1465, %v1458
      %v1475 = vadd.f32 %v1419, %v1467
      %v1476 = vadd.f32 %v1420, %v1468
      %v1477 = vadd.f32 %v1421, %v1469
      %v1478 = vadd.f32 %v1422, %v1470
      %v1479 = vadd.f32 %v1423, %v1471
      %v1480 = vadd.f32 %v1424, %v1472
      %v1481 = vadd.f32 %v1425, %v1473
      %v1482 = vadd.f32 %v1426, %v1474
      %1483 = vrot.lane.b32.xlu0 %v1361, 15
      %v1484 = vpop.permute.xlu0 %1483
      %1485 = vrot.lane.b32.xlu0 %v1365, 15
      %v1486 = vpop.permute.xlu0 %1485
      %1487 = vrot.lane.b32.xlu0 %v1362, 15
      %v1488 = vpop.permute.xlu0 %1487
      %1489 = vrot.lane.b32.xlu0 %v1366, 15
      %v1490 = vpop.permute.xlu0 %1489
      %1491 = vrot.lane.b32.xlu0 %v1363, 15
      %v1492 = vpop.permute.xlu0 %1491
      %1493 = vrot.lane.b32.xlu0 %v1367, 15
      %v1494 = vpop.permute.xlu0 %1493
      %1495 = vrot.lane.b32.xlu0 %v1364, 15
      %v1496 = vpop.permute.xlu0 %1495
      %1497 = vrot.lane.b32.xlu0 %v1368, 15
      %v1498 = vpop.permute.xlu0 %1497
      %v1499 = vsel %vm560, %v1492, %v1496
      %v1500 = vsel %vm560, %v1494, %v1498
      %v1501 = vsel %vm560, %v1488, %v1492
      %v1502 = vsel %vm560, %v1490, %v1494
      %v1503 = vsel %vm560, %v1484, %v1488
      %v1504 = vsel %vm560, %v1486, %v1490
      %v1505 = vsel %vm560, %v1496, %v1484
      %v1506 = vsel %vm560, %v1498, %v1486
      %v1507 = vmul.f32 %v1505, %v575
      %v1508 = vmul.f32 %v1503, %v579
      %v1509 = vmul.f32 %v1501, %v583
      %v1510 = vmul.f32 %v1499, %v587
      %v1511 = vmul.f32 %v1506, %v575
      %v1512 = vmul.f32 %v1504, %v579
      %v1513 = vmul.f32 %v1502, %v583
      %v1514 = vmul.f32 %v1500, %v587
      %1515 = vset.pattern.permute.xlu0 2
      %1516 = vperm.xlu0 %1515, %v299
      %v1517 = vpop.permute.xlu0 %1516
      %1519 = vset.pattern.permute.xlu0 2
      %1520 = vperm.xlu0 %1519, %v300
      %v1521 = vpop.permute.xlu0 %1520
      %v1523 = vmul.f32 %v1517, %v1507
      %v1524 = vmul.f32 %v1517, %v1508
      %v1525 = vmul.f32 %v1517, %v1509
      %v1526 = vmul.f32 %v1517, %v1510
      %v1527 = vmul.f32 %v1521, %v1511
      %v1528 = vmul.f32 %v1521, %v1512
      %v1529 = vmul.f32 %v1521, %v1513
      %v1530 = vmul.f32 %v1521, %v1514
      %v1531 = vadd.f32 %v1475, %v1523
      %v1532 = vadd.f32 %v1476, %v1524
      %v1533 = vadd.f32 %v1477, %v1525
      %v1534 = vadd.f32 %v1478, %v1526
      %v1535 = vadd.f32 %v1479, %v1527
      %v1536 = vadd.f32 %v1480, %v1528
      %v1537 = vadd.f32 %v1481, %v1529
      %v1538 = vadd.f32 %v1482, %v1530
      %1539 = vrot.lane.b32.xlu0 %v1361, 1
      %v1540 = vpop.permute.xlu0 %1539
      %1541 = vrot.lane.b32.xlu0 %v1365, 1
      %v1542 = vpop.permute.xlu0 %1541
      %1543 = vrot.lane.b32.xlu0 %v1362, 1
      %v1544 = vpop.permute.xlu0 %1543
      %1545 = vrot.lane.b32.xlu0 %v1366, 1
      %v1546 = vpop.permute.xlu0 %1545
      %1547 = vrot.lane.b32.xlu0 %v1363, 1
      %v1548 = vpop.permute.xlu0 %1547
      %1549 = vrot.lane.b32.xlu0 %v1367, 1
      %v1550 = vpop.permute.xlu0 %1549
      %1551 = vrot.lane.b32.xlu0 %v1364, 1
      %v1552 = vpop.permute.xlu0 %1551
      %1553 = vrot.lane.b32.xlu0 %v1368, 1
      %v1554 = vpop.permute.xlu0 %1553
      %v1555 = vsel %vm664, %v1548, %v1552
      %v1556 = vsel %vm664, %v1550, %v1554
      %v1557 = vsel %vm664, %v1544, %v1548
      %v1558 = vsel %vm664, %v1546, %v1550
      %v1559 = vsel %vm664, %v1540, %v1544
      %v1560 = vsel %vm664, %v1542, %v1546
      %v1561 = vsel %vm664, %v1552, %v1540
      %v1562 = vsel %vm664, %v1554, %v1542
      %v1563 = vmul.f32 %v1561, %v679
      %v1564 = vmul.f32 %v1559, %v683
      %v1565 = vmul.f32 %v1557, %v687
      %v1566 = vmul.f32 %v1555, %v691
      %v1567 = vmul.f32 %v1562, %v679
      %v1568 = vmul.f32 %v1560, %v683
      %v1569 = vmul.f32 %v1558, %v687
      %v1570 = vmul.f32 %v1556, %v691
      %1571 = vset.pattern.permute.xlu0 3
      %1572 = vperm.xlu0 %1571, %v299
      %v1573 = vpop.permute.xlu0 %1572
      %1575 = vset.pattern.permute.xlu0 3
      %1576 = vperm.xlu0 %1575, %v300
      %v1577 = vpop.permute.xlu0 %1576
      %v1579 = vmul.f32 %v1573, %v1563
      %v1580 = vmul.f32 %v1573, %v1564
      %v1581 = vmul.f32 %v1573, %v1565
      %v1582 = vmul.f32 %v1573, %v1566
      %v1583 = vmul.f32 %v1577, %v1567
      %v1584 = vmul.f32 %v1577, %v1568
      %v1585 = vmul.f32 %v1577, %v1569
      %v1586 = vmul.f32 %v1577, %v1570
      %v1587 = vadd.f32 %v1531, %v1579
      %v1588 = vadd.f32 %v1532, %v1580
      %v1589 = vadd.f32 %v1533, %v1581
      %v1590 = vadd.f32 %v1534, %v1582
      %v1591 = vadd.f32 %v1535, %v1583
      %v1592 = vadd.f32 %v1536, %v1584
      %v1593 = vadd.f32 %v1537, %v1585
      %v1594 = vadd.f32 %v1538, %v1586
      %1595 = vset.pattern.permute.xlu0 4
      %1596 = vperm.xlu0 %1595, %v299
      %v1597 = vpop.permute.xlu0 %1596
      %1599 = vset.pattern.permute.xlu0 4
      %1600 = vperm.xlu0 %1599, %v300
      %v1601 = vpop.permute.xlu0 %1600
      %v1603 = vmul.f32 %v1597, %v1361
      %v1604 = vmul.f32 %v1597, %v1362
      %v1605 = vmul.f32 %v1597, %v1363
      %v1606 = vmul.f32 %v1597, %v1364
      %v1607 = vmul.f32 %v1601, %v1365
      %v1608 = vmul.f32 %v1601, %v1366
      %v1609 = vmul.f32 %v1601, %v1367
      %v1610 = vmul.f32 %v1601, %v1368
      %v1611 = vadd.f32 %v1587, %v1603
      %v1612 = vadd.f32 %v1588, %v1604
      %v1613 = vadd.f32 %v1589, %v1605
      %v1614 = vadd.f32 %v1590, %v1606
      %v1615 = vadd.f32 %v1591, %v1607
      %v1616 = vadd.f32 %v1592, %v1608
      %v1617 = vadd.f32 %v1593, %v1609
      %v1618 = vadd.f32 %v1594, %v1610
      %1619 = vrot.lane.b32.xlu0 %v1361, 127
      %v1620 = vpop.permute.xlu0 %1619
      %1621 = vrot.lane.b32.xlu0 %v1365, 127
      %v1622 = vpop.permute.xlu0 %1621
      %1623 = vrot.lane.b32.xlu0 %v1362, 127
      %v1624 = vpop.permute.xlu0 %1623
      %1625 = vrot.lane.b32.xlu0 %v1366, 127
      %v1626 = vpop.permute.xlu0 %1625
      %1627 = vrot.lane.b32.xlu0 %v1363, 127
      %v1628 = vpop.permute.xlu0 %1627
      %1629 = vrot.lane.b32.xlu0 %v1367, 127
      %v1630 = vpop.permute.xlu0 %1629
      %1631 = vrot.lane.b32.xlu0 %v1364, 127
      %v1632 = vpop.permute.xlu0 %1631
      %1633 = vrot.lane.b32.xlu0 %v1368, 127
      %v1634 = vpop.permute.xlu0 %1633
      %v1635 = vsel %vm816, %v1628, %v1632
      %v1636 = vsel %vm816, %v1630, %v1634
      %v1637 = vsel %vm816, %v1624, %v1628
      %v1638 = vsel %vm816, %v1626, %v1630
      %v1639 = vsel %vm816, %v1620, %v1624
      %v1640 = vsel %vm816, %v1622, %v1626
      %v1641 = vsel %vm816, %v1632, %v1620
      %v1642 = vsel %vm816, %v1634, %v1622
      %v1643 = vmul.f32 %v1639, %v831
      %v1644 = vmul.f32 %v1637, %v835
      %v1645 = vmul.f32 %v1635, %v839
      %v1646 = vmul.f32 %v1641, %v843
      %v1647 = vmul.f32 %v1640, %v831
      %v1648 = vmul.f32 %v1638, %v835
      %v1649 = vmul.f32 %v1636, %v839
      %v1650 = vmul.f32 %v1642, %v843
      %1651 = vset.pattern.permute.xlu0 5
      %1652 = vperm.xlu0 %1651, %v299
      %v1653 = vpop.permute.xlu0 %1652
      %1655 = vset.pattern.permute.xlu0 5
      %1656 = vperm.xlu0 %1655, %v300
      %v1657 = vpop.permute.xlu0 %1656
      %v1659 = vmul.f32 %v1653, %v1643
      %v1660 = vmul.f32 %v1653, %v1644
      %v1661 = vmul.f32 %v1653, %v1645
      %v1662 = vmul.f32 %v1653, %v1646
      %v1663 = vmul.f32 %v1657, %v1647
      %v1664 = vmul.f32 %v1657, %v1648
      %v1665 = vmul.f32 %v1657, %v1649
      %v1666 = vmul.f32 %v1657, %v1650
      %v1667 = vadd.f32 %v1611, %v1659
      %v1668 = vadd.f32 %v1612, %v1660
      %v1669 = vadd.f32 %v1613, %v1661
      %v1670 = vadd.f32 %v1614, %v1662
      %v1671 = vadd.f32 %v1615, %v1663
      %v1672 = vadd.f32 %v1616, %v1664
      %v1673 = vadd.f32 %v1617, %v1665
      %v1674 = vadd.f32 %v1618, %v1666
      %1675 = vrot.lane.b32.xlu0 %v1361, 113
      %v1676 = vpop.permute.xlu0 %1675
      %1677 = vrot.lane.b32.xlu0 %v1365, 113
      %v1678 = vpop.permute.xlu0 %1677
      %1679 = vrot.lane.b32.xlu0 %v1362, 113
      %v1680 = vpop.permute.xlu0 %1679
      %1681 = vrot.lane.b32.xlu0 %v1366, 113
      %v1682 = vpop.permute.xlu0 %1681
      %1683 = vrot.lane.b32.xlu0 %v1363, 113
      %v1684 = vpop.permute.xlu0 %1683
      %1685 = vrot.lane.b32.xlu0 %v1367, 113
      %v1686 = vpop.permute.xlu0 %1685
      %1687 = vrot.lane.b32.xlu0 %v1364, 113
      %v1688 = vpop.permute.xlu0 %1687
      %1689 = vrot.lane.b32.xlu0 %v1368, 113
      %v1690 = vpop.permute.xlu0 %1689
      %v1691 = vsel %vm920, %v1684, %v1688
      %v1692 = vsel %vm920, %v1686, %v1690
      %v1693 = vsel %vm920, %v1680, %v1684
      %v1694 = vsel %vm920, %v1682, %v1686
      %v1695 = vsel %vm920, %v1676, %v1680
      %v1696 = vsel %vm920, %v1678, %v1682
      %v1697 = vsel %vm920, %v1688, %v1676
      %v1698 = vsel %vm920, %v1690, %v1678
      %v1699 = vmul.f32 %v1695, %v935
      %v1700 = vmul.f32 %v1693, %v939
      %v1701 = vmul.f32 %v1691, %v943
      %v1702 = vmul.f32 %v1697, %v947
      %v1703 = vmul.f32 %v1696, %v935
      %v1704 = vmul.f32 %v1694, %v939
      %v1705 = vmul.f32 %v1692, %v943
      %v1706 = vmul.f32 %v1698, %v947
      %1707 = vset.pattern.permute.xlu0 6
      %1708 = vperm.xlu0 %1707, %v299
      %v1709 = vpop.permute.xlu0 %1708
      %1711 = vset.pattern.permute.xlu0 6
      %1712 = vperm.xlu0 %1711, %v300
      %v1713 = vpop.permute.xlu0 %1712
      %v1715 = vmul.f32 %v1709, %v1699
      %v1716 = vmul.f32 %v1709, %v1700
      %v1717 = vmul.f32 %v1709, %v1701
      %v1718 = vmul.f32 %v1709, %v1702
      %v1719 = vmul.f32 %v1713, %v1703
      %v1720 = vmul.f32 %v1713, %v1704
      %v1721 = vmul.f32 %v1713, %v1705
      %v1722 = vmul.f32 %v1713, %v1706
      %v1723 = vadd.f32 %v1667, %v1715
      %v1724 = vadd.f32 %v1668, %v1716
      %v1725 = vadd.f32 %v1669, %v1717
      %v1726 = vadd.f32 %v1670, %v1718
      %v1727 = vadd.f32 %v1671, %v1719
      %v1728 = vadd.f32 %v1672, %v1720
      %v1729 = vadd.f32 %v1673, %v1721
      %v1730 = vadd.f32 %v1674, %v1722
      %1731 = vrot.lane.b32.xlu0 %v1361, 112
      %v1732 = vpop.permute.xlu0 %1731
      %1733 = vrot.lane.b32.xlu0 %v1365, 112
      %v1734 = vpop.permute.xlu0 %1733
      %1735 = vrot.lane.b32.xlu0 %v1362, 112
      %v1736 = vpop.permute.xlu0 %1735
      %1737 = vrot.lane.b32.xlu0 %v1366, 112
      %v1738 = vpop.permute.xlu0 %1737
      %1739 = vrot.lane.b32.xlu0 %v1363, 112
      %v1740 = vpop.permute.xlu0 %1739
      %1741 = vrot.lane.b32.xlu0 %v1367, 112
      %v1742 = vpop.permute.xlu0 %1741
      %1743 = vrot.lane.b32.xlu0 %v1364, 112
      %v1744 = vpop.permute.xlu0 %1743
      %1745 = vrot.lane.b32.xlu0 %v1368, 112
      %v1746 = vpop.permute.xlu0 %1745
      %v1747 = vsel %vm1024, %v1740, %v1744
      %v1748 = vsel %vm1024, %v1742, %v1746
      %v1749 = vsel %vm1024, %v1736, %v1740
      %v1750 = vsel %vm1024, %v1738, %v1742
      %v1751 = vsel %vm1024, %v1732, %v1736
      %v1752 = vsel %vm1024, %v1734, %v1738
      %v1753 = vsel %vm1024, %v1744, %v1732
      %v1754 = vsel %vm1024, %v1746, %v1734
      %v1755 = vmul.f32 %v1751, %v1039
      %v1756 = vmul.f32 %v1749, %v1043
      %v1757 = vmul.f32 %v1747, %v1047
      %v1758 = vmul.f32 %v1753, %v1051
      %v1759 = vmul.f32 %v1752, %v1039
      %v1760 = vmul.f32 %v1750, %v1043
      %v1761 = vmul.f32 %v1748, %v1047
      %v1762 = vmul.f32 %v1754, %v1051
      %1763 = vset.pattern.permute.xlu0 7
      %1764 = vperm.xlu0 %1763, %v299
      %v1765 = vpop.permute.xlu0 %1764
      %1767 = vset.pattern.permute.xlu0 7
      %1768 = vperm.xlu0 %1767, %v300
      %v1769 = vpop.permute.xlu0 %1768
      %v1771 = vmul.f32 %v1765, %v1755
      %v1772 = vmul.f32 %v1765, %v1756
      %v1773 = vmul.f32 %v1765, %v1757
      %v1774 = vmul.f32 %v1765, %v1758
      %v1775 = vmul.f32 %v1769, %v1759
      %v1776 = vmul.f32 %v1769, %v1760
      %v1777 = vmul.f32 %v1769, %v1761
      %v1778 = vmul.f32 %v1769, %v1762
      %v1779 = vadd.f32 %v1723, %v1771
      %v1780 = vadd.f32 %v1724, %v1772
      %v1781 = vadd.f32 %v1725, %v1773
      %v1782 = vadd.f32 %v1726, %v1774
      %v1783 = vadd.f32 %v1727, %v1775
      %v1784 = vadd.f32 %v1728, %v1776
      %v1785 = vadd.f32 %v1729, %v1777
      %v1786 = vadd.f32 %v1730, %v1778
      %1787 = vrot.lane.b32.xlu0 %v1361, 111
      %v1788 = vpop.permute.xlu0 %1787
      %1789 = vrot.lane.b32.xlu0 %v1365, 111
      %v1790 = vpop.permute.xlu0 %1789
      %1791 = vrot.lane.b32.xlu0 %v1362, 111
      %v1792 = vpop.permute.xlu0 %1791
      %1793 = vrot.lane.b32.xlu0 %v1366, 111
      %v1794 = vpop.permute.xlu0 %1793
      %1795 = vrot.lane.b32.xlu0 %v1363, 111
      %v1796 = vpop.permute.xlu0 %1795
      %1797 = vrot.lane.b32.xlu0 %v1367, 111
      %v1798 = vpop.permute.xlu0 %1797
      %1799 = vrot.lane.b32.xlu0 %v1364, 111
      %v1800 = vpop.permute.xlu0 %1799
      %1801 = vrot.lane.b32.xlu0 %v1368, 111
      %v1802 = vpop.permute.xlu0 %1801
      %v1803 = vsel %vm1128, %v1796, %v1800
      %v1804 = vsel %vm1128, %v1798, %v1802
      %v1805 = vsel %vm1128, %v1792, %v1796
      %v1806 = vsel %vm1128, %v1794, %v1798
      %v1807 = vsel %vm1128, %v1788, %v1792
      %v1808 = vsel %vm1128, %v1790, %v1794
      %v1809 = vsel %vm1128, %v1800, %v1788
      %v1810 = vsel %vm1128, %v1802, %v1790
      %v1811 = vmul.f32 %v1807, %v1143
      %v1812 = vmul.f32 %v1805, %v1147
      %v1813 = vmul.f32 %v1803, %v1151
      %v1814 = vmul.f32 %v1809, %v1155
      %v1815 = vmul.f32 %v1808, %v1143
      %v1816 = vmul.f32 %v1806, %v1147
      %v1817 = vmul.f32 %v1804, %v1151
      %v1818 = vmul.f32 %v1810, %v1155
      %1819 = vset.pattern.permute.xlu0 8
      %1820 = vperm.xlu0 %1819, %v299
      %v1821 = vpop.permute.xlu0 %1820
      %1823 = vset.pattern.permute.xlu0 8
      %1824 = vperm.xlu0 %1823, %v300
      %v1825 = vpop.permute.xlu0 %1824
      %v1827 = vmul.f32 %v1821, %v1811
      %v1828 = vmul.f32 %v1821, %v1812
      %v1829 = vmul.f32 %v1821, %v1813
      %v1830 = vmul.f32 %v1821, %v1814
      %v1831 = vmul.f32 %v1825, %v1815
      %v1832 = vmul.f32 %v1825, %v1816
      %v1833 = vmul.f32 %v1825, %v1817
      %v1834 = vmul.f32 %v1825, %v1818
      %v1835 = vadd.f32 %v1779, %v1827
      %v1836 = vadd.f32 %v1780, %v1828
      %v1837 = vadd.f32 %v1781, %v1829
      %v1838 = vadd.f32 %v1782, %v1830
      %v1839 = vadd.f32 %v1783, %v1831
      %v1840 = vadd.f32 %v1784, %v1832
      %v1841 = vadd.f32 %v1785, %v1833
      %v1842 = vadd.f32 %v1786, %v1834
      %1844 = vset.pattern.permute.xlu0 0
      %1845 = vperm.xlu0 %1844, %v309
      %v1846 = vpop.permute.xlu0 %1845
      %1849 = vset.pattern.permute.xlu0 0
      %1850 = vperm.xlu0 %1849, %v310
      %v1851 = vpop.permute.xlu0 %1850
      %v1853 = vadd.f32 %v1835, %v1846
      %v1854 = vadd.f32 %v1836, %v1846
      %v1855 = vadd.f32 %v1837, %v1846
      %v1856 = vadd.f32 %v1838, %v1846
      %v1857 = vadd.f32 %v1839, %v1851
      %v1858 = vadd.f32 %v1840, %v1851
      %v1859 = vadd.f32 %v1841, %v1851
      %v1860 = vadd.f32 %v1842, %v1851
      %v1861 = vpack.c.bf16 %v1857, %v1853
      %v1862 = vpack.c.bf16 %v1858, %v1854
      %v1863 = vpack.c.bf16 %v1859, %v1855
      %v1864 = vpack.c.bf16 %v1860, %v1856
      %1866 = vset.pattern.permute.xlu0 0
      %1867 = vperm.xlu0 %1866, %v311
      %v1868 = vpop.permute.xlu0 %1867
      %1871 = vset.pattern.permute.xlu0 0
      %1872 = vperm.xlu0 %1871, %v312
      %v1873 = vpop.permute.xlu0 %1872
      %v1877 = vunpack.c.l.b16 %v321
      %v1878 = vunpack.c.l.b16 %v322
      %v1879 = vpack.c.b16 %v1878, %v1877
      %v1881 = vsel %vm1271, %v1879, 0
      %1883 = vmatprep.subr.bf16.mxu0 %v1862
      %1884 = vmatpush1.bf16.msra.mxu0 %v1861
      %1885 = vmatprep.subr.bf16.mxu0 0
      %1886 = vmatpush1.bf16.msra.mxu0 0
      %1887 = vmatprep.subr.bf16.mxu0 0
      %1888 = vmatpush1.bf16.msra.mxu0 0
      %1889 = vmatprep.subr.bf16.mxu0 0
      %1890 = vmatpush1.bf16.msra.mxu0 0
      %1891 = vmatprep.subr.bf16.mxu0 0
      %1892 = vmatpush1.bf16.msra.mxu0 0
      %1893 = vmatprep.subr.bf16.mxu0 0
      %1894 = vmatpush1.bf16.msra.mxu0 0
      %1895 = vmatprep.subr.bf16.mxu0 0
      %1896 = vmatpush1.bf16.msra.mxu0 0
      %1897 = vmatprep.subr.bf16.mxu0 0
      %1898 = vmatpush1.bf16.msra.mxu0 0
      %1899 = vmatprep.subr.bf16.mxu0 0
      %1900 = vmatpush1.bf16.msra.mxu0 0
      %1901 = vmatprep.subr.bf16.mxu0 0
      %1902 = vmatpush1.bf16.msra.mxu0 0
      %1903 = vmatprep.subr.bf16.mxu0 0
      %1904 = vmatpush1.bf16.msra.mxu0 0
      %1905 = vmatprep.subr.bf16.mxu0 0
      %1906 = vmatpush1.bf16.msra.mxu0 0
      %1907 = vmatprep.subr.bf16.mxu0 0
      %1908 = vmatpush1.bf16.msra.mxu0 0
      %1909 = vmatprep.subr.bf16.mxu0 0
      %1910 = vmatpush1.bf16.msra.mxu0 0
      %1911 = vmatprep.subr.bf16.mxu0 0
      %1912 = vmatpush1.bf16.msra.mxu0 0
      %1913 = vmatprep.subr.bf16.mxu0 0
      %1914 = vmatpush1.bf16.msra.mxu0 0
      %1915 = vmatprep.mubr.bf16.mxu0 0
      %1916 = vmatmul.mubr.bf16.gmra.mrb[0].mxu0 %v1881
      %v1917 = vpop.f32.mrb[0].mxu0
      %v1918 = vadd.f32 %v1868, %v1917
      %v1919 = vpop.f32.mrb[0].mxu0
      %v1920 = vadd.f32 %v1868, %v1919
      %v1921 = vpop.f32.mrb[0].mxu0
      %v1922 = vadd.f32 %v1873, %v1921
      %v1923 = vpop.f32.mrb[0].mxu0
      %v1924 = vadd.f32 %v1873, %v1923
      %1925 = vdwg.mxu0
      %1926 = vmatprep.subr.bf16.mxu0 %v1864
      %1927 = vmatpush1.bf16.msra.mxu0 %v1863
      %1928 = vmatprep.subr.bf16.mxu0 0
      %1929 = vmatpush1.bf16.msra.mxu0 0
      %1930 = vmatprep.subr.bf16.mxu0 0
      %1931 = vmatpush1.bf16.msra.mxu0 0
      %1932 = vmatprep.subr.bf16.mxu0 0
      %1933 = vmatpush1.bf16.msra.mxu0 0
      %1934 = vmatprep.subr.bf16.mxu0 0
      %1935 = vmatpush1.bf16.msra.mxu0 0
      %1936 = vmatprep.subr.bf16.mxu0 0
      %1937 = vmatpush1.bf16.msra.mxu0 0
      %1938 = vmatprep.subr.bf16.mxu0 0
      %1939 = vmatpush1.bf16.msra.mxu0 0
      %1940 = vmatprep.subr.bf16.mxu0 0
      %1941 = vmatpush1.bf16.msra.mxu0 0
      %1942 = vmatprep.subr.bf16.mxu0 0
      %1943 = vmatpush1.bf16.msra.mxu0 0
      %1944 = vmatprep.subr.bf16.mxu0 0
      %1945 = vmatpush1.bf16.msra.mxu0 0
      %1946 = vmatprep.subr.bf16.mxu0 0
      %1947 = vmatpush1.bf16.msra.mxu0 0
      %1948 = vmatprep.subr.bf16.mxu0 0
      %1949 = vmatpush1.bf16.msra.mxu0 0
      %1950 = vmatprep.subr.bf16.mxu0 0
      %1951 = vmatpush1.bf16.msra.mxu0 0
      %1952 = vmatprep.subr.bf16.mxu0 0
      %1953 = vmatpush1.bf16.msra.mxu0 0
      %1954 = vmatprep.subr.bf16.mxu0 0
      %1955 = vmatpush1.bf16.msra.mxu0 0
      %1956 = vmatprep.subr.bf16.mxu0 0
      %1957 = vmatpush1.bf16.msra.mxu0 0
      %1958 = vmatprep.mubr.bf16.mxu0 0
      %1959 = vmatmul.mubr.bf16.gmra.mrb[0].mxu0 %v1881
      %v1960 = vpop.f32.mrb[0].mxu0
      %v1961 = vadd.f32 %v1868, %v1960
      %v1962 = vpop.f32.mrb[0].mxu0
      %v1963 = vadd.f32 %v1868, %v1962
      %v1964 = vpop.f32.mrb[0].mxu0
      %v1965 = vadd.f32 %v1873, %v1964
      %v1966 = vpop.f32.mrb[0].mxu0
      %v1967 = vadd.f32 %v1873, %v1966
      %1968 = vdwg.mxu0
      %v1969 = vadd.f32 %v1918, %v1920
      %1970 = vadd.xlane.f32.xlu0 %v1969
      %v1971 = vpop.xlane.xlu0 %1970
      %v1972 = vadd.f32 %v1922, %v1924
      %1973 = vadd.xlane.f32.xlu0 %v1972
      %v1974 = vpop.xlane.xlu0 %1973
      %v1975 = vmul.f32 %v1971, 0.00390625
      %v1976 = vmul.f32 %v1974, 0.00390625
      %v1977 = vmul.f32 %v323, %v1975
      %v1978 = vmul.f32 %v324, %v1976
      %vm1979 = vcmask 31744
      %v1980 = vsel %vm1979, %v1977, 0.0
      %v1981 = vsel %vm1979, %v1978, 0.0
      %v1982 = vadd.f32 %v1980, %v1981
      %v1983 = vrot.slane %v1982, 4
      %v1984 = vadd.f32 %v1982, %v1983
      %v1985 = vrot.slane %v1984, 2
      %v1986 = vadd.f32 %v1984, %v1985
      %v1987 = vrot.slane %v1986, 1
      %v1988 = vadd.f32 %v1986, %v1987
      %v1989 = vmax.f32 %v1988, 0.0
      %v1990 = vmul.f32 %v325, %v1989
      %v1991 = vmul.f32 %v326, %v1989
      %v1992 = vsel %vm1979, %v1990, 0.0
      %1993 = vadd.xlane.f32.xlu0 %v1992
      %v1994 = vpop.xlane.xlu0 %1993
      %v1995 = vsel %vm1979, %v1991, 0.0
      %1996 = vadd.xlane.f32.xlu0 %v1995
      %v1997 = vpop.xlane.xlu0 %1996
      %v1998 = vxor.u32 %v1994, 2147483648
      %v1999 = vxor.u32 %v1997, 2147483648
      %v2000 = vmul.f32 %v1998, 1.442695
      %v2001 = vpow.pop %v2000
      %v2002 = vmul.f32 %v1999, 1.442695
      %v2003 = vpow.pop %v2002
      %v2004 = vadd.f32 %v2001, 1.0
      %v2005 = vadd.f32 %v2003, 1.0
      %v2006 = vrcp.pop %v2004
      %v2007 = vmul.f32 1.0, %v2006
      %v2008 = vrcp.pop %v2005
      %v2009 = vmul.f32 1.0, %v2008
      %v2010 = vmul.f32 %v1918, %v2007
      %v2011 = vmul.f32 %v1920, %v2007
      %v2012 = vmul.f32 %v1922, %v2009
      %v2013 = vmul.f32 %v1924, %v2009
      %v2014 = vadd.f32 %v1961, %v1963
      %2015 = vadd.xlane.f32.xlu0 %v2014
      %v2016 = vpop.xlane.xlu0 %2015
      %v2017 = vadd.f32 %v1965, %v1967
      %2018 = vadd.xlane.f32.xlu0 %v2017
      %v2019 = vpop.xlane.xlu0 %2018
      %v2020 = vmul.f32 %v2016, 0.00390625
      %v2021 = vmul.f32 %v2019, 0.00390625
      %v2022 = vmul.f32 %v323, %v2020
      %v2023 = vmul.f32 %v324, %v2021
      %v2024 = vsel %vm1979, %v2022, 0.0
      %v2025 = vsel %vm1979, %v2023, 0.0
      %v2026 = vadd.f32 %v2024, %v2025
      %v2027 = vrot.slane %v2026, 4
      %v2028 = vadd.f32 %v2026, %v2027
      %v2029 = vrot.slane %v2028, 2
      %v2030 = vadd.f32 %v2028, %v2029
      %v2031 = vrot.slane %v2030, 1
      %v2032 = vadd.f32 %v2030, %v2031
      %v2033 = vmax.f32 %v2032, 0.0
      %v2034 = vmul.f32 %v325, %v2033
      %v2035 = vmul.f32 %v326, %v2033
      %v2036 = vsel %vm1979, %v2034, 0.0
      %2037 = vadd.xlane.f32.xlu0 %v2036
      %v2038 = vpop.xlane.xlu0 %2037
      %v2039 = vsel %vm1979, %v2035, 0.0
      %2040 = vadd.xlane.f32.xlu0 %v2039
      %v2041 = vpop.xlane.xlu0 %2040
      %v2042 = vxor.u32 %v2038, 2147483648
      %v2043 = vxor.u32 %v2041, 2147483648
      %v2044 = vmul.f32 %v2042, 1.442695
      %v2045 = vpow.pop %v2044
      %v2046 = vmul.f32 %v2043, 1.442695
      %v2047 = vpow.pop %v2046
      %v2048 = vadd.f32 %v2045, 1.0
      %v2049 = vadd.f32 %v2047, 1.0
      %v2050 = vrcp.pop %v2048
      %v2051 = vmul.f32 1.0, %v2050
      %v2052 = vrcp.pop %v2049
      %v2053 = vmul.f32 1.0, %v2052
      %v2054 = vmul.f32 %v1961, %v2051
      %v2055 = vmul.f32 %v1963, %v2051
      %v2056 = vmul.f32 %v1965, %v2053
      %v2057 = vmul.f32 %v1967, %v2053
      %2058 = vrot.lane.b32.xlu0 %v2010, 17
      %v2059 = vpop.permute.xlu0 %2058
      %2060 = vrot.lane.b32.xlu0 %v2012, 17
      %v2061 = vpop.permute.xlu0 %2060
      %2062 = vrot.lane.b32.xlu0 %v2011, 17
      %v2063 = vpop.permute.xlu0 %2062
      %2064 = vrot.lane.b32.xlu0 %v2013, 17
      %v2065 = vpop.permute.xlu0 %2064
      %2066 = vrot.lane.b32.xlu0 %v2054, 17
      %v2067 = vpop.permute.xlu0 %2066
      %2068 = vrot.lane.b32.xlu0 %v2056, 17
      %v2069 = vpop.permute.xlu0 %2068
      %2070 = vrot.lane.b32.xlu0 %v2055, 17
      %v2071 = vpop.permute.xlu0 %2070
      %2072 = vrot.lane.b32.xlu0 %v2057, 17
      %v2073 = vpop.permute.xlu0 %2072
      %v2074 = vsel %vm349, %v2067, %v2071
      %v2075 = vsel %vm349, %v2069, %v2073
      %v2076 = vsel %vm349, %v2063, %v2067
      %v2077 = vsel %vm349, %v2065, %v2069
      %v2078 = vsel %vm349, %v2059, %v2063
      %v2079 = vsel %vm349, %v2061, %v2065
      %v2080 = vsel %vm349, %v2071, %v2059
      %v2081 = vsel %vm349, %v2073, %v2061
      %v2082 = vmul.f32 %v2080, %v363
      %v2083 = vmul.f32 %v2078, %v367
      %v2084 = vmul.f32 %v2076, %v371
      %v2085 = vmul.f32 %v2074, %v375
      %v2086 = vmul.f32 %v2081, %v363
      %v2087 = vmul.f32 %v2079, %v367
      %v2088 = vmul.f32 %v2077, %v371
      %v2089 = vmul.f32 %v2075, %v375
      %2091 = vset.pattern.permute.xlu0 0
      %2092 = vperm.xlu0 %2091, %v301
      %v2093 = vpop.permute.xlu0 %2092
      %2096 = vset.pattern.permute.xlu0 0
      %2097 = vperm.xlu0 %2096, %v302
      %v2098 = vpop.permute.xlu0 %2097
      %v2100 = vmul.f32 %v2093, %v2082
      %v2101 = vmul.f32 %v2093, %v2083
      %v2102 = vmul.f32 %v2093, %v2084
      %v2103 = vmul.f32 %v2093, %v2085
      %v2104 = vmul.f32 %v2098, %v2086
      %v2105 = vmul.f32 %v2098, %v2087
      %v2106 = vmul.f32 %v2098, %v2088
      %v2107 = vmul.f32 %v2098, %v2089
      %v2108 = vadd.f32 %v2100, 0.0
      %v2109 = vadd.f32 %v2101, 0.0
      %v2110 = vadd.f32 %v2102, 0.0
      %v2111 = vadd.f32 %v2103, 0.0
      %v2112 = vadd.f32 %v2104, 0.0
      %v2113 = vadd.f32 %v2105, 0.0
      %v2114 = vadd.f32 %v2106, 0.0
      %v2115 = vadd.f32 %v2107, 0.0
      %2116 = vrot.lane.b32.xlu0 %v2010, 16
      %v2117 = vpop.permute.xlu0 %2116
      %2118 = vrot.lane.b32.xlu0 %v2012, 16
      %v2119 = vpop.permute.xlu0 %2118
      %2120 = vrot.lane.b32.xlu0 %v2011, 16
      %v2121 = vpop.permute.xlu0 %2120
      %2122 = vrot.lane.b32.xlu0 %v2013, 16
      %v2123 = vpop.permute.xlu0 %2122
      %2124 = vrot.lane.b32.xlu0 %v2054, 16
      %v2125 = vpop.permute.xlu0 %2124
      %2126 = vrot.lane.b32.xlu0 %v2056, 16
      %v2127 = vpop.permute.xlu0 %2126
      %2128 = vrot.lane.b32.xlu0 %v2055, 16
      %v2129 = vpop.permute.xlu0 %2128
      %2130 = vrot.lane.b32.xlu0 %v2057, 16
      %v2131 = vpop.permute.xlu0 %2130
      %v2132 = vsel %vm456, %v2125, %v2129
      %v2133 = vsel %vm456, %v2127, %v2131
      %v2134 = vsel %vm456, %v2121, %v2125
      %v2135 = vsel %vm456, %v2123, %v2127
      %v2136 = vsel %vm456, %v2117, %v2121
      %v2137 = vsel %vm456, %v2119, %v2123
      %v2138 = vsel %vm456, %v2129, %v2117
      %v2139 = vsel %vm456, %v2131, %v2119
      %v2140 = vmul.f32 %v2138, %v471
      %v2141 = vmul.f32 %v2136, %v475
      %v2142 = vmul.f32 %v2134, %v479
      %v2143 = vmul.f32 %v2132, %v483
      %v2144 = vmul.f32 %v2139, %v471
      %v2145 = vmul.f32 %v2137, %v475
      %v2146 = vmul.f32 %v2135, %v479
      %v2147 = vmul.f32 %v2133, %v483
      %2148 = vset.pattern.permute.xlu0 1
      %2149 = vperm.xlu0 %2148, %v301
      %v2150 = vpop.permute.xlu0 %2149
      %2152 = vset.pattern.permute.xlu0 1
      %2153 = vperm.xlu0 %2152, %v302
      %v2154 = vpop.permute.xlu0 %2153
      %v2156 = vmul.f32 %v2150, %v2140
      %v2157 = vmul.f32 %v2150, %v2141
      %v2158 = vmul.f32 %v2150, %v2142
      %v2159 = vmul.f32 %v2150, %v2143
      %v2160 = vmul.f32 %v2154, %v2144
      %v2161 = vmul.f32 %v2154, %v2145
      %v2162 = vmul.f32 %v2154, %v2146
      %v2163 = vmul.f32 %v2154, %v2147
      %v2164 = vadd.f32 %v2108, %v2156
      %v2165 = vadd.f32 %v2109, %v2157
      %v2166 = vadd.f32 %v2110, %v2158
      %v2167 = vadd.f32 %v2111, %v2159
      %v2168 = vadd.f32 %v2112, %v2160
      %v2169 = vadd.f32 %v2113, %v2161
      %v2170 = vadd.f32 %v2114, %v2162
      %v2171 = vadd.f32 %v2115, %v2163
      %2172 = vrot.lane.b32.xlu0 %v2010, 15
      %v2173 = vpop.permute.xlu0 %2172
      %2174 = vrot.lane.b32.xlu0 %v2012, 15
      %v2175 = vpop.permute.xlu0 %2174
      %2176 = vrot.lane.b32.xlu0 %v2011, 15
      %v2177 = vpop.permute.xlu0 %2176
      %2178 = vrot.lane.b32.xlu0 %v2013, 15
      %v2179 = vpop.permute.xlu0 %2178
      %2180 = vrot.lane.b32.xlu0 %v2054, 15
      %v2181 = vpop.permute.xlu0 %2180
      %2182 = vrot.lane.b32.xlu0 %v2056, 15
      %v2183 = vpop.permute.xlu0 %2182
      %2184 = vrot.lane.b32.xlu0 %v2055, 15
      %v2185 = vpop.permute.xlu0 %2184
      %2186 = vrot.lane.b32.xlu0 %v2057, 15
      %v2187 = vpop.permute.xlu0 %2186
      %v2188 = vsel %vm560, %v2181, %v2185
      %v2189 = vsel %vm560, %v2183, %v2187
      %v2190 = vsel %vm560, %v2177, %v2181
      %v2191 = vsel %vm560, %v2179, %v2183
      %v2192 = vsel %vm560, %v2173, %v2177
      %v2193 = vsel %vm560, %v2175, %v2179
      %v2194 = vsel %vm560, %v2185, %v2173
      %v2195 = vsel %vm560, %v2187, %v2175
      %v2196 = vmul.f32 %v2194, %v575
      %v2197 = vmul.f32 %v2192, %v579
      %v2198 = vmul.f32 %v2190, %v583
      %v2199 = vmul.f32 %v2188, %v587
      %v2200 = vmul.f32 %v2195, %v575
      %v2201 = vmul.f32 %v2193, %v579
      %v2202 = vmul.f32 %v2191, %v583
      %v2203 = vmul.f32 %v2189, %v587
      %2204 = vset.pattern.permute.xlu0 2
      %2205 = vperm.xlu0 %2204, %v301
      %v2206 = vpop.permute.xlu0 %2205
      %2208 = vset.pattern.permute.xlu0 2
      %2209 = vperm.xlu0 %2208, %v302
      %v2210 = vpop.permute.xlu0 %2209
      %v2212 = vmul.f32 %v2206, %v2196
      %v2213 = vmul.f32 %v2206, %v2197
      %v2214 = vmul.f32 %v2206, %v2198
      %v2215 = vmul.f32 %v2206, %v2199
      %v2216 = vmul.f32 %v2210, %v2200
      %v2217 = vmul.f32 %v2210, %v2201
      %v2218 = vmul.f32 %v2210, %v2202
      %v2219 = vmul.f32 %v2210, %v2203
      %v2220 = vadd.f32 %v2164, %v2212
      %v2221 = vadd.f32 %v2165, %v2213
      %v2222 = vadd.f32 %v2166, %v2214
      %v2223 = vadd.f32 %v2167, %v2215
      %v2224 = vadd.f32 %v2168, %v2216
      %v2225 = vadd.f32 %v2169, %v2217
      %v2226 = vadd.f32 %v2170, %v2218
      %v2227 = vadd.f32 %v2171, %v2219
      %2228 = vrot.lane.b32.xlu0 %v2010, 1
      %v2229 = vpop.permute.xlu0 %2228
      %2230 = vrot.lane.b32.xlu0 %v2012, 1
      %v2231 = vpop.permute.xlu0 %2230
      %2232 = vrot.lane.b32.xlu0 %v2011, 1
      %v2233 = vpop.permute.xlu0 %2232
      %2234 = vrot.lane.b32.xlu0 %v2013, 1
      %v2235 = vpop.permute.xlu0 %2234
      %2236 = vrot.lane.b32.xlu0 %v2054, 1
      %v2237 = vpop.permute.xlu0 %2236
      %2238 = vrot.lane.b32.xlu0 %v2056, 1
      %v2239 = vpop.permute.xlu0 %2238
      %2240 = vrot.lane.b32.xlu0 %v2055, 1
      %v2241 = vpop.permute.xlu0 %2240
      %2242 = vrot.lane.b32.xlu0 %v2057, 1
      %v2243 = vpop.permute.xlu0 %2242
      %v2244 = vsel %vm664, %v2237, %v2241
      %v2245 = vsel %vm664, %v2239, %v2243
      %v2246 = vsel %vm664, %v2233, %v2237
      %v2247 = vsel %vm664, %v2235, %v2239
      %v2248 = vsel %vm664, %v2229, %v2233
      %v2249 = vsel %vm664, %v2231, %v2235
      %v2250 = vsel %vm664, %v2241, %v2229
      %v2251 = vsel %vm664, %v2243, %v2231
      %v2252 = vmul.f32 %v2250, %v679
      %v2253 = vmul.f32 %v2248, %v683
      %v2254 = vmul.f32 %v2246, %v687
      %v2255 = vmul.f32 %v2244, %v691
      %v2256 = vmul.f32 %v2251, %v679
      %v2257 = vmul.f32 %v2249, %v683
      %v2258 = vmul.f32 %v2247, %v687
      %v2259 = vmul.f32 %v2245, %v691
      %2260 = vset.pattern.permute.xlu0 3
      %2261 = vperm.xlu0 %2260, %v301
      %v2262 = vpop.permute.xlu0 %2261
      %2264 = vset.pattern.permute.xlu0 3
      %2265 = vperm.xlu0 %2264, %v302
      %v2266 = vpop.permute.xlu0 %2265
      %v2268 = vmul.f32 %v2262, %v2252
      %v2269 = vmul.f32 %v2262, %v2253
      %v2270 = vmul.f32 %v2262, %v2254
      %v2271 = vmul.f32 %v2262, %v2255
      %v2272 = vmul.f32 %v2266, %v2256
      %v2273 = vmul.f32 %v2266, %v2257
      %v2274 = vmul.f32 %v2266, %v2258
      %v2275 = vmul.f32 %v2266, %v2259
      %v2276 = vadd.f32 %v2220, %v2268
      %v2277 = vadd.f32 %v2221, %v2269
      %v2278 = vadd.f32 %v2222, %v2270
      %v2279 = vadd.f32 %v2223, %v2271
      %v2280 = vadd.f32 %v2224, %v2272
      %v2281 = vadd.f32 %v2225, %v2273
      %v2282 = vadd.f32 %v2226, %v2274
      %v2283 = vadd.f32 %v2227, %v2275
      %2284 = vset.pattern.permute.xlu0 4
      %2285 = vperm.xlu0 %2284, %v301
      %v2286 = vpop.permute.xlu0 %2285
      %2288 = vset.pattern.permute.xlu0 4
      %2289 = vperm.xlu0 %2288, %v302
      %v2290 = vpop.permute.xlu0 %2289
      %v2292 = vmul.f32 %v2286, %v2010
      %v2293 = vmul.f32 %v2286, %v2011
      %v2294 = vmul.f32 %v2286, %v2054
      %v2295 = vmul.f32 %v2286, %v2055
      %v2296 = vmul.f32 %v2290, %v2012
      %v2297 = vmul.f32 %v2290, %v2013
      %v2298 = vmul.f32 %v2290, %v2056
      %v2299 = vmul.f32 %v2290, %v2057
      %v2300 = vadd.f32 %v2276, %v2292
      %v2301 = vadd.f32 %v2277, %v2293
      %v2302 = vadd.f32 %v2278, %v2294
      %v2303 = vadd.f32 %v2279, %v2295
      %v2304 = vadd.f32 %v2280, %v2296
      %v2305 = vadd.f32 %v2281, %v2297
      %v2306 = vadd.f32 %v2282, %v2298
      %v2307 = vadd.f32 %v2283, %v2299
      %2308 = vrot.lane.b32.xlu0 %v2010, 127
      %v2309 = vpop.permute.xlu0 %2308
      %2310 = vrot.lane.b32.xlu0 %v2012, 127
      %v2311 = vpop.permute.xlu0 %2310
      %2312 = vrot.lane.b32.xlu0 %v2011, 127
      %v2313 = vpop.permute.xlu0 %2312
      %2314 = vrot.lane.b32.xlu0 %v2013, 127
      %v2315 = vpop.permute.xlu0 %2314
      %2316 = vrot.lane.b32.xlu0 %v2054, 127
      %v2317 = vpop.permute.xlu0 %2316
      %2318 = vrot.lane.b32.xlu0 %v2056, 127
      %v2319 = vpop.permute.xlu0 %2318
      %2320 = vrot.lane.b32.xlu0 %v2055, 127
      %v2321 = vpop.permute.xlu0 %2320
      %2322 = vrot.lane.b32.xlu0 %v2057, 127
      %v2323 = vpop.permute.xlu0 %2322
      %v2324 = vsel %vm816, %v2317, %v2321
      %v2325 = vsel %vm816, %v2319, %v2323
      %v2326 = vsel %vm816, %v2313, %v2317
      %v2327 = vsel %vm816, %v2315, %v2319
      %v2328 = vsel %vm816, %v2309, %v2313
      %v2329 = vsel %vm816, %v2311, %v2315
      %v2330 = vsel %vm816, %v2321, %v2309
      %v2331 = vsel %vm816, %v2323, %v2311
      %v2332 = vmul.f32 %v2328, %v831
      %v2333 = vmul.f32 %v2326, %v835
      %v2334 = vmul.f32 %v2324, %v839
      %v2335 = vmul.f32 %v2330, %v843
      %v2336 = vmul.f32 %v2329, %v831
      %v2337 = vmul.f32 %v2327, %v835
      %v2338 = vmul.f32 %v2325, %v839
      %v2339 = vmul.f32 %v2331, %v843
      %2340 = vset.pattern.permute.xlu0 5
      %2341 = vperm.xlu0 %2340, %v301
      %v2342 = vpop.permute.xlu0 %2341
      %2344 = vset.pattern.permute.xlu0 5
      %2345 = vperm.xlu0 %2344, %v302
      %v2346 = vpop.permute.xlu0 %2345
      %v2348 = vmul.f32 %v2342, %v2332
      %v2349 = vmul.f32 %v2342, %v2333
      %v2350 = vmul.f32 %v2342, %v2334
      %v2351 = vmul.f32 %v2342, %v2335
      %v2352 = vmul.f32 %v2346, %v2336
      %v2353 = vmul.f32 %v2346, %v2337
      %v2354 = vmul.f32 %v2346, %v2338
      %v2355 = vmul.f32 %v2346, %v2339
      %v2356 = vadd.f32 %v2300, %v2348
      %v2357 = vadd.f32 %v2301, %v2349
      %v2358 = vadd.f32 %v2302, %v2350
      %v2359 = vadd.f32 %v2303, %v2351
      %v2360 = vadd.f32 %v2304, %v2352
      %v2361 = vadd.f32 %v2305, %v2353
      %v2362 = vadd.f32 %v2306, %v2354
      %v2363 = vadd.f32 %v2307, %v2355
      %2364 = vrot.lane.b32.xlu0 %v2010, 113
      %v2365 = vpop.permute.xlu0 %2364
      %2366 = vrot.lane.b32.xlu0 %v2012, 113
      %v2367 = vpop.permute.xlu0 %2366
      %2368 = vrot.lane.b32.xlu0 %v2011, 113
      %v2369 = vpop.permute.xlu0 %2368
      %2370 = vrot.lane.b32.xlu0 %v2013, 113
      %v2371 = vpop.permute.xlu0 %2370
      %2372 = vrot.lane.b32.xlu0 %v2054, 113
      %v2373 = vpop.permute.xlu0 %2372
      %2374 = vrot.lane.b32.xlu0 %v2056, 113
      %v2375 = vpop.permute.xlu0 %2374
      %2376 = vrot.lane.b32.xlu0 %v2055, 113
      %v2377 = vpop.permute.xlu0 %2376
      %2378 = vrot.lane.b32.xlu0 %v2057, 113
      %v2379 = vpop.permute.xlu0 %2378
      %v2380 = vsel %vm920, %v2373, %v2377
      %v2381 = vsel %vm920, %v2375, %v2379
      %v2382 = vsel %vm920, %v2369, %v2373
      %v2383 = vsel %vm920, %v2371, %v2375
      %v2384 = vsel %vm920, %v2365, %v2369
      %v2385 = vsel %vm920, %v2367, %v2371
      %v2386 = vsel %vm920, %v2377, %v2365
      %v2387 = vsel %vm920, %v2379, %v2367
      %v2388 = vmul.f32 %v2384, %v935
      %v2389 = vmul.f32 %v2382, %v939
      %v2390 = vmul.f32 %v2380, %v943
      %v2391 = vmul.f32 %v2386, %v947
      %v2392 = vmul.f32 %v2385, %v935
      %v2393 = vmul.f32 %v2383, %v939
      %v2394 = vmul.f32 %v2381, %v943
      %v2395 = vmul.f32 %v2387, %v947
      %2396 = vset.pattern.permute.xlu0 6
      %2397 = vperm.xlu0 %2396, %v301
      %v2398 = vpop.permute.xlu0 %2397
      %2400 = vset.pattern.permute.xlu0 6
      %2401 = vperm.xlu0 %2400, %v302
      %v2402 = vpop.permute.xlu0 %2401
      %v2404 = vmul.f32 %v2398, %v2388
      %v2405 = vmul.f32 %v2398, %v2389
      %v2406 = vmul.f32 %v2398, %v2390
      %v2407 = vmul.f32 %v2398, %v2391
      %v2408 = vmul.f32 %v2402, %v2392
      %v2409 = vmul.f32 %v2402, %v2393
      %v2410 = vmul.f32 %v2402, %v2394
      %v2411 = vmul.f32 %v2402, %v2395
      %v2412 = vadd.f32 %v2356, %v2404
      %v2413 = vadd.f32 %v2357, %v2405
      %v2414 = vadd.f32 %v2358, %v2406
      %v2415 = vadd.f32 %v2359, %v2407
      %v2416 = vadd.f32 %v2360, %v2408
      %v2417 = vadd.f32 %v2361, %v2409
      %v2418 = vadd.f32 %v2362, %v2410
      %v2419 = vadd.f32 %v2363, %v2411
      %2420 = vrot.lane.b32.xlu0 %v2010, 112
      %v2421 = vpop.permute.xlu0 %2420
      %2422 = vrot.lane.b32.xlu0 %v2012, 112
      %v2423 = vpop.permute.xlu0 %2422
      %2424 = vrot.lane.b32.xlu0 %v2011, 112
      %v2425 = vpop.permute.xlu0 %2424
      %2426 = vrot.lane.b32.xlu0 %v2013, 112
      %v2427 = vpop.permute.xlu0 %2426
      %2428 = vrot.lane.b32.xlu0 %v2054, 112
      %v2429 = vpop.permute.xlu0 %2428
      %2430 = vrot.lane.b32.xlu0 %v2056, 112
      %v2431 = vpop.permute.xlu0 %2430
      %2432 = vrot.lane.b32.xlu0 %v2055, 112
      %v2433 = vpop.permute.xlu0 %2432
      %2434 = vrot.lane.b32.xlu0 %v2057, 112
      %v2435 = vpop.permute.xlu0 %2434
      %v2436 = vsel %vm1024, %v2429, %v2433
      %v2437 = vsel %vm1024, %v2431, %v2435
      %v2438 = vsel %vm1024, %v2425, %v2429
      %v2439 = vsel %vm1024, %v2427, %v2431
      %v2440 = vsel %vm1024, %v2421, %v2425
      %v2441 = vsel %vm1024, %v2423, %v2427
      %v2442 = vsel %vm1024, %v2433, %v2421
      %v2443 = vsel %vm1024, %v2435, %v2423
      %v2444 = vmul.f32 %v2440, %v1039
      %v2445 = vmul.f32 %v2438, %v1043
      %v2446 = vmul.f32 %v2436, %v1047
      %v2447 = vmul.f32 %v2442, %v1051
      %v2448 = vmul.f32 %v2441, %v1039
      %v2449 = vmul.f32 %v2439, %v1043
      %v2450 = vmul.f32 %v2437, %v1047
      %v2451 = vmul.f32 %v2443, %v1051
      %2452 = vset.pattern.permute.xlu0 7
      %2453 = vperm.xlu0 %2452, %v301
      %v2454 = vpop.permute.xlu0 %2453
      %2456 = vset.pattern.permute.xlu0 7
      %2457 = vperm.xlu0 %2456, %v302
      %v2458 = vpop.permute.xlu0 %2457
      %v2460 = vmul.f32 %v2454, %v2444
      %v2461 = vmul.f32 %v2454, %v2445
      %v2462 = vmul.f32 %v2454, %v2446
      %v2463 = vmul.f32 %v2454, %v2447
      %v2464 = vmul.f32 %v2458, %v2448
      %v2465 = vmul.f32 %v2458, %v2449
      %v2466 = vmul.f32 %v2458, %v2450
      %v2467 = vmul.f32 %v2458, %v2451
      %v2468 = vadd.f32 %v2412, %v2460
      %v2469 = vadd.f32 %v2413, %v2461
      %v2470 = vadd.f32 %v2414, %v2462
      %v2471 = vadd.f32 %v2415, %v2463
      %v2472 = vadd.f32 %v2416, %v2464
      %v2473 = vadd.f32 %v2417, %v2465
      %v2474 = vadd.f32 %v2418, %v2466
      %v2475 = vadd.f32 %v2419, %v2467
      %2476 = vrot.lane.b32.xlu0 %v2010, 111
      %v2477 = vpop.permute.xlu0 %2476
      %2478 = vrot.lane.b32.xlu0 %v2012, 111
      %v2479 = vpop.permute.xlu0 %2478
      %2480 = vrot.lane.b32.xlu0 %v2011, 111
      %v2481 = vpop.permute.xlu0 %2480
      %2482 = vrot.lane.b32.xlu0 %v2013, 111
      %v2483 = vpop.permute.xlu0 %2482
      %2484 = vrot.lane.b32.xlu0 %v2054, 111
      %v2485 = vpop.permute.xlu0 %2484
      %2486 = vrot.lane.b32.xlu0 %v2056, 111
      %v2487 = vpop.permute.xlu0 %2486
      %2488 = vrot.lane.b32.xlu0 %v2055, 111
      %v2489 = vpop.permute.xlu0 %2488
      %2490 = vrot.lane.b32.xlu0 %v2057, 111
      %v2491 = vpop.permute.xlu0 %2490
      %v2492 = vsel %vm1128, %v2485, %v2489
      %v2493 = vsel %vm1128, %v2487, %v2491
      %v2494 = vsel %vm1128, %v2481, %v2485
      %v2495 = vsel %vm1128, %v2483, %v2487
      %v2496 = vsel %vm1128, %v2477, %v2481
      %v2497 = vsel %vm1128, %v2479, %v2483
      %v2498 = vsel %vm1128, %v2489, %v2477
      %v2499 = vsel %vm1128, %v2491, %v2479
      %v2500 = vmul.f32 %v2496, %v1143
      %v2501 = vmul.f32 %v2494, %v1147
      %v2502 = vmul.f32 %v2492, %v1151
      %v2503 = vmul.f32 %v2498, %v1155
      %v2504 = vmul.f32 %v2497, %v1143
      %v2505 = vmul.f32 %v2495, %v1147
      %v2506 = vmul.f32 %v2493, %v1151
      %v2507 = vmul.f32 %v2499, %v1155
      %2508 = vset.pattern.permute.xlu0 8
      %2509 = vperm.xlu0 %2508, %v301
      %v2510 = vpop.permute.xlu0 %2509
      %2512 = vset.pattern.permute.xlu0 8
      %2513 = vperm.xlu0 %2512, %v302
      %v2514 = vpop.permute.xlu0 %2513
      %v2516 = vmul.f32 %v2510, %v2500
      %v2517 = vmul.f32 %v2510, %v2501
      %v2518 = vmul.f32 %v2510, %v2502
      %v2519 = vmul.f32 %v2510, %v2503
      %v2520 = vmul.f32 %v2514, %v2504
      %v2521 = vmul.f32 %v2514, %v2505
      %v2522 = vmul.f32 %v2514, %v2506
      %v2523 = vmul.f32 %v2514, %v2507
      %v2524 = vadd.f32 %v2468, %v2516
      %v2525 = vadd.f32 %v2469, %v2517
      %v2526 = vadd.f32 %v2470, %v2518
      %v2527 = vadd.f32 %v2471, %v2519
      %v2528 = vadd.f32 %v2472, %v2520
      %v2529 = vadd.f32 %v2473, %v2521
      %v2530 = vadd.f32 %v2474, %v2522
      %v2531 = vadd.f32 %v2475, %v2523
      %2533 = vset.pattern.permute.xlu0 0
      %2534 = vperm.xlu0 %2533, %v313
      %v2535 = vpop.permute.xlu0 %2534
      %2538 = vset.pattern.permute.xlu0 0
      %2539 = vperm.xlu0 %2538, %v314
      %v2540 = vpop.permute.xlu0 %2539
      %v2542 = vadd.f32 %v2524, %v2535
      %v2543 = vadd.f32 %v2525, %v2535
      %v2544 = vadd.f32 %v2526, %v2535
      %v2545 = vadd.f32 %v2527, %v2535
      %v2546 = vadd.f32 %v2528, %v2540
      %v2547 = vadd.f32 %v2529, %v2540
      %v2548 = vadd.f32 %v2530, %v2540
      %v2549 = vadd.f32 %v2531, %v2540
      %v2550 = vpack.c.bf16 %v2546, %v2542
      %v2551 = vpack.c.bf16 %v2547, %v2543
      %v2552 = vpack.c.bf16 %v2548, %v2544
      %v2553 = vpack.c.bf16 %v2549, %v2545
      %v2554 = vpack.c.bf16 %v1248, %v1244
      %v2555 = vpack.c.bf16 %v1249, %v1245
      %v2556 = vpack.c.bf16 %v1250, %v1246
      %v2557 = vpack.c.bf16 %v1251, %v1247
      %v2558 = vld [vmem:[%s5] sm:$0xf]
      %v2559 = vld [vmem:[%s5 + $0x4] sm:$0xf]
      %2561 = vset.pattern.permute.xlu0 0
      %2562 = vperm.xlu0 %2561, %v317
      %v2563 = vpop.permute.xlu0 %2562
      %2566 = vset.pattern.permute.xlu0 0
      %2567 = vperm.xlu0 %2566, %v318
      %v2568 = vpop.permute.xlu0 %2567
      %v2572 = vunpack.c.l.b16 %v2558
      %v2573 = vunpack.c.l.b16 %v2559
      %v2574 = vpack.c.b16 %v2573, %v2572
      %vm2575 = vcmask 261120
      %v2577 = vsel %vm2575, %v2574, 0
      %2579 = vmatprep.subr.bf16.mxu0 %v2551
      %2580 = vmatpush1.bf16.msra.mxu0 %v2550
      %2581 = vmatprep.subr.bf16.mxu0 %v2555
      %2582 = vmatpush1.bf16.msra.mxu0 %v2554
      %2583 = vmatprep.subr.bf16.mxu0 0
      %2584 = vmatpush1.bf16.msra.mxu0 0
      %2585 = vmatprep.subr.bf16.mxu0 0
      %2586 = vmatpush1.bf16.msra.mxu0 0
      %2587 = vmatprep.subr.bf16.mxu0 0
      %2588 = vmatpush1.bf16.msra.mxu0 0
      %2589 = vmatprep.subr.bf16.mxu0 0
      %2590 = vmatpush1.bf16.msra.mxu0 0
      %2591 = vmatprep.subr.bf16.mxu0 0
      %2592 = vmatpush1.bf16.msra.mxu0 0
      %2593 = vmatprep.subr.bf16.mxu0 0
      %2594 = vmatpush1.bf16.msra.mxu0 0
      %2595 = vmatprep.subr.bf16.mxu0 0
      %2596 = vmatpush1.bf16.msra.mxu0 0
      %2597 = vmatprep.subr.bf16.mxu0 0
      %2598 = vmatpush1.bf16.msra.mxu0 0
      %2599 = vmatprep.subr.bf16.mxu0 0
      %2600 = vmatpush1.bf16.msra.mxu0 0
      %2601 = vmatprep.subr.bf16.mxu0 0
      %2602 = vmatpush1.bf16.msra.mxu0 0
      %2603 = vmatprep.subr.bf16.mxu0 0
      %2604 = vmatpush1.bf16.msra.mxu0 0
      %2605 = vmatprep.subr.bf16.mxu0 0
      %2606 = vmatpush1.bf16.msra.mxu0 0
      %2607 = vmatprep.subr.bf16.mxu0 0
      %2608 = vmatpush1.bf16.msra.mxu0 0
      %2609 = vmatprep.subr.bf16.mxu0 0
      %2610 = vmatpush1.bf16.msra.mxu0 0
      %2611 = vmatprep.mubr.bf16.mxu0 0
      %2612 = vmatmul.mubr.bf16.gmra.mrb[0].mxu0 %v2577
      %v2613 = vpop.f32.mrb[0].mxu0
      %v2614 = vadd.f32 %v2563, %v2613
      %v2615 = vpop.f32.mrb[0].mxu0
      %v2616 = vadd.f32 %v2563, %v2615
      %v2617 = vpop.f32.mrb[0].mxu0
      %v2618 = vadd.f32 %v2568, %v2617
      %v2619 = vpop.f32.mrb[0].mxu0
      %v2620 = vadd.f32 %v2568, %v2619
      %2621 = vdwg.mxu0
      %2622 = vmatprep.subr.bf16.mxu0 %v2553
      %2623 = vmatpush1.bf16.msra.mxu0 %v2552
      %2624 = vmatprep.subr.bf16.mxu0 %v2557
      %2625 = vmatpush1.bf16.msra.mxu0 %v2556
      %2626 = vmatprep.subr.bf16.mxu0 0
      %2627 = vmatpush1.bf16.msra.mxu0 0
      %2628 = vmatprep.subr.bf16.mxu0 0
      %2629 = vmatpush1.bf16.msra.mxu0 0
      %2630 = vmatprep.subr.bf16.mxu0 0
      %2631 = vmatpush1.bf16.msra.mxu0 0
      %2632 = vmatprep.subr.bf16.mxu0 0
      %2633 = vmatpush1.bf16.msra.mxu0 0
      %2634 = vmatprep.subr.bf16.mxu0 0
      %2635 = vmatpush1.bf16.msra.mxu0 0
      %2636 = vmatprep.subr.bf16.mxu0 0
      %2637 = vmatpush1.bf16.msra.mxu0 0
      %2638 = vmatprep.subr.bf16.mxu0 0
      %2639 = vmatpush1.bf16.msra.mxu0 0
      %2640 = vmatprep.subr.bf16.mxu0 0
      %2641 = vmatpush1.bf16.msra.mxu0 0
      %2642 = vmatprep.subr.bf16.mxu0 0
      %2643 = vmatpush1.bf16.msra.mxu0 0
      %2644 = vmatprep.subr.bf16.mxu0 0
      %2645 = vmatpush1.bf16.msra.mxu0 0
      %2646 = vmatprep.subr.bf16.mxu0 0
      %2647 = vmatpush1.bf16.msra.mxu0 0
      %2648 = vmatprep.subr.bf16.mxu0 0
      %2649 = vmatpush1.bf16.msra.mxu0 0
      %2650 = vmatprep.subr.bf16.mxu0 0
      %2651 = vmatpush1.bf16.msra.mxu0 0
      %2652 = vmatprep.subr.bf16.mxu0 0
      %2653 = vmatpush1.bf16.msra.mxu0 0
      %2654 = vmatprep.mubr.bf16.mxu0 0
      %2655 = vmatmul.mubr.bf16.gmra.mrb[0].mxu0 %v2577
      %v2656 = vpop.f32.mrb[0].mxu0
      %v2657 = vadd.f32 %v2563, %v2656
      %v2658 = vpop.f32.mrb[0].mxu0
      %v2659 = vadd.f32 %v2563, %v2658
      %v2660 = vpop.f32.mrb[0].mxu0
      %v2661 = vadd.f32 %v2568, %v2660
      %v2662 = vpop.f32.mrb[0].mxu0
      %v2663 = vadd.f32 %v2568, %v2662
      %2664 = vdwg.mxu0
      %v2665 = vadd.f32 %v2614, %v2616
      %2666 = vadd.xlane.f32.xlu0 %v2665
      %v2667 = vpop.xlane.xlu0 %2666
      %v2668 = vadd.f32 %v2618, %v2620
      %2669 = vadd.xlane.f32.xlu0 %v2668
      %v2670 = vpop.xlane.xlu0 %2669
      %v2671 = vmul.f32 %v2667, 0.00390625
      %v2672 = vmul.f32 %v2670, 0.00390625
      %v2673 = vmul.f32 %v327, %v2671
      %v2674 = vmul.f32 %v328, %v2672
      %v2675 = vsel %vm1979, %v2673, 0.0
      %v2676 = vsel %vm1979, %v2674, 0.0
      %v2677 = vadd.f32 %v2675, %v2676
      %v2678 = vrot.slane %v2677, 4
      %v2679 = vadd.f32 %v2677, %v2678
      %v2680 = vrot.slane %v2679, 2
      %v2681 = vadd.f32 %v2679, %v2680
      %v2682 = vrot.slane %v2681, 1
      %v2683 = vadd.f32 %v2681, %v2682
      %v2684 = vmax.f32 %v2683, 0.0
      %v2685 = vmul.f32 %v329, %v2684
      %v2686 = vmul.f32 %v330, %v2684
      %v2687 = vsel %vm1979, %v2685, 0.0
      %2688 = vadd.xlane.f32.xlu0 %v2687
      %v2689 = vpop.xlane.xlu0 %2688
      %v2690 = vsel %vm1979, %v2686, 0.0
      %2691 = vadd.xlane.f32.xlu0 %v2690
      %v2692 = vpop.xlane.xlu0 %2691
      %v2693 = vxor.u32 %v2689, 2147483648
      %v2694 = vxor.u32 %v2692, 2147483648
      %v2695 = vmul.f32 %v2693, 1.442695
      %v2696 = vpow.pop %v2695
      %v2697 = vmul.f32 %v2694, 1.442695
      %v2698 = vpow.pop %v2697
      %v2699 = vadd.f32 %v2696, 1.0
      %v2700 = vadd.f32 %v2698, 1.0
      %v2701 = vrcp.pop %v2699
      %v2702 = vmul.f32 1.0, %v2701
      %v2703 = vrcp.pop %v2700
      %v2704 = vmul.f32 1.0, %v2703
      %v2705 = vmul.f32 %v2614, %v2702
      %v2706 = vmul.f32 %v2616, %v2702
      %v2707 = vmul.f32 %v2618, %v2704
      %v2708 = vmul.f32 %v2620, %v2704
      %v2709 = vadd.f32 %v2657, %v2659
      %2710 = vadd.xlane.f32.xlu0 %v2709
      %v2711 = vpop.xlane.xlu0 %2710
      %v2712 = vadd.f32 %v2661, %v2663
      %2713 = vadd.xlane.f32.xlu0 %v2712
      %v2714 = vpop.xlane.xlu0 %2713
      %v2715 = vmul.f32 %v2711, 0.00390625
      %v2716 = vmul.f32 %v2714, 0.00390625
      %v2717 = vmul.f32 %v327, %v2715
      %v2718 = vmul.f32 %v328, %v2716
      %v2719 = vsel %vm1979, %v2717, 0.0
      %v2720 = vsel %vm1979, %v2718, 0.0
      %v2721 = vadd.f32 %v2719, %v2720
      %v2722 = vrot.slane %v2721, 4
      %v2723 = vadd.f32 %v2721, %v2722
      %v2724 = vrot.slane %v2723, 2
      %v2725 = vadd.f32 %v2723, %v2724
      %v2726 = vrot.slane %v2725, 1
      %v2727 = vadd.f32 %v2725, %v2726
      %v2728 = vmax.f32 %v2727, 0.0
      %v2729 = vmul.f32 %v329, %v2728
      %v2730 = vmul.f32 %v330, %v2728
      %v2731 = vsel %vm1979, %v2729, 0.0
      %2732 = vadd.xlane.f32.xlu0 %v2731
      %v2733 = vpop.xlane.xlu0 %2732
      %v2734 = vsel %vm1979, %v2730, 0.0
      %2735 = vadd.xlane.f32.xlu0 %v2734
      %v2736 = vpop.xlane.xlu0 %2735
      %v2737 = vxor.u32 %v2733, 2147483648
      %v2738 = vxor.u32 %v2736, 2147483648
      %v2739 = vmul.f32 %v2737, 1.442695
      %v2740 = vpow.pop %v2739
      %v2741 = vmul.f32 %v2738, 1.442695
      %v2742 = vpow.pop %v2741
      %v2743 = vadd.f32 %v2740, 1.0
      %v2744 = vadd.f32 %v2742, 1.0
      %v2745 = vrcp.pop %v2743
      %v2746 = vmul.f32 1.0, %v2745
      %v2747 = vrcp.pop %v2744
      %v2748 = vmul.f32 1.0, %v2747
      %v2749 = vmul.f32 %v2657, %v2746
      %v2750 = vmul.f32 %v2659, %v2746
      %v2751 = vmul.f32 %v2661, %v2748
      %v2752 = vmul.f32 %v2663, %v2748
      %v2753 = vadd.f32 %v2705, %v2010
      %v2754 = vadd.f32 %v2706, %v2011
      %v2755 = vadd.f32 %v2749, %v2054
      %v2756 = vadd.f32 %v2750, %v2055
      %v2757 = vadd.f32 %v2707, %v2012
      %v2758 = vadd.f32 %v2708, %v2013
      %v2759 = vadd.f32 %v2751, %v2056
      %v2760 = vadd.f32 %v2752, %v2057
      %2761 = vst [vmem:[%s285] sm:$0xff] %v2753
      %2762 = vst [vmem:[%s285 + $0x8] sm:$0xff] %v2754
      %2763 = vst [vmem:[%s285 + $0x10] sm:$0xff] %v2757
      %2764 = vst [vmem:[%s285 + $0x18] sm:$0xff] %v2758
      %s2765 = scalar_lea.vmem %s285, 32
      %2766 = vst [vmem:[%s2765] sm:$0xff] %v2755
      %2767 = vst [vmem:[%s2765 + $0x8] sm:$0xff] %v2756
      %2768 = vst [vmem:[%s2765 + $0x10] sm:$0xff] %v2759
      %2769 = vst [vmem:[%s2765 + $0x18] sm:$0xff] %v2760
      %s2770 = smul.u32 2, %s18
      %p2771 = scmp.lt.s32.totalorder %s2770, 3
      %s2772 = scalar_select %p2771, %s2770, 3
      %s2773 = smul.addr %s2772, 4
      %s2774 = smul.addr %s2773, 8
      %s2775 = scalar_lea.vmem %s7, %s2774
      // Predicated region
      $region49: #{cab_dsc_forward.1} parent=47 // pred_check
        %p2776 = pneg %p188
      $region50: #{cab_dsc_forward.1} parent=47 // pred_check_branch
        %2778 = sbr.rel (%p2776) target = $region52
      $region51: #{cab_dsc_forward.1} parent=47 // pred_region
        %s2779 = smul.u32 2, %s18
      $region52: #{cab_dsc_forward.1} parent=47 // pred_fallthru
        _
    $region48: #{cab_dsc_forward.1} parent=5 // pred_fallthru
      _
    %p2780 = scmp.le.s32.totalorder 2, %s13
    // Predicated region
    $region53: #{cab_dsc_forward.1} parent=5 // pred_check
      %p2781 = pneg %p2780
    $region54: #{cab_dsc_forward.1} parent=5 // pred_check_branch
      %2783 = sbr.rel (%p2781) target = $region56
    $region55: #{cab_dsc_forward.1} parent=5 // pred_region
      %s2784 = ssub.s32 %s13, 2
      // Predicated region
      $region57: #{cab_dsc_forward.1} parent=55 // pred_check
        %p2785 = pneg %p194
      $region58: #{cab_dsc_forward.1} parent=55 // pred_check_branch
        %2787 = sbr.rel (%p2785) target = $region60
      $region59: #{cab_dsc_forward.1} parent=55 // pred_region
        %s2788 = smul.u32 2, %s19
        %p2789 = scmp.lt.s32.totalorder %s2788, 3
        %s2790 = scalar_select %p2789, %s2788, 3
        %s2791 = smul.addr %s2790, 4
        %s2792 = smul.addr %s2791, 8
        %s2793 = scalar_lea.vmem %s7, %s2792
      $region60: #{cab_dsc_forward.1} parent=55 // pred_fallthru
        _
    $region56: #{cab_dsc_forward.1} parent=5 // pred_fallthru
      _
  $region6: #{cab_dsc_forward.1} parent=0 // loop_footer
    %s17 = sadd.s32 1, %s13
  $region7: #{cab_dsc_forward.1} parent=0 // loop_footer_branch
    %12 = sbr.rel target = $region3
  $region8: #{cab_dsc_forward.1} parent=0 // loop_exit
    _

</llo_original>
